<compile_context>
chip_gen: v5e
topology: v5e:2x2
jax: 0.10.0
libtpu: 0.0.40
codegen_flags: <defaults>
</compile_context>

<pallas_src>
import functools

import numpy as np
import jax
import jax.numpy as jnp
from jax import lax
from jax.experimental import pallas as pl
from jax.experimental.pallas import tpu as pltpu


_PAD = 128   # lane-aligned staging offset inside the shift-window scratch buffers


def _taps():
    return [(dy, dx) for dy in (-1, 0, 1) for dx in (-1, 0, 1)]


# ----------------------------- in-kernel building blocks --------------------------


def _conv3x3(xin, w, cs_ref, *, H, W, cin, cout):
    """3x3 'same' conv on a (cin, H*W) row-major-flattened activation.

    The input is staged once into a lane-padded VMEM scratch; each of the 9 taps is a
    static shifted lane window of that scratch, zero-masked at the image border, and
    contracted over cin (MXU matmul for cin > 1).  Returns (cout, H*W) f32.
    """
    HW = H * W
    w_bits = W.bit_length() - 1                 # W is a power of two
    cs_ref[:, _PAD:_PAD + HW] = xin             # aligned staging store

    pos = lax.broadcasted_iota(jnp.int32, (1, HW), 1)
    row = pos >> w_bits
    col = pos & (W - 1)

    acc = jnp.zeros((cout, HW), jnp.float32)
    for t, (dy, dx) in enumerate(_taps()):
        d = dy * W + dx
        xs = cs_ref[:, _PAD + d:_PAD + d + HW]                    # (cin, HW)
        valid = ((row + dy >= 0) & (row + dy < H) &
                 (col + dx >= 0) & (col + dx < W))
        xs = jnp.where(valid, xs, 0.0)                            # in-kernel zero pad
        wt = w[t]                                                 # (cout, cin)
        if cin == 1:
            acc = acc + wt * xs                                   # (cout,1)*(1,HW) FMA
        else:
            acc = acc + jnp.dot(wt, xs, preferred_element_type=jnp.float32)
    return acc


def _maxpool2x2(h, ps_ref, sel, *, H, W, cout):
    """2x2 / stride-2 max pool on (cout, H*W); compaction via a one-hot MXU matmul."""
    HW = H * W
    ps_ref[:, _PAD + HW:] = jnp.zeros((cout, _PAD), jnp.float32)  # keep shifted reads finite
    ps_ref[:, _PAD:_PAD + HW] = h
    b = ps_ref[:, _PAD + 1:_PAD + 1 + HW]
    c = ps_ref[:, _PAD + W:_PAD + W + HW]
    d = ps_ref[:, _PAD + W + 1:_PAD + W + 1 + HW]
    m = jnp.maximum(jnp.maximum(h, b), jnp.maximum(c, d))
    return jnp.dot(m, sel, preferred_element_type=jnp.float32)    # (cout, HW // 4)


# ----------------------------------- fused kernel ---------------------------------


def _cnn_fused_kernel(x_ref, w1_ref, s1_ref, t1_ref, sel1_ref,
                      w2_ref, s2_ref, t2_ref, sel2_ref, wf_ref, bf_ref,
                      out_ref,
                      cs1_ref, ps1_ref, cs2_ref, ps2_ref,
                      *, c1, c2):
    x = x_ref[0]                                                  # (1, 32*32)

    # layer 1: Conv(1->c1, 3x3, pad=1) + BN(eval) + ReLU + MaxPool(2,2)
    a1 = _conv3x3(x, w1_ref[...], cs1_ref, H=32, W=32, cin=1, cout=c1)
    h1 = jnp.maximum(a1 * s1_ref[...] + t1_ref[...], 0.0)
    p1 = _maxpool2x2(h1, ps1_ref, sel1_ref[...], H=32, W=32, cout=c1)   # (c1, 256)

    # layer 2: Conv(c1->c2, 3x3, pad=1) + BN(eval) + ReLU + MaxPool(2,2)
    a2 = _conv3x3(p1, w2_ref[...], cs2_ref, H=16, W=16, cin=c1, cout=c2)
    h2 = jnp.maximum(a2 * s2_ref[...] + t2_ref[...], 0.0)
    p2 = _maxpool2x2(h2, ps2_ref, sel2_ref[...], H=16, W=16, cout=c2)   # (c2, 64)

    # fc1 -> fc2 -> fc3, pre-folded into a single (c2*8*8, 10) affine map.
    # p2 rows are already in PyTorch's out.view(N, -1) order (c-major, then h, w),
    # so the flatten is absorbed into per-channel matvecs against wf[c].
    o = bf_ref[...]                                               # (1, 10)
    wf = wf_ref[...]                                              # (c2, 64, 10)
    for c in range(c2):
        o = o + jnp.dot(p2[c:c + 1, :], wf[c], preferred_element_type=jnp.float32)
    out_ref[0] = o


def _const_spec(arr):
    zeros = (0,) * arr.ndim
    return pl.BlockSpec(arr.shape, lambda b: zeros)


@jax.jit
def cnn_classifier_forward(x_nchw, kp):
    n = x_nchw.shape[0]
    c1 = kp["s1"].shape[0]
    c2 = kp["s2"].shape[0]
    x_flat = x_nchw.reshape(n, 1, 32 * 32)        # metadata-only reshape (no relayout)

    kernel = functools.partial(_cnn_fused_kernel, c1=c1, c2=c2)
    out3 = pl.pallas_call(
        kernel,
        out_shape=jax.ShapeDtypeStruct((n, 1, 10), jnp.float32),
        grid=(n,),
        in_specs=[
            pl.BlockSpec((1, 1, 32 * 32), lambda b: (b, 0, 0)),
            _const_spec(kp["w1"]), _const_spec(kp["s1"]), _const_spec(kp["t1"]),
            _const_spec(kp["sel1"]),
            _const_spec(kp["w2"]), _const_spec(kp["s2"]), _const_spec(kp["t2"]),
            _const_spec(kp["sel2"]),
            _const_spec(kp["wf"]), _const_spec(kp["bf"]),
        ],
        out_specs=pl.BlockSpec((1, 1, 10), lambda b: (b, 0, 0)),
        scratch_shapes=[
            pltpu.VMEM((1, _PAD + 1024 + _PAD), jnp.float32),     # conv1 shift window
            pltpu.VMEM((c1, _PAD + 1024 + _PAD), jnp.float32),    # pool1 shift window
            pltpu.VMEM((c1, _PAD + 256 + _PAD), jnp.float32),     # conv2 shift window
            pltpu.VMEM((c2, _PAD + 256 + _PAD), jnp.float32),     # pool2 shift window
        ],
        compiler_params=pltpu.CompilerParams(
            dimension_semantics=("parallel",),        # v7x: batch over both TCs
            vmem_limit_bytes=8 * 1024 * 1024,         # real footprint ~3 MiB
        ),
    )(x_flat, kp["w1"], kp["s1"], kp["t1"], kp["sel1"],
      kp["w2"], kp["s2"], kp["t2"], kp["sel2"], kp["wf"], kp["bf"])
    return out3.reshape(n, 10)


# ------------------------------ parameter preparation ------------------------------


def _fold_bn(conv_bias, gamma, beta, mean, var, eps=1e-5):
    """Fold conv bias + eval-mode BatchNorm into per-channel (scale, shift)."""
    scale = gamma / jnp.sqrt(var + eps)
    shift = (conv_bias - mean) * scale + beta
    return scale[:, None], shift[:, None]             # (C, 1): broadcasts over lanes


def _pool_select(H, W):
    """One-hot (H*W, (H//2)*(W//2)) matrix picking the 2x2-pool anchor positions."""
    Ho, Wo = H // 2, W // 2
    sel = np.zeros((H * W, Ho * Wo), np.float32)
    q = np.arange(Ho * Wo)
    p = (2 * (q // Wo)) * W + 2 * (q % Wo)
    sel[p, q] = 1.0
    return jnp.asarray(sel)


def prepare_params(p, eps=1e-5):
    """One-time conversion of module parameters into kernel-ready tensors."""
    hp = jax.lax.Precision.HIGHEST
    c1 = p["cw1"].shape[0]
    c2 = p["cw2"].shape[0]

    s1, t1 = _fold_bn(p["cb1"], p["g1"], p["be1"], p["m1"], p["v1"], eps)
    s2, t2 = _fold_bn(p["cb2"], p["g2"], p["be2"], p["m2"], p["v2"], eps)

    # conv weights as (tap, Cout, Cin): one (Cout, Cin) contraction per 3x3 tap.
    w1 = jnp.transpose(p["cw1"], (2, 3, 0, 1)).reshape(9, c1, 1)
    w2 = jnp.transpose(p["cw2"], (2, 3, 0, 1)).reshape(9, c2, c1)

    # fc1/fc2/fc3 have no nonlinearity between them -> exact fold into one affine map.
    wf = jnp.dot(jnp.dot(p["fw1"], p["fw2"], precision=hp), p["fw3"], precision=hp)
    bf = jnp.dot(jnp.dot(p["fb1"], p["fw2"], precision=hp) + p["fb2"],
                 p["fw3"], precision=hp) + p["fb3"]

    return {
        "w1": w1, "s1": s1, "t1": t1, "sel1": _pool_select(32, 32),
        "w2": w2, "s2": s2, "t2": t2, "sel2": _pool_select(16, 16),
        "wf": wf.reshape(c2, 8 * 8, 10), "bf": bf.reshape(1, 10),
    }


# --------------------------- synthetic params + reference --------------------------


def init_params(key, channels):
    """Deterministic synthetic parameters (same shapes as the nn.Module)."""
    c1, c2 = channels, channels * 2
    f_in = c2 * 8 * 8
    ks = jax.random.split(key, 18)
    return {
        # layer1
        "cw1": jax.random.normal(ks[0], (c1, 1, 3, 3), jnp.float32) * 0.2,   # OIHW
        "cb1": jax.random.normal(ks[1], (c1,), jnp.float32) * 0.1,
        "g1":  1.0 + 0.1 * jax.random.normal(ks[2], (c1,), jnp.float32),
        "be1": 0.1 * jax.random.normal(ks[3], (c1,), jnp.float32),
        "m1":  0.1 * jax.random.normal(ks[4], (c1,), jnp.float32),
        "v1":  0.5 + jax.random.uniform(ks[5], (c1,), jnp.float32),
        # layer2
        "cw2": jax.random.normal(ks[6], (c2, c1, 3, 3), jnp.float32) * 0.2,  # OIHW
        "cb2": jax.random.normal(ks[7], (c2,), jnp.float32) * 0.1,
        "g2":  1.0 + 0.1 * jax.random.normal(ks[8], (c2,), jnp.float32),
        "be2": 0.1 * jax.random.normal(ks[9], (c2,), jnp.float32),
        "m2":  0.1 * jax.random.normal(ks[10], (c2,), jnp.float32),
        "v2":  0.5 + jax.random.uniform(ks[11], (c2,), jnp.float32),
        # fc layers (stored as (in, out); equivalent to PyTorch's x @ W.T)
        "fw1": jax.random.normal(ks[12], (f_in, 600), jnp.float32) * 0.05,
        "fb1": jax.random.normal(ks[13], (600,), jnp.float32) * 0.05,
        "fw2": jax.random.normal(ks[14], (600, 120), jnp.float32) * 0.05,
        "fb2": jax.random.normal(ks[15], (120,), jnp.float32) * 0.05,
        "fw3": jax.random.normal(ks[16], (120, 10), jnp.float32) * 0.05,
        "fb3": jax.random.normal(ks[17], (10,), jnp.float32) * 0.05,
    }


def reference_forward(x_nchw, p, eps=1e-5):
    """Plain-JAX reference mirroring the PyTorch forward (eval-mode BN)."""
    hp = jax.lax.Precision.HIGHEST

    def block(x, w, b, g, be, m, v):
        y = jax.lax.conv_general_dilated(
            x, w, window_strides=(1, 1), padding=((1, 1), (1, 1)),
            dimension_numbers=("NCHW", "OIHW", "NCHW"), precision=hp)
        y = y + b[None, :, None, None]
        y = (y - m[None, :, None, None]) / jnp.sqrt(v[None, :, None, None] + eps)
        y = y * g[None, :, None, None] + be[None, :, None, None]
        y = jnp.maximum(y, 0.0)
        return jax.lax.reduce_window(y, -jnp.inf, jax.lax.max,
                                     (1, 1, 2, 2), (1, 1, 2, 2), "VALID")

    h = block(x_nchw, p["cw1"], p["cb1"], p["g1"], p["be1"], p["m1"], p["v1"])
    h = block(h, p["cw2"], p["cb2"], p["g2"], p["be2"], p["m2"], p["v2"])
    flat = h.reshape(h.shape[0], -1)
    o = jnp.dot(flat, p["fw1"], precision=hp) + p["fb1"]
    o = jnp.dot(o, p["fw2"], precision=hp) + p["fb2"]
    o = jnp.dot(o, p["fw3"], precision=hp) + p["fb3"]
    return o


if __name__ == "__main__":
    channels, batch = 4, 2
    key = jax.random.PRNGKey(0)
    k_x, k_p = jax.random.split(key)
    params = init_params(k_p, channels)
    kparams = prepare_params(params)

    # fc1 expects channels*2*8*8 features => two 2x2 pools => 32x32 spatial input.
    x = jax.random.normal(k_x, (batch, 1, 32, 32), jnp.float32)   # NCHW

    out = jax.block_until_ready(cnn_classifier_forward(x, kparams))
    assert out.shape == (batch, 10), out.shape

    ref = reference_forward(x, params)
    err = float(jnp.max(jnp.abs(out - ref)))
    assert err < 5e-2, f"mismatch vs reference: {err}"

    print("KERNEL_OK")
</pallas_src>

<mosaic_0001>
module attributes {stable_mosaic.version = 11 : i64} {
  func.func @_cnn_fused_kernel(%arg0: i32, %arg1: memref<1x1x1024xf32, #tpu.memory_space<vmem>>, %arg2: memref<9x4x1xf32, #tpu.memory_space<vmem>>, %arg3: memref<4x1xf32, #tpu.memory_space<vmem>>, %arg4: memref<4x1xf32, #tpu.memory_space<vmem>>, %arg5: memref<1024x256xf32, #tpu.memory_space<vmem>>, %arg6: memref<9x8x4xf32, #tpu.memory_space<vmem>>, %arg7: memref<8x1xf32, #tpu.memory_space<vmem>>, %arg8: memref<8x1xf32, #tpu.memory_space<vmem>>, %arg9: memref<256x64xf32, #tpu.memory_space<vmem>>, %arg10: memref<8x64x10xf32, #tpu.memory_space<vmem>>, %arg11: memref<1x10xf32, #tpu.memory_space<vmem>>, %arg12: memref<1x1x10xf32, #tpu.memory_space<vmem>>, %arg13: memref<1x1280xf32, #tpu.memory_space<vmem>>, %arg14: memref<4x1280xf32, #tpu.memory_space<vmem>>, %arg15: memref<4x512xf32, #tpu.memory_space<vmem>>, %arg16: memref<8x512xf32, #tpu.memory_space<vmem>>) attributes {dimension_semantics = [#tpu.dimension_semantics<parallel>], iteration_bounds = array<i64: 2>, scalar_prefetch = 0 : i64, scratch_operands = 4 : i64, tpu.core_type = #tpu.core_type<tc>, window_params = [{transform_indices = @transform_0, window_bounds = array<i64: 1, 1, 1024>}, {pipeline_mode = #tpu.pipeline_mode<synchronous>, transform_indices = @transform_1, window_bounds = array<i64: 9, 4, 1>}, {pipeline_mode = #tpu.pipeline_mode<synchronous>, transform_indices = @transform_2, window_bounds = array<i64: 4, 1>}, {pipeline_mode = #tpu.pipeline_mode<synchronous>, transform_indices = @transform_3, window_bounds = array<i64: 4, 1>}, {pipeline_mode = #tpu.pipeline_mode<synchronous>, transform_indices = @transform_4, window_bounds = array<i64: 1024, 256>}, {pipeline_mode = #tpu.pipeline_mode<synchronous>, transform_indices = @transform_5, window_bounds = array<i64: 9, 8, 4>}, {pipeline_mode = #tpu.pipeline_mode<synchronous>, transform_indices = @transform_6, window_bounds = array<i64: 8, 1>}, {pipeline_mode = #tpu.pipeline_mode<synchronous>, transform_indices = @transform_7, window_bounds = array<i64: 8, 1>}, {pipeline_mode = #tpu.pipeline_mode<synchronous>, transform_indices = @transform_8, window_bounds = array<i64: 256, 64>}, {pipeline_mode = #tpu.pipeline_mode<synchronous>, transform_indices = @transform_9, window_bounds = array<i64: 8, 64, 10>}, {pipeline_mode = #tpu.pipeline_mode<synchronous>, transform_indices = @transform_10, window_bounds = array<i64: 1, 10>}, {transform_indices = @transform_11, window_bounds = array<i64: 1, 1, 10>}]} {
    %c0 = arith.constant 0 : index
    %c0_0 = arith.constant 0 : index
    %c0_1 = arith.constant 0 : index
    %0 = vector.load %arg1[%c0, %c0_0, %c0_1] : memref<1x1x1024xf32, #tpu.memory_space<vmem>>, vector<1x1x1024xf32>
    %1 = vector.shape_cast %0 : vector<1x1x1024xf32> to vector<1x1024xf32>
    %c0_2 = arith.constant 0 : index
    %c0_3 = arith.constant 0 : index
    %c0_4 = arith.constant 0 : index
    %2 = vector.load %arg2[%c0_2, %c0_3, %c0_4] : memref<9x4x1xf32, #tpu.memory_space<vmem>>, vector<9x4x1xf32>
    %c0_5 = arith.constant 0 : index
    %c128 = arith.constant 128 : index
    %3 = vector.load %arg13[%c0_5, %c128] : memref<1x1280xf32, #tpu.memory_space<vmem>>, vector<1x1024xf32>
    tpu.vector_store %arg13[%c0_5, %c128], %1 {strides = array<i32>} : memref<1x1280xf32, #tpu.memory_space<vmem>>, vector<1x1024xf32>,
    %4 = tpu.iota {dimensions = array<i32: 1>} : vector<1x1024xi32>
    %c5_i32 = arith.constant 5 : i32
    %5 = vector.broadcast %c5_i32 : i32 to vector<1x1024xi32>
    %6 = arith.shrsi %4, %5 : vector<1x1024xi32>
    %c31_i32 = arith.constant 31 : i32
    %7 = vector.broadcast %c31_i32 : i32 to vector<1x1024xi32>
    %8 = arith.andi %4, %7 : vector<1x1024xi32>
    %cst = arith.constant 0.000000e+00 : f32
    %9 = vector.broadcast %cst : f32 to vector<4x1024xf32>
    %c0_6 = arith.constant 0 : index
    %c95 = arith.constant 95 : index
    %10 = vector.load %arg13[%c0_6, %c95] : memref<1x1280xf32, #tpu.memory_space<vmem>>, vector<1x1024xf32>
    %c-1_i32 = arith.constant -1 : i32
    %11 = vector.broadcast %c-1_i32 : i32 to vector<1x1024xi32>
    %12 = arith.addi %6, %11 : vector<1x1024xi32>
    %c0_i32 = arith.constant 0 : i32
    %13 = vector.broadcast %c0_i32 : i32 to vector<1x1024xi32>
    %14 = arith.cmpi sge, %12, %13 : vector<1x1024xi32>
    %c-1_i32_7 = arith.constant -1 : i32
    %15 = vector.broadcast %c-1_i32_7 : i32 to vector<1x1024xi32>
    %16 = arith.addi %6, %15 : vector<1x1024xi32>
    %c32_i32 = arith.constant 32 : i32
    %17 = vector.broadcast %c32_i32 : i32 to vector<1x1024xi32>
    %18 = arith.cmpi slt, %16, %17 : vector<1x1024xi32>
    %19 = arith.andi %14, %18 : vector<1x1024xi1>
    %c-1_i32_8 = arith.constant -1 : i32
    %20 = vector.broadcast %c-1_i32_8 : i32 to vector<1x1024xi32>
    %21 = arith.addi %8, %20 : vector<1x1024xi32>
    %c0_i32_9 = arith.constant 0 : i32
    %22 = vector.broadcast %c0_i32_9 : i32 to vector<1x1024xi32>
    %23 = arith.cmpi sge, %21, %22 : vector<1x1024xi32>
    %24 = arith.andi %19, %23 : vector<1x1024xi1>
    %c-1_i32_10 = arith.constant -1 : i32
    %25 = vector.broadcast %c-1_i32_10 : i32 to vector<1x1024xi32>
    %26 = arith.addi %8, %25 : vector<1x1024xi32>
    %c32_i32_11 = arith.constant 32 : i32
    %27 = vector.broadcast %c32_i32_11 : i32 to vector<1x1024xi32>
    %28 = arith.cmpi slt, %26, %27 : vector<1x1024xi32>
    %29 = arith.andi %24, %28 : vector<1x1024xi1>
    %cst_12 = arith.constant 0.000000e+00 : f32
    %30 = vector.broadcast %cst_12 : f32 to vector<1x1024xf32>
    %31 = arith.select %29, %10, %30 : vector<1x1024xi1>, vector<1x1024xf32>
    %32 = vector.extract_strided_slice %2 {offsets = [0, 0, 0], sizes = [1, 4, 1], strides = [1, 1, 1]} : vector<9x4x1xf32> to vector<1x4x1xf32>
    %33 = vector.shape_cast %32 : vector<1x4x1xf32> to vector<4x1xf32>
    %34 = vector.broadcast %33 : vector<4x1xf32> to vector<4x1024xf32>
    %35 = vector.broadcast %31 : vector<1x1024xf32> to vector<4x1024xf32>
    %36 = arith.mulf %34, %35 : vector<4x1024xf32>
    %37 = arith.addf %9, %36 : vector<4x1024xf32>
    %c0_13 = arith.constant 0 : index
    %c96 = arith.constant 96 : index
    %38 = vector.load %arg13[%c0_13, %c96] : memref<1x1280xf32, #tpu.memory_space<vmem>>, vector<1x1024xf32>
    %c-1_i32_14 = arith.constant -1 : i32
    %39 = vector.broadcast %c-1_i32_14 : i32 to vector<1x1024xi32>
    %40 = arith.addi %6, %39 : vector<1x1024xi32>
    %c0_i32_15 = arith.constant 0 : i32
    %41 = vector.broadcast %c0_i32_15 : i32 to vector<1x1024xi32>
    %42 = arith.cmpi sge, %40, %41 : vector<1x1024xi32>
    %c-1_i32_16 = arith.constant -1 : i32
    %43 = vector.broadcast %c-1_i32_16 : i32 to vector<1x1024xi32>
    %44 = arith.addi %6, %43 : vector<1x1024xi32>
    %c32_i32_17 = arith.constant 32 : i32
    %45 = vector.broadcast %c32_i32_17 : i32 to vector<1x1024xi32>
    %46 = arith.cmpi slt, %44, %45 : vector<1x1024xi32>
    %47 = arith.andi %42, %46 : vector<1x1024xi1>
    %c0_i32_18 = arith.constant 0 : i32
    %48 = vector.broadcast %c0_i32_18 : i32 to vector<1x1024xi32>
    %49 = arith.addi %8, %48 : vector<1x1024xi32>
    %c0_i32_19 = arith.constant 0 : i32
    %50 = vector.broadcast %c0_i32_19 : i32 to vector<1x1024xi32>
    %51 = arith.cmpi sge, %49, %50 : vector<1x1024xi32>
    %52 = arith.andi %47, %51 : vector<1x1024xi1>
    %c0_i32_20 = arith.constant 0 : i32
    %53 = vector.broadcast %c0_i32_20 : i32 to vector<1x1024xi32>
    %54 = arith.addi %8, %53 : vector<1x1024xi32>
    %c32_i32_21 = arith.constant 32 : i32
    %55 = vector.broadcast %c32_i32_21 : i32 to vector<1x1024xi32>
    %56 = arith.cmpi slt, %54, %55 : vector<1x1024xi32>
    %57 = arith.andi %52, %56 : vector<1x1024xi1>
    %cst_22 = arith.constant 0.000000e+00 : f32
    %58 = vector.broadcast %cst_22 : f32 to vector<1x1024xf32>
    %59 = arith.select %57, %38, %58 : vector<1x1024xi1>, vector<1x1024xf32>
    %60 = vector.extract_strided_slice %2 {offsets = [1, 0, 0], sizes = [1, 4, 1], strides = [1, 1, 1]} : vector<9x4x1xf32> to vector<1x4x1xf32>
    %61 = vector.shape_cast %60 : vector<1x4x1xf32> to vector<4x1xf32>
    %62 = vector.broadcast %61 : vector<4x1xf32> to vector<4x1024xf32>
    %63 = vector.broadcast %59 : vector<1x1024xf32> to vector<4x1024xf32>
    %64 = arith.mulf %62, %63 : vector<4x1024xf32>
    %65 = arith.addf %37, %64 : vector<4x1024xf32>
    %c0_23 = arith.constant 0 : index
    %c97 = arith.constant 97 : index
    %66 = vector.load %arg13[%c0_23, %c97] : memref<1x1280xf32, #tpu.memory_space<vmem>>, vector<1x1024xf32>
    %c-1_i32_24 = arith.constant -1 : i32
    %67 = vector.broadcast %c-1_i32_24 : i32 to vector<1x1024xi32>
    %68 = arith.addi %6, %67 : vector<1x1024xi32>
    %c0_i32_25 = arith.constant 0 : i32
    %69 = vector.broadcast %c0_i32_25 : i32 to vector<1x1024xi32>
    %70 = arith.cmpi sge, %68, %69 : vector<1x1024xi32>
    %c-1_i32_26 = arith.constant -1 : i32
    %71 = vector.broadcast %c-1_i32_26 : i32 to vector<1x1024xi32>
    %72 = arith.addi %6, %71 : vector<1x1024xi32>
    %c32_i32_27 = arith.constant 32 : i32
    %73 = vector.broadcast %c32_i32_27 : i32 to vector<1x1024xi32>
    %74 = arith.cmpi slt, %72, %73 : vector<1x1024xi32>
    %75 = arith.andi %70, %74 : vector<1x1024xi1>
    %c1_i32 = arith.constant 1 : i32
    %76 = vector.broadcast %c1_i32 : i32 to vector<1x1024xi32>
    %77 = arith.addi %8, %76 : vector<1x1024xi32>
    %c0_i32_28 = arith.constant 0 : i32
    %78 = vector.broadcast %c0_i32_28 : i32 to vector<1x1024xi32>
    %79 = arith.cmpi sge, %77, %78 : vector<1x1024xi32>
    %80 = arith.andi %75, %79 : vector<1x1024xi1>
    %c1_i32_29 = arith.constant 1 : i32
    %81 = vector.broadcast %c1_i32_29 : i32 to vector<1x1024xi32>
    %82 = arith.addi %8, %81 : vector<1x1024xi32>
    %c32_i32_30 = arith.constant 32 : i32
    %83 = vector.broadcast %c32_i32_30 : i32 to vector<1x1024xi32>
    %84 = arith.cmpi slt, %82, %83 : vector<1x1024xi32>
    %85 = arith.andi %80, %84 : vector<1x1024xi1>
    %cst_31 = arith.constant 0.000000e+00 : f32
    %86 = vector.broadcast %cst_31 : f32 to vector<1x1024xf32>
    %87 = arith.select %85, %66, %86 : vector<1x1024xi1>, vector<1x1024xf32>
    %88 = vector.extract_strided_slice %2 {offsets = [2, 0, 0], sizes = [1, 4, 1], strides = [1, 1, 1]} : vector<9x4x1xf32> to vector<1x4x1xf32>
    %89 = vector.shape_cast %88 : vector<1x4x1xf32> to vector<4x1xf32>
    %90 = vector.broadcast %89 : vector<4x1xf32> to vector<4x1024xf32>
    %91 = vector.broadcast %87 : vector<1x1024xf32> to vector<4x1024xf32>
    %92 = arith.mulf %90, %91 : vector<4x1024xf32>
    %93 = arith.addf %65, %92 : vector<4x1024xf32>
    %c0_32 = arith.constant 0 : index
    %c127 = arith.constant 127 : index
    %94 = vector.load %arg13[%c0_32, %c127] : memref<1x1280xf32, #tpu.memory_space<vmem>>, vector<1x1024xf32>
    %c0_i32_33 = arith.constant 0 : i32
    %95 = vector.broadcast %c0_i32_33 : i32 to vector<1x1024xi32>
    %96 = arith.addi %6, %95 : vector<1x1024xi32>
    %c0_i32_34 = arith.constant 0 : i32
    %97 = vector.broadcast %c0_i32_34 : i32 to vector<1x1024xi32>
    %98 = arith.cmpi sge, %96, %97 : vector<1x1024xi32>
    %c0_i32_35 = arith.constant 0 : i32
    %99 = vector.broadcast %c0_i32_35 : i32 to vector<1x1024xi32>
    %100 = arith.addi %6, %99 : vector<1x1024xi32>
    %c32_i32_36 = arith.constant 32 : i32
    %101 = vector.broadcast %c32_i32_36 : i32 to vector<1x1024xi32>
    %102 = arith.cmpi slt, %100, %101 : vector<1x1024xi32>
    %103 = arith.andi %98, %102 : vector<1x1024xi1>
    %c-1_i32_37 = arith.constant -1 : i32
    %104 = vector.broadcast %c-1_i32_37 : i32 to vector<1x1024xi32>
    %105 = arith.addi %8, %104 : vector<1x1024xi32>
    %c0_i32_38 = arith.constant 0 : i32
    %106 = vector.broadcast %c0_i32_38 : i32 to vector<1x1024xi32>
    %107 = arith.cmpi sge, %105, %106 : vector<1x1024xi32>
    %108 = arith.andi %103, %107 : vector<1x1024xi1>
    %c-1_i32_39 = arith.constant -1 : i32
    %109 = vector.broadcast %c-1_i32_39 : i32 to vector<1x1024xi32>
    %110 = arith.addi %8, %109 : vector<1x1024xi32>
    %c32_i32_40 = arith.constant 32 : i32
    %111 = vector.broadcast %c32_i32_40 : i32 to vector<1x1024xi32>
    %112 = arith.cmpi slt, %110, %111 : vector<1x1024xi32>
    %113 = arith.andi %108, %112 : vector<1x1024xi1>
    %cst_41 = arith.constant 0.000000e+00 : f32
    %114 = vector.broadcast %cst_41 : f32 to vector<1x1024xf32>
    %115 = arith.select %113, %94, %114 : vector<1x1024xi1>, vector<1x1024xf32>
    %116 = vector.extract_strided_slice %2 {offsets = [3, 0, 0], sizes = [1, 4, 1], strides = [1, 1, 1]} : vector<9x4x1xf32> to vector<1x4x1xf32>
    %117 = vector.shape_cast %116 : vector<1x4x1xf32> to vector<4x1xf32>
    %118 = vector.broadcast %117 : vector<4x1xf32> to vector<4x1024xf32>
    %119 = vector.broadcast %115 : vector<1x1024xf32> to vector<4x1024xf32>
    %120 = arith.mulf %118, %119 : vector<4x1024xf32>
    %121 = arith.addf %93, %120 : vector<4x1024xf32>
    %c0_42 = arith.constant 0 : index
    %c128_43 = arith.constant 128 : index
    %122 = vector.load %arg13[%c0_42, %c128_43] : memref<1x1280xf32, #tpu.memory_space<vmem>>, vector<1x1024xf32>
    %c0_i32_44 = arith.constant 0 : i32
    %123 = vector.broadcast %c0_i32_44 : i32 to vector<1x1024xi32>
    %124 = arith.addi %6, %123 : vector<1x1024xi32>
    %c0_i32_45 = arith.constant 0 : i32
    %125 = vector.broadcast %c0_i32_45 : i32 to vector<1x1024xi32>
    %126 = arith.cmpi sge, %124, %125 : vector<1x1024xi32>
    %c0_i32_46 = arith.constant 0 : i32
    %127 = vector.broadcast %c0_i32_46 : i32 to vector<1x1024xi32>
    %128 = arith.addi %6, %127 : vector<1x1024xi32>
    %c32_i32_47 = arith.constant 32 : i32
    %129 = vector.broadcast %c32_i32_47 : i32 to vector<1x1024xi32>
    %130 = arith.cmpi slt, %128, %129 : vector<1x1024xi32>
    %131 = arith.andi %126, %130 : vector<1x1024xi1>
    %c0_i32_48 = arith.constant 0 : i32
    %132 = vector.broadcast %c0_i32_48 : i32 to vector<1x1024xi32>
    %133 = arith.addi %8, %132 : vector<1x1024xi32>
    %c0_i32_49 = arith.constant 0 : i32
    %134 = vector.broadcast %c0_i32_49 : i32 to vector<1x1024xi32>
    %135 = arith.cmpi sge, %133, %134 : vector<1x1024xi32>
    %136 = arith.andi %131, %135 : vector<1x1024xi1>
    %c0_i32_50 = arith.constant 0 : i32
    %137 = vector.broadcast %c0_i32_50 : i32 to vector<1x1024xi32>
    %138 = arith.addi %8, %137 : vector<1x1024xi32>
    %c32_i32_51 = arith.constant 32 : i32
    %139 = vector.broadcast %c32_i32_51 : i32 to vector<1x1024xi32>
    %140 = arith.cmpi slt, %138, %139 : vector<1x1024xi32>
    %141 = arith.andi %136, %140 : vector<1x1024xi1>
    %cst_52 = arith.constant 0.000000e+00 : f32
    %142 = vector.broadcast %cst_52 : f32 to vector<1x1024xf32>
    %143 = arith.select %141, %122, %142 : vector<1x1024xi1>, vector<1x1024xf32>
    %144 = vector.extract_strided_slice %2 {offsets = [4, 0, 0], sizes = [1, 4, 1], strides = [1, 1, 1]} : vector<9x4x1xf32> to vector<1x4x1xf32>
    %145 = vector.shape_cast %144 : vector<1x4x1xf32> to vector<4x1xf32>
    %146 = vector.broadcast %145 : vector<4x1xf32> to vector<4x1024xf32>
    %147 = vector.broadcast %143 : vector<1x1024xf32> to vector<4x1024xf32>
    %148 = arith.mulf %146, %147 : vector<4x1024xf32>
    %149 = arith.addf %121, %148 : vector<4x1024xf32>
    %c0_53 = arith.constant 0 : index
    %c129 = arith.constant 129 : index
    %150 = vector.load %arg13[%c0_53, %c129] : memref<1x1280xf32, #tpu.memory_space<vmem>>, vector<1x1024xf32>
    %c0_i32_54 = arith.constant 0 : i32
    %151 = vector.broadcast %c0_i32_54 : i32 to vector<1x1024xi32>
    %152 = arith.addi %6, %151 : vector<1x1024xi32>
    %c0_i32_55 = arith.constant 0 : i32
    %153 = vector.broadcast %c0_i32_55 : i32 to vector<1x1024xi32>
    %154 = arith.cmpi sge, %152, %153 : vector<1x1024xi32>
    %c0_i32_56 = arith.constant 0 : i32
    %155 = vector.broadcast %c0_i32_56 : i32 to vector<1x1024xi32>
    %156 = arith.addi %6, %155 : vector<1x1024xi32>
    %c32_i32_57 = arith.constant 32 : i32
    %157 = vector.broadcast %c32_i32_57 : i32 to vector<1x1024xi32>
    %158 = arith.cmpi slt, %156, %157 : vector<1x1024xi32>
    %159 = arith.andi %154, %158 : vector<1x1024xi1>
    %c1_i32_58 = arith.constant 1 : i32
    %160 = vector.broadcast %c1_i32_58 : i32 to vector<1x1024xi32>
    %161 = arith.addi %8, %160 : vector<1x1024xi32>
    %c0_i32_59 = arith.constant 0 : i32
    %162 = vector.broadcast %c0_i32_59 : i32 to vector<1x1024xi32>
    %163 = arith.cmpi sge, %161, %162 : vector<1x1024xi32>
    %164 = arith.andi %159, %163 : vector<1x1024xi1>
    %c1_i32_60 = arith.constant 1 : i32
    %165 = vector.broadcast %c1_i32_60 : i32 to vector<1x1024xi32>
    %166 = arith.addi %8, %165 : vector<1x1024xi32>
    %c32_i32_61 = arith.constant 32 : i32
    %167 = vector.broadcast %c32_i32_61 : i32 to vector<1x1024xi32>
    %168 = arith.cmpi slt, %166, %167 : vector<1x1024xi32>
    %169 = arith.andi %164, %168 : vector<1x1024xi1>
    %cst_62 = arith.constant 0.000000e+00 : f32
    %170 = vector.broadcast %cst_62 : f32 to vector<1x1024xf32>
    %171 = arith.select %169, %150, %170 : vector<1x1024xi1>, vector<1x1024xf32>
    %172 = vector.extract_strided_slice %2 {offsets = [5, 0, 0], sizes = [1, 4, 1], strides = [1, 1, 1]} : vector<9x4x1xf32> to vector<1x4x1xf32>
    %173 = vector.shape_cast %172 : vector<1x4x1xf32> to vector<4x1xf32>
    %174 = vector.broadcast %173 : vector<4x1xf32> to vector<4x1024xf32>
    %175 = vector.broadcast %171 : vector<1x1024xf32> to vector<4x1024xf32>
    %176 = arith.mulf %174, %175 : vector<4x1024xf32>
    %177 = arith.addf %149, %176 : vector<4x1024xf32>
    %c0_63 = arith.constant 0 : index
    %c159 = arith.constant 159 : index
    %178 = vector.load %arg13[%c0_63, %c159] : memref<1x1280xf32, #tpu.memory_space<vmem>>, vector<1x1024xf32>
    %c1_i32_64 = arith.constant 1 : i32
    %179 = vector.broadcast %c1_i32_64 : i32 to vector<1x1024xi32>
    %180 = arith.addi %6, %179 : vector<1x1024xi32>
    %c0_i32_65 = arith.constant 0 : i32
    %181 = vector.broadcast %c0_i32_65 : i32 to vector<1x1024xi32>
    %182 = arith.cmpi sge, %180, %181 : vector<1x1024xi32>
    %c1_i32_66 = arith.constant 1 : i32
    %183 = vector.broadcast %c1_i32_66 : i32 to vector<1x1024xi32>
    %184 = arith.addi %6, %183 : vector<1x1024xi32>
    %c32_i32_67 = arith.constant 32 : i32
    %185 = vector.broadcast %c32_i32_67 : i32 to vector<1x1024xi32>
    %186 = arith.cmpi slt, %184, %185 : vector<1x1024xi32>
    %187 = arith.andi %182, %186 : vector<1x1024xi1>
    %c-1_i32_68 = arith.constant -1 : i32
    %188 = vector.broadcast %c-1_i32_68 : i32 to vector<1x1024xi32>
    %189 = arith.addi %8, %188 : vector<1x1024xi32>
    %c0_i32_69 = arith.constant 0 : i32
    %190 = vector.broadcast %c0_i32_69 : i32 to vector<1x1024xi32>
    %191 = arith.cmpi sge, %189, %190 : vector<1x1024xi32>
    %192 = arith.andi %187, %191 : vector<1x1024xi1>
    %c-1_i32_70 = arith.constant -1 : i32
    %193 = vector.broadcast %c-1_i32_70 : i32 to vector<1x1024xi32>
    %194 = arith.addi %8, %193 : vector<1x1024xi32>
    %c32_i32_71 = arith.constant 32 : i32
    %195 = vector.broadcast %c32_i32_71 : i32 to vector<1x1024xi32>
    %196 = arith.cmpi slt, %194, %195 : vector<1x1024xi32>
    %197 = arith.andi %192, %196 : vector<1x1024xi1>
    %cst_72 = arith.constant 0.000000e+00 : f32
    %198 = vector.broadcast %cst_72 : f32 to vector<1x1024xf32>
    %199 = arith.select %197, %178, %198 : vector<1x1024xi1>, vector<1x1024xf32>
    %200 = vector.extract_strided_slice %2 {offsets = [6, 0, 0], sizes = [1, 4, 1], strides = [1, 1, 1]} : vector<9x4x1xf32> to vector<1x4x1xf32>
    %201 = vector.shape_cast %200 : vector<1x4x1xf32> to vector<4x1xf32>
    %202 = vector.broadcast %201 : vector<4x1xf32> to vector<4x1024xf32>
    %203 = vector.broadcast %199 : vector<1x1024xf32> to vector<4x1024xf32>
    %204 = arith.mulf %202, %203 : vector<4x1024xf32>
    %205 = arith.addf %177, %204 : vector<4x1024xf32>
    %c0_73 = arith.constant 0 : index
    %c160 = arith.constant 160 : index
    %206 = vector.load %arg13[%c0_73, %c160] : memref<1x1280xf32, #tpu.memory_space<vmem>>, vector<1x1024xf32>
    %c1_i32_74 = arith.constant 1 : i32
    %207 = vector.broadcast %c1_i32_74 : i32 to vector<1x1024xi32>
    %208 = arith.addi %6, %207 : vector<1x1024xi32>
    %c0_i32_75 = arith.constant 0 : i32
    %209 = vector.broadcast %c0_i32_75 : i32 to vector<1x1024xi32>
    %210 = arith.cmpi sge, %208, %209 : vector<1x1024xi32>
    %c1_i32_76 = arith.constant 1 : i32
    %211 = vector.broadcast %c1_i32_76 : i32 to vector<1x1024xi32>
    %212 = arith.addi %6, %211 : vector<1x1024xi32>
    %c32_i32_77 = arith.constant 32 : i32
    %213 = vector.broadcast %c32_i32_77 : i32 to vector<1x1024xi32>
    %214 = arith.cmpi slt, %212, %213 : vector<1x1024xi32>
    %215 = arith.andi %210, %214 : vector<1x1024xi1>
    %c0_i32_78 = arith.constant 0 : i32
    %216 = vector.broadcast %c0_i32_78 : i32 to vector<1x1024xi32>
    %217 = arith.addi %8, %216 : vector<1x1024xi32>
    %c0_i32_79 = arith.constant 0 : i32
    %218 = vector.broadcast %c0_i32_79 : i32 to vector<1x1024xi32>
    %219 = arith.cmpi sge, %217, %218 : vector<1x1024xi32>
    %220 = arith.andi %215, %219 : vector<1x1024xi1>
    %c0_i32_80 = arith.constant 0 : i32
    %221 = vector.broadcast %c0_i32_80 : i32 to vector<1x1024xi32>
    %222 = arith.addi %8, %221 : vector<1x1024xi32>
    %c32_i32_81 = arith.constant 32 : i32
    %223 = vector.broadcast %c32_i32_81 : i32 to vector<1x1024xi32>
    %224 = arith.cmpi slt, %222, %223 : vector<1x1024xi32>
    %225 = arith.andi %220, %224 : vector<1x1024xi1>
    %cst_82 = arith.constant 0.000000e+00 : f32
    %226 = vector.broadcast %cst_82 : f32 to vector<1x1024xf32>
    %227 = arith.select %225, %206, %226 : vector<1x1024xi1>, vector<1x1024xf32>
    %228 = vector.extract_strided_slice %2 {offsets = [7, 0, 0], sizes = [1, 4, 1], strides = [1, 1, 1]} : vector<9x4x1xf32> to vector<1x4x1xf32>
    %229 = vector.shape_cast %228 : vector<1x4x1xf32> to vector<4x1xf32>
    %230 = vector.broadcast %229 : vector<4x1xf32> to vector<4x1024xf32>
    %231 = vector.broadcast %227 : vector<1x1024xf32> to vector<4x1024xf32>
    %232 = arith.mulf %230, %231 : vector<4x1024xf32>
    %233 = arith.addf %205, %232 : vector<4x1024xf32>
    %c0_83 = arith.constant 0 : index
    %c161 = arith.constant 161 : index
    %234 = vector.load %arg13[%c0_83, %c161] : memref<1x1280xf32, #tpu.memory_space<vmem>>, vector<1x1024xf32>
    %c1_i32_84 = arith.constant 1 : i32
    %235 = vector.broadcast %c1_i32_84 : i32 to vector<1x1024xi32>
    %236 = arith.addi %6, %235 : vector<1x1024xi32>
    %c0_i32_85 = arith.constant 0 : i32
    %237 = vector.broadcast %c0_i32_85 : i32 to vector<1x1024xi32>
    %238 = arith.cmpi sge, %236, %237 : vector<1x1024xi32>
    %c1_i32_86 = arith.constant 1 : i32
    %239 = vector.broadcast %c1_i32_86 : i32 to vector<1x1024xi32>
    %240 = arith.addi %6, %239 : vector<1x1024xi32>
    %c32_i32_87 = arith.constant 32 : i32
    %241 = vector.broadcast %c32_i32_87 : i32 to vector<1x1024xi32>
    %242 = arith.cmpi slt, %240, %241 : vector<1x1024xi32>
    %243 = arith.andi %238, %242 : vector<1x1024xi1>
    %c1_i32_88 = arith.constant 1 : i32
    %244 = vector.broadcast %c1_i32_88 : i32 to vector<1x1024xi32>
    %245 = arith.addi %8, %244 : vector<1x1024xi32>
    %c0_i32_89 = arith.constant 0 : i32
    %246 = vector.broadcast %c0_i32_89 : i32 to vector<1x1024xi32>
    %247 = arith.cmpi sge, %245, %246 : vector<1x1024xi32>
    %248 = arith.andi %243, %247 : vector<1x1024xi1>
    %c1_i32_90 = arith.constant 1 : i32
    %249 = vector.broadcast %c1_i32_90 : i32 to vector<1x1024xi32>
    %250 = arith.addi %8, %249 : vector<1x1024xi32>
    %c32_i32_91 = arith.constant 32 : i32
    %251 = vector.broadcast %c32_i32_91 : i32 to vector<1x1024xi32>
    %252 = arith.cmpi slt, %250, %251 : vector<1x1024xi32>
    %253 = arith.andi %248, %252 : vector<1x1024xi1>
    %cst_92 = arith.constant 0.000000e+00 : f32
    %254 = vector.broadcast %cst_92 : f32 to vector<1x1024xf32>
    %255 = arith.select %253, %234, %254 : vector<1x1024xi1>, vector<1x1024xf32>
    %256 = vector.extract_strided_slice %2 {offsets = [8, 0, 0], sizes = [1, 4, 1], strides = [1, 1, 1]} : vector<9x4x1xf32> to vector<1x4x1xf32>
    %257 = vector.shape_cast %256 : vector<1x4x1xf32> to vector<4x1xf32>
    %258 = vector.broadcast %257 : vector<4x1xf32> to vector<4x1024xf32>
    %259 = vector.broadcast %255 : vector<1x1024xf32> to vector<4x1024xf32>
    %260 = arith.mulf %258, %259 : vector<4x1024xf32>
    %261 = arith.addf %233, %260 : vector<4x1024xf32>
    %c0_93 = arith.constant 0 : index
    %c0_94 = arith.constant 0 : index
    %262 = vector.load %arg3[%c0_93, %c0_94] : memref<4x1xf32, #tpu.memory_space<vmem>>, vector<4x1xf32>
    %263 = vector.broadcast %262 : vector<4x1xf32> to vector<4x1024xf32>
    %264 = arith.mulf %261, %263 : vector<4x1024xf32>
    %c0_95 = arith.constant 0 : index
    %c0_96 = arith.constant 0 : index
    %265 = vector.load %arg4[%c0_95, %c0_96] : memref<4x1xf32, #tpu.memory_space<vmem>>, vector<4x1xf32>
    %266 = vector.broadcast %265 : vector<4x1xf32> to vector<4x1024xf32>
    %267 = arith.addf %264, %266 : vector<4x1024xf32>
    %cst_97 = arith.constant 0.000000e+00 : f32
    %268 = vector.broadcast %cst_97 : f32 to vector<4x1024xf32>
    %269 = arith.maximumf %267, %268 : vector<4x1024xf32>
    %c0_98 = arith.constant 0 : index
    %c0_99 = arith.constant 0 : index
    %270 = vector.load %arg5[%c0_98, %c0_99] : memref<1024x256xf32, #tpu.memory_space<vmem>>, vector<1024x256xf32>
    %cst_100 = arith.constant 0.000000e+00 : f32
    %271 = vector.broadcast %cst_100 : f32 to vector<4x128xf32>
    %c0_101 = arith.constant 0 : index
    %c1152 = arith.constant 1152 : index
    %272 = vector.load %arg14[%c0_101, %c1152] : memref<4x1280xf32, #tpu.memory_space<vmem>>, vector<4x128xf32>
    tpu.vector_store %arg14[%c0_101, %c1152], %271 {strides = array<i32>} : memref<4x1280xf32, #tpu.memory_space<vmem>>, vector<4x128xf32>,
    %c0_102 = arith.constant 0 : index
    %c128_103 = arith.constant 128 : index
    %273 = vector.load %arg14[%c0_102, %c128_103] : memref<4x1280xf32, #tpu.memory_space<vmem>>, vector<4x1024xf32>
    tpu.vector_store %arg14[%c0_102, %c128_103], %269 {strides = array<i32>} : memref<4x1280xf32, #tpu.memory_space<vmem>>, vector<4x1024xf32>,
    %c0_104 = arith.constant 0 : index
    %c129_105 = arith.constant 129 : index
    %274 = vector.load %arg14[%c0_104, %c129_105] : memref<4x1280xf32, #tpu.memory_space<vmem>>, vector<4x1024xf32>
    %c0_106 = arith.constant 0 : index
    %c160_107 = arith.constant 160 : index
    %275 = vector.load %arg14[%c0_106, %c160_107] : memref<4x1280xf32, #tpu.memory_space<vmem>>, vector<4x1024xf32>
    %c0_108 = arith.constant 0 : index
    %c161_109 = arith.constant 161 : index
    %276 = vector.load %arg14[%c0_108, %c161_109] : memref<4x1280xf32, #tpu.memory_space<vmem>>, vector<4x1024xf32>
    %277 = arith.maximumf %269, %274 : vector<4x1024xf32>
    %278 = arith.maximumf %275, %276 : vector<4x1024xf32>
    %279 = arith.maximumf %277, %278 : vector<4x1024xf32>
    %cst_110 = arith.constant dense<0.000000e+00> : vector<4x256xf32>
    %280 = tpu.matmul %279, %270, %cst_110 {dimension_numbers = #tpu.dot_dimension_numbers<[1], [0], [0], [1], [0, 0, 1, 1], [], []>} : vector<4x1024xf32>, vector<1024x256xf32>, vector<4x256xf32> -> vector<4x256xf32>
    %c0_111 = arith.constant 0 : index
    %c0_112 = arith.constant 0 : index
    %c0_113 = arith.constant 0 : index
    %281 = vector.load %arg6[%c0_111, %c0_112, %c0_113] : memref<9x8x4xf32, #tpu.memory_space<vmem>>, vector<9x8x4xf32>
    %c0_114 = arith.constant 0 : index
    %c128_115 = arith.constant 128 : index
    %282 = vector.load %arg15[%c0_114, %c128_115] : memref<4x512xf32, #tpu.memory_space<vmem>>, vector<4x256xf32>
    tpu.vector_store %arg15[%c0_114, %c128_115], %280 {strides = array<i32>} : memref<4x512xf32, #tpu.memory_space<vmem>>, vector<4x256xf32>,
    %283 = tpu.iota {dimensions = array<i32: 1>} : vector<1x256xi32>
    %c4_i32 = arith.constant 4 : i32
    %284 = vector.broadcast %c4_i32 : i32 to vector<1x256xi32>
    %285 = arith.shrsi %283, %284 : vector<1x256xi32>
    %c15_i32 = arith.constant 15 : i32
    %286 = vector.broadcast %c15_i32 : i32 to vector<1x256xi32>
    %287 = arith.andi %283, %286 : vector<1x256xi32>
    %cst_116 = arith.constant 0.000000e+00 : f32
    %288 = vector.broadcast %cst_116 : f32 to vector<8x256xf32>
    %c0_117 = arith.constant 0 : index
    %c111 = arith.constant 111 : index
    %289 = vector.load %arg15[%c0_117, %c111] : memref<4x512xf32, #tpu.memory_space<vmem>>, vector<4x256xf32>
    %c-1_i32_118 = arith.constant -1 : i32
    %290 = vector.broadcast %c-1_i32_118 : i32 to vector<1x256xi32>
    %291 = arith.addi %285, %290 : vector<1x256xi32>
    %c0_i32_119 = arith.constant 0 : i32
    %292 = vector.broadcast %c0_i32_119 : i32 to vector<1x256xi32>
    %293 = arith.cmpi sge, %291, %292 : vector<1x256xi32>
    %c-1_i32_120 = arith.constant -1 : i32
    %294 = vector.broadcast %c-1_i32_120 : i32 to vector<1x256xi32>
    %295 = arith.addi %285, %294 : vector<1x256xi32>
    %c16_i32 = arith.constant 16 : i32
    %296 = vector.broadcast %c16_i32 : i32 to vector<1x256xi32>
    %297 = arith.cmpi slt, %295, %296 : vector<1x256xi32>
    %298 = arith.andi %293, %297 : vector<1x256xi1>
    %c-1_i32_121 = arith.constant -1 : i32
    %299 = vector.broadcast %c-1_i32_121 : i32 to vector<1x256xi32>
    %300 = arith.addi %287, %299 : vector<1x256xi32>
    %c0_i32_122 = arith.constant 0 : i32
    %301 = vector.broadcast %c0_i32_122 : i32 to vector<1x256xi32>
    %302 = arith.cmpi sge, %300, %301 : vector<1x256xi32>
    %303 = arith.andi %298, %302 : vector<1x256xi1>
    %c-1_i32_123 = arith.constant -1 : i32
    %304 = vector.broadcast %c-1_i32_123 : i32 to vector<1x256xi32>
    %305 = arith.addi %287, %304 : vector<1x256xi32>
    %c16_i32_124 = arith.constant 16 : i32
    %306 = vector.broadcast %c16_i32_124 : i32 to vector<1x256xi32>
    %307 = arith.cmpi slt, %305, %306 : vector<1x256xi32>
    %308 = arith.andi %303, %307 : vector<1x256xi1>
    %cst_125 = arith.constant 0.000000e+00 : f32
    %309 = vector.shape_cast %308 : vector<1x256xi1> to vector<1x256xi1>
    %310 = vector.broadcast %309 : vector<1x256xi1> to vector<4x256xi1>
    %311 = vector.broadcast %cst_125 : f32 to vector<4x256xf32>
    %312 = arith.select %310, %289, %311 : vector<4x256xi1>, vector<4x256xf32>
    %313 = vector.extract_strided_slice %281 {offsets = [0, 0, 0], sizes = [1, 8, 4], strides = [1, 1, 1]} : vector<9x8x4xf32> to vector<1x8x4xf32>
    %314 = vector.shape_cast %313 : vector<1x8x4xf32> to vector<8x4xf32>
    %cst_126 = arith.constant dense<0.000000e+00> : vector<8x256xf32>
    %315 = tpu.matmul %314, %312, %cst_126 {dimension_numbers = #tpu.dot_dimension_numbers<[1], [0], [0], [1], [0, 0, 1, 1], [], []>} : vector<8x4xf32>, vector<4x256xf32>, vector<8x256xf32> -> vector<8x256xf32>
    %316 = arith.addf %288, %315 : vector<8x256xf32>
    %c0_127 = arith.constant 0 : index
    %c112 = arith.constant 112 : index
    %317 = vector.load %arg15[%c0_127, %c112] : memref<4x512xf32, #tpu.memory_space<vmem>>, vector<4x256xf32>
    %c-1_i32_128 = arith.constant -1 : i32
    %318 = vector.broadcast %c-1_i32_128 : i32 to vector<1x256xi32>
    %319 = arith.addi %285, %318 : vector<1x256xi32>
    %c0_i32_129 = arith.constant 0 : i32
    %320 = vector.broadcast %c0_i32_129 : i32 to vector<1x256xi32>
    %321 = arith.cmpi sge, %319, %320 : vector<1x256xi32>
    %c-1_i32_130 = arith.constant -1 : i32
    %322 = vector.broadcast %c-1_i32_130 : i32 to vector<1x256xi32>
    %323 = arith.addi %285, %322 : vector<1x256xi32>
    %c16_i32_131 = arith.constant 16 : i32
    %324 = vector.broadcast %c16_i32_131 : i32 to vector<1x256xi32>
    %325 = arith.cmpi slt, %323, %324 : vector<1x256xi32>
    %326 = arith.andi %321, %325 : vector<1x256xi1>
    %c0_i32_132 = arith.constant 0 : i32
    %327 = vector.broadcast %c0_i32_132 : i32 to vector<1x256xi32>
    %328 = arith.addi %287, %327 : vector<1x256xi32>
    %c0_i32_133 = arith.constant 0 : i32
    %329 = vector.broadcast %c0_i32_133 : i32 to vector<1x256xi32>
    %330 = arith.cmpi sge, %328, %329 : vector<1x256xi32>
    %331 = arith.andi %326, %330 : vector<1x256xi1>
    %c0_i32_134 = arith.constant 0 : i32
    %332 = vector.broadcast %c0_i32_134 : i32 to vector<1x256xi32>
    %333 = arith.addi %287, %332 : vector<1x256xi32>
    %c16_i32_135 = arith.constant 16 : i32
    %334 = vector.broadcast %c16_i32_135 : i32 to vector<1x256xi32>
    %335 = arith.cmpi slt, %333, %334 : vector<1x256xi32>
    %336 = arith.andi %331, %335 : vector<1x256xi1>
    %cst_136 = arith.constant 0.000000e+00 : f32
    %337 = vector.shape_cast %336 : vector<1x256xi1> to vector<1x256xi1>
    %338 = vector.broadcast %337 : vector<1x256xi1> to vector<4x256xi1>
    %339 = vector.broadcast %cst_136 : f32 to vector<4x256xf32>
    %340 = arith.select %338, %317, %339 : vector<4x256xi1>, vector<4x256xf32>
    %341 = vector.extract_strided_slice %281 {offsets = [1, 0, 0], sizes = [1, 8, 4], strides = [1, 1, 1]} : vector<9x8x4xf32> to vector<1x8x4xf32>
    %342 = vector.shape_cast %341 : vector<1x8x4xf32> to vector<8x4xf32>
    %cst_137 = arith.constant dense<0.000000e+00> : vector<8x256xf32>
    %343 = tpu.matmul %342, %340, %cst_137 {dimension_numbers = #tpu.dot_dimension_numbers<[1], [0], [0], [1], [0, 0, 1, 1], [], []>} : vector<8x4xf32>, vector<4x256xf32>, vector<8x256xf32> -> vector<8x256xf32>
    %344 = arith.addf %316, %343 : vector<8x256xf32>
    %c0_138 = arith.constant 0 : index
    %c113 = arith.constant 113 : index
    %345 = vector.load %arg15[%c0_138, %c113] : memref<4x512xf32, #tpu.memory_space<vmem>>, vector<4x256xf32>
    %c-1_i32_139 = arith.constant -1 : i32
    %346 = vector.broadcast %c-1_i32_139 : i32 to vector<1x256xi32>
    %347 = arith.addi %285, %346 : vector<1x256xi32>
    %c0_i32_140 = arith.constant 0 : i32
    %348 = vector.broadcast %c0_i32_140 : i32 to vector<1x256xi32>
    %349 = arith.cmpi sge, %347, %348 : vector<1x256xi32>
    %c-1_i32_141 = arith.constant -1 : i32
    %350 = vector.broadcast %c-1_i32_141 : i32 to vector<1x256xi32>
    %351 = arith.addi %285, %350 : vector<1x256xi32>
    %c16_i32_142 = arith.constant 16 : i32
    %352 = vector.broadcast %c16_i32_142 : i32 to vector<1x256xi32>
    %353 = arith.cmpi slt, %351, %352 : vector<1x256xi32>
    %354 = arith.andi %349, %353 : vector<1x256xi1>
    %c1_i32_143 = arith.constant 1 : i32
    %355 = vector.broadcast %c1_i32_143 : i32 to vector<1x256xi32>
    %356 = arith.addi %287, %355 : vector<1x256xi32>
    %c0_i32_144 = arith.constant 0 : i32
    %357 = vector.broadcast %c0_i32_144 : i32 to vector<1x256xi32>
    %358 = arith.cmpi sge, %356, %357 : vector<1x256xi32>
    %359 = arith.andi %354, %358 : vector<1x256xi1>
    %c1_i32_145 = arith.constant 1 : i32
    %360 = vector.broadcast %c1_i32_145 : i32 to vector<1x256xi32>
    %361 = arith.addi %287, %360 : vector<1x256xi32>
    %c16_i32_146 = arith.constant 16 : i32
    %362 = vector.broadcast %c16_i32_146 : i32 to vector<1x256xi32>
    %363 = arith.cmpi slt, %361, %362 : vector<1x256xi32>
    %364 = arith.andi %359, %363 : vector<1x256xi1>
    %cst_147 = arith.constant 0.000000e+00 : f32
    %365 = vector.shape_cast %364 : vector<1x256xi1> to vector<1x256xi1>
    %366 = vector.broadcast %365 : vector<1x256xi1> to vector<4x256xi1>
    %367 = vector.broadcast %cst_147 : f32 to vector<4x256xf32>
    %368 = arith.select %366, %345, %367 : vector<4x256xi1>, vector<4x256xf32>
    %369 = vector.extract_strided_slice %281 {offsets = [2, 0, 0], sizes = [1, 8, 4], strides = [1, 1, 1]} : vector<9x8x4xf32> to vector<1x8x4xf32>
    %370 = vector.shape_cast %369 : vector<1x8x4xf32> to vector<8x4xf32>
    %cst_148 = arith.constant dense<0.000000e+00> : vector<8x256xf32>
    %371 = tpu.matmul %370, %368, %cst_148 {dimension_numbers = #tpu.dot_dimension_numbers<[1], [0], [0], [1], [0, 0, 1, 1], [], []>} : vector<8x4xf32>, vector<4x256xf32>, vector<8x256xf32> -> vector<8x256xf32>
    %372 = arith.addf %344, %371 : vector<8x256xf32>
    %c0_149 = arith.constant 0 : index
    %c127_150 = arith.constant 127 : index
    %373 = vector.load %arg15[%c0_149, %c127_150] : memref<4x512xf32, #tpu.memory_space<vmem>>, vector<4x256xf32>
    %c0_i32_151 = arith.constant 0 : i32
    %374 = vector.broadcast %c0_i32_151 : i32 to vector<1x256xi32>
    %375 = arith.addi %285, %374 : vector<1x256xi32>
    %c0_i32_152 = arith.constant 0 : i32
    %376 = vector.broadcast %c0_i32_152 : i32 to vector<1x256xi32>
    %377 = arith.cmpi sge, %375, %376 : vector<1x256xi32>
    %c0_i32_153 = arith.constant 0 : i32
    %378 = vector.broadcast %c0_i32_153 : i32 to vector<1x256xi32>
    %379 = arith.addi %285, %378 : vector<1x256xi32>
    %c16_i32_154 = arith.constant 16 : i32
    %380 = vector.broadcast %c16_i32_154 : i32 to vector<1x256xi32>
    %381 = arith.cmpi slt, %379, %380 : vector<1x256xi32>
    %382 = arith.andi %377, %381 : vector<1x256xi1>
    %c-1_i32_155 = arith.constant -1 : i32
    %383 = vector.broadcast %c-1_i32_155 : i32 to vector<1x256xi32>
    %384 = arith.addi %287, %383 : vector<1x256xi32>
    %c0_i32_156 = arith.constant 0 : i32
    %385 = vector.broadcast %c0_i32_156 : i32 to vector<1x256xi32>
    %386 = arith.cmpi sge, %384, %385 : vector<1x256xi32>
    %387 = arith.andi %382, %386 : vector<1x256xi1>
    %c-1_i32_157 = arith.constant -1 : i32
    %388 = vector.broadcast %c-1_i32_157 : i32 to vector<1x256xi32>
    %389 = arith.addi %287, %388 : vector<1x256xi32>
    %c16_i32_158 = arith.constant 16 : i32
    %390 = vector.broadcast %c16_i32_158 : i32 to vector<1x256xi32>
    %391 = arith.cmpi slt, %389, %390 : vector<1x256xi32>
    %392 = arith.andi %387, %391 : vector<1x256xi1>
    %cst_159 = arith.constant 0.000000e+00 : f32
    %393 = vector.shape_cast %392 : vector<1x256xi1> to vector<1x256xi1>
    %394 = vector.broadcast %393 : vector<1x256xi1> to vector<4x256xi1>
    %395 = vector.broadcast %cst_159 : f32 to vector<4x256xf32>
    %396 = arith.select %394, %373, %395 : vector<4x256xi1>, vector<4x256xf32>
    %397 = vector.extract_strided_slice %281 {offsets = [3, 0, 0], sizes = [1, 8, 4], strides = [1, 1, 1]} : vector<9x8x4xf32> to vector<1x8x4xf32>
    %398 = vector.shape_cast %397 : vector<1x8x4xf32> to vector<8x4xf32>
    %cst_160 = arith.constant dense<0.000000e+00> : vector<8x256xf32>
    %399 = tpu.matmul %398, %396, %cst_160 {dimension_numbers = #tpu.dot_dimension_numbers<[1], [0], [0], [1], [0, 0, 1, 1], [], []>} : vector<8x4xf32>, vector<4x256xf32>, vector<8x256xf32> -> vector<8x256xf32>
    %400 = arith.addf %372, %399 : vector<8x256xf32>
    %c0_161 = arith.constant 0 : index
    %c128_162 = arith.constant 128 : index
    %401 = vector.load %arg15[%c0_161, %c128_162] : memref<4x512xf32, #tpu.memory_space<vmem>>, vector<4x256xf32>
    %c0_i32_163 = arith.constant 0 : i32
    %402 = vector.broadcast %c0_i32_163 : i32 to vector<1x256xi32>
    %403 = arith.addi %285, %402 : vector<1x256xi32>
    %c0_i32_164 = arith.constant 0 : i32
    %404 = vector.broadcast %c0_i32_164 : i32 to vector<1x256xi32>
    %405 = arith.cmpi sge, %403, %404 : vector<1x256xi32>
    %c0_i32_165 = arith.constant 0 : i32
    %406 = vector.broadcast %c0_i32_165 : i32 to vector<1x256xi32>
    %407 = arith.addi %285, %406 : vector<1x256xi32>
    %c16_i32_166 = arith.constant 16 : i32
    %408 = vector.broadcast %c16_i32_166 : i32 to vector<1x256xi32>
    %409 = arith.cmpi slt, %407, %408 : vector<1x256xi32>
    %410 = arith.andi %405, %409 : vector<1x256xi1>
    %c0_i32_167 = arith.constant 0 : i32
    %411 = vector.broadcast %c0_i32_167 : i32 to vector<1x256xi32>
    %412 = arith.addi %287, %411 : vector<1x256xi32>
    %c0_i32_168 = arith.constant 0 : i32
    %413 = vector.broadcast %c0_i32_168 : i32 to vector<1x256xi32>
    %414 = arith.cmpi sge, %412, %413 : vector<1x256xi32>
    %415 = arith.andi %410, %414 : vector<1x256xi1>
    %c0_i32_169 = arith.constant 0 : i32
    %416 = vector.broadcast %c0_i32_169 : i32 to vector<1x256xi32>
    %417 = arith.addi %287, %416 : vector<1x256xi32>
    %c16_i32_170 = arith.constant 16 : i32
    %418 = vector.broadcast %c16_i32_170 : i32 to vector<1x256xi32>
    %419 = arith.cmpi slt, %417, %418 : vector<1x256xi32>
    %420 = arith.andi %415, %419 : vector<1x256xi1>
    %cst_171 = arith.constant 0.000000e+00 : f32
    %421 = vector.shape_cast %420 : vector<1x256xi1> to vector<1x256xi1>
    %422 = vector.broadcast %421 : vector<1x256xi1> to vector<4x256xi1>
    %423 = vector.broadcast %cst_171 : f32 to vector<4x256xf32>
    %424 = arith.select %422, %401, %423 : vector<4x256xi1>, vector<4x256xf32>
    %425 = vector.extract_strided_slice %281 {offsets = [4, 0, 0], sizes = [1, 8, 4], strides = [1, 1, 1]} : vector<9x8x4xf32> to vector<1x8x4xf32>
    %426 = vector.shape_cast %425 : vector<1x8x4xf32> to vector<8x4xf32>
    %cst_172 = arith.constant dense<0.000000e+00> : vector<8x256xf32>
    %427 = tpu.matmul %426, %424, %cst_172 {dimension_numbers = #tpu.dot_dimension_numbers<[1], [0], [0], [1], [0, 0, 1, 1], [], []>} : vector<8x4xf32>, vector<4x256xf32>, vector<8x256xf32> -> vector<8x256xf32>
    %428 = arith.addf %400, %427 : vector<8x256xf32>
    %c0_173 = arith.constant 0 : index
    %c129_174 = arith.constant 129 : index
    %429 = vector.load %arg15[%c0_173, %c129_174] : memref<4x512xf32, #tpu.memory_space<vmem>>, vector<4x256xf32>
    %c0_i32_175 = arith.constant 0 : i32
    %430 = vector.broadcast %c0_i32_175 : i32 to vector<1x256xi32>
    %431 = arith.addi %285, %430 : vector<1x256xi32>
    %c0_i32_176 = arith.constant 0 : i32
    %432 = vector.broadcast %c0_i32_176 : i32 to vector<1x256xi32>
    %433 = arith.cmpi sge, %431, %432 : vector<1x256xi32>
    %c0_i32_177 = arith.constant 0 : i32
    %434 = vector.broadcast %c0_i32_177 : i32 to vector<1x256xi32>
    %435 = arith.addi %285, %434 : vector<1x256xi32>
    %c16_i32_178 = arith.constant 16 : i32
    %436 = vector.broadcast %c16_i32_178 : i32 to vector<1x256xi32>
    %437 = arith.cmpi slt, %435, %436 : vector<1x256xi32>
    %438 = arith.andi %433, %437 : vector<1x256xi1>
    %c1_i32_179 = arith.constant 1 : i32
    %439 = vector.broadcast %c1_i32_179 : i32 to vector<1x256xi32>
    %440 = arith.addi %287, %439 : vector<1x256xi32>
    %c0_i32_180 = arith.constant 0 : i32
    %441 = vector.broadcast %c0_i32_180 : i32 to vector<1x256xi32>
    %442 = arith.cmpi sge, %440, %441 : vector<1x256xi32>
    %443 = arith.andi %438, %442 : vector<1x256xi1>
    %c1_i32_181 = arith.constant 1 : i32
    %444 = vector.broadcast %c1_i32_181 : i32 to vector<1x256xi32>
    %445 = arith.addi %287, %444 : vector<1x256xi32>
    %c16_i32_182 = arith.constant 16 : i32
    %446 = vector.broadcast %c16_i32_182 : i32 to vector<1x256xi32>
    %447 = arith.cmpi slt, %445, %446 : vector<1x256xi32>
    %448 = arith.andi %443, %447 : vector<1x256xi1>
    %cst_183 = arith.constant 0.000000e+00 : f32
    %449 = vector.shape_cast %448 : vector<1x256xi1> to vector<1x256xi1>
    %450 = vector.broadcast %449 : vector<1x256xi1> to vector<4x256xi1>
    %451 = vector.broadcast %cst_183 : f32 to vector<4x256xf32>
    %452 = arith.select %450, %429, %451 : vector<4x256xi1>, vector<4x256xf32>
    %453 = vector.extract_strided_slice %281 {offsets = [5, 0, 0], sizes = [1, 8, 4], strides = [1, 1, 1]} : vector<9x8x4xf32> to vector<1x8x4xf32>
    %454 = vector.shape_cast %453 : vector<1x8x4xf32> to vector<8x4xf32>
    %cst_184 = arith.constant dense<0.000000e+00> : vector<8x256xf32>
    %455 = tpu.matmul %454, %452, %cst_184 {dimension_numbers = #tpu.dot_dimension_numbers<[1], [0], [0], [1], [0, 0, 1, 1], [], []>} : vector<8x4xf32>, vector<4x256xf32>, vector<8x256xf32> -> vector<8x256xf32>
    %456 = arith.addf %428, %455 : vector<8x256xf32>
    %c0_185 = arith.constant 0 : index
    %c143 = arith.constant 143 : index
    %457 = vector.load %arg15[%c0_185, %c143] : memref<4x512xf32, #tpu.memory_space<vmem>>, vector<4x256xf32>
    %c1_i32_186 = arith.constant 1 : i32
    %458 = vector.broadcast %c1_i32_186 : i32 to vector<1x256xi32>
    %459 = arith.addi %285, %458 : vector<1x256xi32>
    %c0_i32_187 = arith.constant 0 : i32
    %460 = vector.broadcast %c0_i32_187 : i32 to vector<1x256xi32>
    %461 = arith.cmpi sge, %459, %460 : vector<1x256xi32>
    %c1_i32_188 = arith.constant 1 : i32
    %462 = vector.broadcast %c1_i32_188 : i32 to vector<1x256xi32>
    %463 = arith.addi %285, %462 : vector<1x256xi32>
    %c16_i32_189 = arith.constant 16 : i32
    %464 = vector.broadcast %c16_i32_189 : i32 to vector<1x256xi32>
    %465 = arith.cmpi slt, %463, %464 : vector<1x256xi32>
    %466 = arith.andi %461, %465 : vector<1x256xi1>
    %c-1_i32_190 = arith.constant -1 : i32
    %467 = vector.broadcast %c-1_i32_190 : i32 to vector<1x256xi32>
    %468 = arith.addi %287, %467 : vector<1x256xi32>
    %c0_i32_191 = arith.constant 0 : i32
    %469 = vector.broadcast %c0_i32_191 : i32 to vector<1x256xi32>
    %470 = arith.cmpi sge, %468, %469 : vector<1x256xi32>
    %471 = arith.andi %466, %470 : vector<1x256xi1>
    %c-1_i32_192 = arith.constant -1 : i32
    %472 = vector.broadcast %c-1_i32_192 : i32 to vector<1x256xi32>
    %473 = arith.addi %287, %472 : vector<1x256xi32>
    %c16_i32_193 = arith.constant 16 : i32
    %474 = vector.broadcast %c16_i32_193 : i32 to vector<1x256xi32>
    %475 = arith.cmpi slt, %473, %474 : vector<1x256xi32>
    %476 = arith.andi %471, %475 : vector<1x256xi1>
    %cst_194 = arith.constant 0.000000e+00 : f32
    %477 = vector.shape_cast %476 : vector<1x256xi1> to vector<1x256xi1>
    %478 = vector.broadcast %477 : vector<1x256xi1> to vector<4x256xi1>
    %479 = vector.broadcast %cst_194 : f32 to vector<4x256xf32>
    %480 = arith.select %478, %457, %479 : vector<4x256xi1>, vector<4x256xf32>
    %481 = vector.extract_strided_slice %281 {offsets = [6, 0, 0], sizes = [1, 8, 4], strides = [1, 1, 1]} : vector<9x8x4xf32> to vector<1x8x4xf32>
    %482 = vector.shape_cast %481 : vector<1x8x4xf32> to vector<8x4xf32>
    %cst_195 = arith.constant dense<0.000000e+00> : vector<8x256xf32>
    %483 = tpu.matmul %482, %480, %cst_195 {dimension_numbers = #tpu.dot_dimension_numbers<[1], [0], [0], [1], [0, 0, 1, 1], [], []>} : vector<8x4xf32>, vector<4x256xf32>, vector<8x256xf32> -> vector<8x256xf32>
    %484 = arith.addf %456, %483 : vector<8x256xf32>
    %c0_196 = arith.constant 0 : index
    %c144 = arith.constant 144 : index
    %485 = vector.load %arg15[%c0_196, %c144] : memref<4x512xf32, #tpu.memory_space<vmem>>, vector<4x256xf32>
    %c1_i32_197 = arith.constant 1 : i32
    %486 = vector.broadcast %c1_i32_197 : i32 to vector<1x256xi32>
    %487 = arith.addi %285, %486 : vector<1x256xi32>
    %c0_i32_198 = arith.constant 0 : i32
    %488 = vector.broadcast %c0_i32_198 : i32 to vector<1x256xi32>
    %489 = arith.cmpi sge, %487, %488 : vector<1x256xi32>
    %c1_i32_199 = arith.constant 1 : i32
    %490 = vector.broadcast %c1_i32_199 : i32 to vector<1x256xi32>
    %491 = arith.addi %285, %490 : vector<1x256xi32>
    %c16_i32_200 = arith.constant 16 : i32
    %492 = vector.broadcast %c16_i32_200 : i32 to vector<1x256xi32>
    %493 = arith.cmpi slt, %491, %492 : vector<1x256xi32>
    %494 = arith.andi %489, %493 : vector<1x256xi1>
    %c0_i32_201 = arith.constant 0 : i32
    %495 = vector.broadcast %c0_i32_201 : i32 to vector<1x256xi32>
    %496 = arith.addi %287, %495 : vector<1x256xi32>
    %c0_i32_202 = arith.constant 0 : i32
    %497 = vector.broadcast %c0_i32_202 : i32 to vector<1x256xi32>
    %498 = arith.cmpi sge, %496, %497 : vector<1x256xi32>
    %499 = arith.andi %494, %498 : vector<1x256xi1>
    %c0_i32_203 = arith.constant 0 : i32
    %500 = vector.broadcast %c0_i32_203 : i32 to vector<1x256xi32>
    %501 = arith.addi %287, %500 : vector<1x256xi32>
    %c16_i32_204 = arith.constant 16 : i32
    %502 = vector.broadcast %c16_i32_204 : i32 to vector<1x256xi32>
    %503 = arith.cmpi slt, %501, %502 : vector<1x256xi32>
    %504 = arith.andi %499, %503 : vector<1x256xi1>
    %cst_205 = arith.constant 0.000000e+00 : f32
    %505 = vector.shape_cast %504 : vector<1x256xi1> to vector<1x256xi1>
    %506 = vector.broadcast %505 : vector<1x256xi1> to vector<4x256xi1>
    %507 = vector.broadcast %cst_205 : f32 to vector<4x256xf32>
    %508 = arith.select %506, %485, %507 : vector<4x256xi1>, vector<4x256xf32>
    %509 = vector.extract_strided_slice %281 {offsets = [7, 0, 0], sizes = [1, 8, 4], strides = [1, 1, 1]} : vector<9x8x4xf32> to vector<1x8x4xf32>
    %510 = vector.shape_cast %509 : vector<1x8x4xf32> to vector<8x4xf32>
    %cst_206 = arith.constant dense<0.000000e+00> : vector<8x256xf32>
    %511 = tpu.matmul %510, %508, %cst_206 {dimension_numbers = #tpu.dot_dimension_numbers<[1], [0], [0], [1], [0, 0, 1, 1], [], []>} : vector<8x4xf32>, vector<4x256xf32>, vector<8x256xf32> -> vector<8x256xf32>
    %512 = arith.addf %484, %511 : vector<8x256xf32>
    %c0_207 = arith.constant 0 : index
    %c145 = arith.constant 145 : index
    %513 = vector.load %arg15[%c0_207, %c145] : memref<4x512xf32, #tpu.memory_space<vmem>>, vector<4x256xf32>
    %c1_i32_208 = arith.constant 1 : i32
    %514 = vector.broadcast %c1_i32_208 : i32 to vector<1x256xi32>
    %515 = arith.addi %285, %514 : vector<1x256xi32>
    %c0_i32_209 = arith.constant 0 : i32
    %516 = vector.broadcast %c0_i32_209 : i32 to vector<1x256xi32>
    %517 = arith.cmpi sge, %515, %516 : vector<1x256xi32>
    %c1_i32_210 = arith.constant 1 : i32
    %518 = vector.broadcast %c1_i32_210 : i32 to vector<1x256xi32>
    %519 = arith.addi %285, %518 : vector<1x256xi32>
    %c16_i32_211 = arith.constant 16 : i32
    %520 = vector.broadcast %c16_i32_211 : i32 to vector<1x256xi32>
    %521 = arith.cmpi slt, %519, %520 : vector<1x256xi32>
    %522 = arith.andi %517, %521 : vector<1x256xi1>
    %c1_i32_212 = arith.constant 1 : i32
    %523 = vector.broadcast %c1_i32_212 : i32 to vector<1x256xi32>
    %524 = arith.addi %287, %523 : vector<1x256xi32>
    %c0_i32_213 = arith.constant 0 : i32
    %525 = vector.broadcast %c0_i32_213 : i32 to vector<1x256xi32>
    %526 = arith.cmpi sge, %524, %525 : vector<1x256xi32>
    %527 = arith.andi %522, %526 : vector<1x256xi1>
    %c1_i32_214 = arith.constant 1 : i32
    %528 = vector.broadcast %c1_i32_214 : i32 to vector<1x256xi32>
    %529 = arith.addi %287, %528 : vector<1x256xi32>
    %c16_i32_215 = arith.constant 16 : i32
    %530 = vector.broadcast %c16_i32_215 : i32 to vector<1x256xi32>
    %531 = arith.cmpi slt, %529, %530 : vector<1x256xi32>
    %532 = arith.andi %527, %531 : vector<1x256xi1>
    %cst_216 = arith.constant 0.000000e+00 : f32
    %533 = vector.shape_cast %532 : vector<1x256xi1> to vector<1x256xi1>
    %534 = vector.broadcast %533 : vector<1x256xi1> to vector<4x256xi1>
    %535 = vector.broadcast %cst_216 : f32 to vector<4x256xf32>
    %536 = arith.select %534, %513, %535 : vector<4x256xi1>, vector<4x256xf32>
    %537 = vector.extract_strided_slice %281 {offsets = [8, 0, 0], sizes = [1, 8, 4], strides = [1, 1, 1]} : vector<9x8x4xf32> to vector<1x8x4xf32>
    %538 = vector.shape_cast %537 : vector<1x8x4xf32> to vector<8x4xf32>
    %cst_217 = arith.constant dense<0.000000e+00> : vector<8x256xf32>
    %539 = tpu.matmul %538, %536, %cst_217 {dimension_numbers = #tpu.dot_dimension_numbers<[1], [0], [0], [1], [0, 0, 1, 1], [], []>} : vector<8x4xf32>, vector<4x256xf32>, vector<8x256xf32> -> vector<8x256xf32>
    %540 = arith.addf %512, %539 : vector<8x256xf32>
    %c0_218 = arith.constant 0 : index
    %c0_219 = arith.constant 0 : index
    %541 = vector.load %arg7[%c0_218, %c0_219] : memref<8x1xf32, #tpu.memory_space<vmem>>, vector<8x1xf32>
    %542 = vector.broadcast %541 : vector<8x1xf32> to vector<8x256xf32>
    %543 = arith.mulf %540, %542 : vector<8x256xf32>
    %c0_220 = arith.constant 0 : index
    %c0_221 = arith.constant 0 : index
    %544 = vector.load %arg8[%c0_220, %c0_221] : memref<8x1xf32, #tpu.memory_space<vmem>>, vector<8x1xf32>
    %545 = vector.broadcast %544 : vector<8x1xf32> to vector<8x256xf32>
    %546 = arith.addf %543, %545 : vector<8x256xf32>
    %cst_222 = arith.constant 0.000000e+00 : f32
    %547 = vector.broadcast %cst_222 : f32 to vector<8x256xf32>
    %548 = arith.maximumf %546, %547 : vector<8x256xf32>
    %c0_223 = arith.constant 0 : index
    %c0_224 = arith.constant 0 : index
    %549 = vector.load %arg9[%c0_223, %c0_224] : memref<256x64xf32, #tpu.memory_space<vmem>>, vector<256x64xf32>
    %cst_225 = arith.constant 0.000000e+00 : f32
    %550 = vector.broadcast %cst_225 : f32 to vector<8x128xf32>
    %c0_226 = arith.constant 0 : index
    %c384 = arith.constant 384 : index
    %551 = vector.load %arg16[%c0_226, %c384] : memref<8x512xf32, #tpu.memory_space<vmem>>, vector<8x128xf32>
    tpu.vector_store %arg16[%c0_226, %c384], %550 {strides = array<i32>} : memref<8x512xf32, #tpu.memory_space<vmem>>, vector<8x128xf32>,
    %c0_227 = arith.constant 0 : index
    %c128_228 = arith.constant 128 : index
    %552 = vector.load %arg16[%c0_227, %c128_228] : memref<8x512xf32, #tpu.memory_space<vmem>>, vector<8x256xf32>
    tpu.vector_store %arg16[%c0_227, %c128_228], %548 {strides = array<i32>} : memref<8x512xf32, #tpu.memory_space<vmem>>, vector<8x256xf32>,
    %c0_229 = arith.constant 0 : index
    %c129_230 = arith.constant 129 : index
    %553 = vector.load %arg16[%c0_229, %c129_230] : memref<8x512xf32, #tpu.memory_space<vmem>>, vector<8x256xf32>
    %c0_231 = arith.constant 0 : index
    %c144_232 = arith.constant 144 : index
    %554 = vector.load %arg16[%c0_231, %c144_232] : memref<8x512xf32, #tpu.memory_space<vmem>>, vector<8x256xf32>
    %c0_233 = arith.constant 0 : index
    %c145_234 = arith.constant 145 : index
    %555 = vector.load %arg16[%c0_233, %c145_234] : memref<8x512xf32, #tpu.memory_space<vmem>>, vector<8x256xf32>
    %556 = arith.maximumf %548, %553 : vector<8x256xf32>
    %557 = arith.maximumf %554, %555 : vector<8x256xf32>
    %558 = arith.maximumf %556, %557 : vector<8x256xf32>
    %cst_235 = arith.constant dense<0.000000e+00> : vector<8x64xf32>
    %559 = tpu.matmul %558, %549, %cst_235 {dimension_numbers = #tpu.dot_dimension_numbers<[1], [0], [0], [1], [0, 0, 1, 1], [], []>} : vector<8x256xf32>, vector<256x64xf32>, vector<8x64xf32> -> vector<8x64xf32>
    %c0_236 = arith.constant 0 : index
    %c0_237 = arith.constant 0 : index
    %560 = vector.load %arg11[%c0_236, %c0_237] : memref<1x10xf32, #tpu.memory_space<vmem>>, vector<1x10xf32>
    %c0_238 = arith.constant 0 : index
    %c0_239 = arith.constant 0 : index
    %c0_240 = arith.constant 0 : index
    %561 = vector.load %arg10[%c0_238, %c0_239, %c0_240] : memref<8x64x10xf32, #tpu.memory_space<vmem>>, vector<8x64x10xf32>
    %562 = vector.extract_strided_slice %559 {offsets = [0, 0], sizes = [1, 64], strides = [1, 1]} : vector<8x64xf32> to vector<1x64xf32>
    %563 = vector.extract_strided_slice %561 {offsets = [0, 0, 0], sizes = [1, 64, 10], strides = [1, 1, 1]} : vector<8x64x10xf32> to vector<1x64x10xf32>
    %564 = vector.shape_cast %563 : vector<1x64x10xf32> to vector<64x10xf32>
    %cst_241 = arith.constant dense<0.000000e+00> : vector<1x10xf32>
    %565 = tpu.matmul %562, %564, %cst_241 {dimension_numbers = #tpu.dot_dimension_numbers<[1], [0], [0], [1], [0, 0, 1, 1], [], []>} : vector<1x64xf32>, vector<64x10xf32>, vector<1x10xf32> -> vector<1x10xf32>
    %566 = arith.addf %560, %565 : vector<1x10xf32>
    %567 = vector.extract_strided_slice %559 {offsets = [1, 0], sizes = [1, 64], strides = [1, 1]} : vector<8x64xf32> to vector<1x64xf32>
    %568 = vector.extract_strided_slice %561 {offsets = [1, 0, 0], sizes = [1, 64, 10], strides = [1, 1, 1]} : vector<8x64x10xf32> to vector<1x64x10xf32>
    %569 = vector.shape_cast %568 : vector<1x64x10xf32> to vector<64x10xf32>
    %cst_242 = arith.constant dense<0.000000e+00> : vector<1x10xf32>
    %570 = tpu.matmul %567, %569, %cst_242 {dimension_numbers = #tpu.dot_dimension_numbers<[1], [0], [0], [1], [0, 0, 1, 1], [], []>} : vector<1x64xf32>, vector<64x10xf32>, vector<1x10xf32> -> vector<1x10xf32>
    %571 = arith.addf %566, %570 : vector<1x10xf32>
    %572 = vector.extract_strided_slice %559 {offsets = [2, 0], sizes = [1, 64], strides = [1, 1]} : vector<8x64xf32> to vector<1x64xf32>
    %573 = vector.extract_strided_slice %561 {offsets = [2, 0, 0], sizes = [1, 64, 10], strides = [1, 1, 1]} : vector<8x64x10xf32> to vector<1x64x10xf32>
    %574 = vector.shape_cast %573 : vector<1x64x10xf32> to vector<64x10xf32>
    %cst_243 = arith.constant dense<0.000000e+00> : vector<1x10xf32>
    %575 = tpu.matmul %572, %574, %cst_243 {dimension_numbers = #tpu.dot_dimension_numbers<[1], [0], [0], [1], [0, 0, 1, 1], [], []>} : vector<1x64xf32>, vector<64x10xf32>, vector<1x10xf32> -> vector<1x10xf32>
    %576 = arith.addf %571, %575 : vector<1x10xf32>
    %577 = vector.extract_strided_slice %559 {offsets = [3, 0], sizes = [1, 64], strides = [1, 1]} : vector<8x64xf32> to vector<1x64xf32>
    %578 = vector.extract_strided_slice %561 {offsets = [3, 0, 0], sizes = [1, 64, 10], strides = [1, 1, 1]} : vector<8x64x10xf32> to vector<1x64x10xf32>
    %579 = vector.shape_cast %578 : vector<1x64x10xf32> to vector<64x10xf32>
    %cst_244 = arith.constant dense<0.000000e+00> : vector<1x10xf32>
    %580 = tpu.matmul %577, %579, %cst_244 {dimension_numbers = #tpu.dot_dimension_numbers<[1], [0], [0], [1], [0, 0, 1, 1], [], []>} : vector<1x64xf32>, vector<64x10xf32>, vector<1x10xf32> -> vector<1x10xf32>
    %581 = arith.addf %576, %580 : vector<1x10xf32>
    %582 = vector.extract_strided_slice %559 {offsets = [4, 0], sizes = [1, 64], strides = [1, 1]} : vector<8x64xf32> to vector<1x64xf32>
    %583 = vector.extract_strided_slice %561 {offsets = [4, 0, 0], sizes = [1, 64, 10], strides = [1, 1, 1]} : vector<8x64x10xf32> to vector<1x64x10xf32>
    %584 = vector.shape_cast %583 : vector<1x64x10xf32> to vector<64x10xf32>
    %cst_245 = arith.constant dense<0.000000e+00> : vector<1x10xf32>
    %585 = tpu.matmul %582, %584, %cst_245 {dimension_numbers = #tpu.dot_dimension_numbers<[1], [0], [0], [1], [0, 0, 1, 1], [], []>} : vector<1x64xf32>, vector<64x10xf32>, vector<1x10xf32> -> vector<1x10xf32>
    %586 = arith.addf %581, %585 : vector<1x10xf32>
    %587 = vector.extract_strided_slice %559 {offsets = [5, 0], sizes = [1, 64], strides = [1, 1]} : vector<8x64xf32> to vector<1x64xf32>
    %588 = vector.extract_strided_slice %561 {offsets = [5, 0, 0], sizes = [1, 64, 10], strides = [1, 1, 1]} : vector<8x64x10xf32> to vector<1x64x10xf32>
    %589 = vector.shape_cast %588 : vector<1x64x10xf32> to vector<64x10xf32>
    %cst_246 = arith.constant dense<0.000000e+00> : vector<1x10xf32>
    %590 = tpu.matmul %587, %589, %cst_246 {dimension_numbers = #tpu.dot_dimension_numbers<[1], [0], [0], [1], [0, 0, 1, 1], [], []>} : vector<1x64xf32>, vector<64x10xf32>, vector<1x10xf32> -> vector<1x10xf32>
    %591 = arith.addf %586, %590 : vector<1x10xf32>
    %592 = vector.extract_strided_slice %559 {offsets = [6, 0], sizes = [1, 64], strides = [1, 1]} : vector<8x64xf32> to vector<1x64xf32>
    %593 = vector.extract_strided_slice %561 {offsets = [6, 0, 0], sizes = [1, 64, 10], strides = [1, 1, 1]} : vector<8x64x10xf32> to vector<1x64x10xf32>
    %594 = vector.shape_cast %593 : vector<1x64x10xf32> to vector<64x10xf32>
    %cst_247 = arith.constant dense<0.000000e+00> : vector<1x10xf32>
    %595 = tpu.matmul %592, %594, %cst_247 {dimension_numbers = #tpu.dot_dimension_numbers<[1], [0], [0], [1], [0, 0, 1, 1], [], []>} : vector<1x64xf32>, vector<64x10xf32>, vector<1x10xf32> -> vector<1x10xf32>
    %596 = arith.addf %591, %595 : vector<1x10xf32>
    %597 = vector.extract_strided_slice %559 {offsets = [7, 0], sizes = [1, 64], strides = [1, 1]} : vector<8x64xf32> to vector<1x64xf32>
    %598 = vector.extract_strided_slice %561 {offsets = [7, 0, 0], sizes = [1, 64, 10], strides = [1, 1, 1]} : vector<8x64x10xf32> to vector<1x64x10xf32>
    %599 = vector.shape_cast %598 : vector<1x64x10xf32> to vector<64x10xf32>
    %cst_248 = arith.constant dense<0.000000e+00> : vector<1x10xf32>
    %600 = tpu.matmul %597, %599, %cst_248 {dimension_numbers = #tpu.dot_dimension_numbers<[1], [0], [0], [1], [0, 0, 1, 1], [], []>} : vector<1x64xf32>, vector<64x10xf32>, vector<1x10xf32> -> vector<1x10xf32>
    %601 = arith.addf %596, %600 : vector<1x10xf32>
    %c0_249 = arith.constant 0 : index
    %c0_250 = arith.constant 0 : index
    %c0_251 = arith.constant 0 : index
    %602 = vector.load %arg12[%c0_249, %c0_250, %c0_251] : memref<1x1x10xf32, #tpu.memory_space<vmem>>, vector<1x1x10xf32>
    %603 = vector.shape_cast %602 : vector<1x1x10xf32> to vector<1x10xf32>
    %604 = vector.shape_cast %601 : vector<1x10xf32> to vector<1x1x10xf32>
    tpu.vector_store %arg12[%c0_249, %c0_250, %c0_251], %604 {strides = array<i32>} : memref<1x1x10xf32, #tpu.memory_space<vmem>>, vector<1x1x10xf32>,
    return
  }
  func.func @transform_0(%arg0: i32) -> (i32, i32, i32) {
    %c0_i32 = arith.constant 0 : i32
    %c0_i32_0 = arith.constant 0 : i32
    %c0_i32_1 = arith.constant 0 : i32
    return %arg0, %c0_i32, %c0_i32_0 : i32, i32, i32
  }
  func.func @transform_1(%arg0: i32) -> (i32, i32, i32) {
    %c0_i32 = arith.constant 0 : i32
    %c0_i32_0 = arith.constant 0 : i32
    %c0_i32_1 = arith.constant 0 : i32
    %c0_i32_2 = arith.constant 0 : i32
    return %c0_i32, %c0_i32_0, %c0_i32_1 : i32, i32, i32
  }
  func.func @transform_2(%arg0: i32) -> (i32, i32) {
    %c0_i32 = arith.constant 0 : i32
    %c0_i32_0 = arith.constant 0 : i32
    %c0_i32_1 = arith.constant 0 : i32
    return %c0_i32, %c0_i32_0 : i32, i32
  }
  func.func @transform_3(%arg0: i32) -> (i32, i32) {
    %c0_i32 = arith.constant 0 : i32
    %c0_i32_0 = arith.constant 0 : i32
    %c0_i32_1 = arith.constant 0 : i32
    return %c0_i32, %c0_i32_0 : i32, i32
  }
  func.func @transform_4(%arg0: i32) -> (i32, i32) {
    %c0_i32 = arith.constant 0 : i32
    %c0_i32_0 = arith.constant 0 : i32
    %c0_i32_1 = arith.constant 0 : i32
    return %c0_i32, %c0_i32_0 : i32, i32
  }
  func.func @transform_5(%arg0: i32) -> (i32, i32, i32) {
    %c0_i32 = arith.constant 0 : i32
    %c0_i32_0 = arith.constant 0 : i32
    %c0_i32_1 = arith.constant 0 : i32
    %c0_i32_2 = arith.constant 0 : i32
    return %c0_i32, %c0_i32_0, %c0_i32_1 : i32, i32, i32
  }
  func.func @transform_6(%arg0: i32) -> (i32, i32) {
    %c0_i32 = arith.constant 0 : i32
    %c0_i32_0 = arith.constant 0 : i32
    %c0_i32_1 = arith.constant 0 : i32
    return %c0_i32, %c0_i32_0 : i32, i32
  }
  func.func @transform_7(%arg0: i32) -> (i32, i32) {
    %c0_i32 = arith.constant 0 : i32
    %c0_i32_0 = arith.constant 0 : i32
    %c0_i32_1 = arith.constant 0 : i32
    return %c0_i32, %c0_i32_0 : i32, i32
  }
  func.func @transform_8(%arg0: i32) -> (i32, i32) {
    %c0_i32 = arith.constant 0 : i32
    %c0_i32_0 = arith.constant 0 : i32
    %c0_i32_1 = arith.constant 0 : i32
    return %c0_i32, %c0_i32_0 : i32, i32
  }
  func.func @transform_9(%arg0: i32) -> (i32, i32, i32) {
    %c0_i32 = arith.constant 0 : i32
    %c0_i32_0 = arith.constant 0 : i32
    %c0_i32_1 = arith.constant 0 : i32
    %c0_i32_2 = arith.constant 0 : i32
    return %c0_i32, %c0_i32_0, %c0_i32_1 : i32, i32, i32
  }
  func.func @transform_10(%arg0: i32) -> (i32, i32) {
    %c0_i32 = arith.constant 0 : i32
    %c0_i32_0 = arith.constant 0 : i32
    %c0_i32_1 = arith.constant 0 : i32
    return %c0_i32, %c0_i32_0 : i32, i32
  }
  func.func @transform_11(%arg0: i32) -> (i32, i32, i32) {
    %c0_i32 = arith.constant 0 : i32
    %c0_i32_0 = arith.constant 0 : i32
    %c0_i32_1 = arith.constant 0 : i32
    return %arg0, %c0_i32, %c0_i32_0 : i32, i32, i32
  }
}

</mosaic_0001>

<llo_original>
// kernel: cnn_classifier_forward.1
$region0: #{cnn_classifier_forward.1}
  #allocation0 [shape = 'u32[]', space=smem, size = 0x4, offset = 0x4, fixed_abs, tag = 'smem constant byte address 0x4 - core index']
  #allocation1 [shape = 'u32[72,128]{1,0:T(1,128)}', space=vmem, size = 0x9000, scoped, tag = 'internal scratch']
  #allocation2 [shape = 'f32[1,1280]{1,0:T(1,128)}', space=vmem, size = 0x1400, scoped, tag = 'scratch operand']
  #allocation3 [shape = 'f32[4,1280]{1,0:T(4,128)}', space=vmem, size = 0x5000, scoped, tag = 'scratch operand']
  #allocation4 [shape = 'f32[4,512]{1,0:T(4,128)}', space=vmem, size = 0x2000, scoped, tag = 'scratch operand']
  #allocation5 [shape = 'f32[8,512]{1,0:T(8,128)}', space=vmem, size = 0x4000, scoped, tag = 'scratch operand']
  %s0 = inlined_call_operand.vmem [shape: f32[2,1,1024], index: 0, kind: input, shape index: {}]
  %s1 = inlined_call_operand.vmem [shape: f32[9,4,1], index: 1, kind: input, shape index: {}]
  %s2 = inlined_call_operand.vmem [shape: f32[4,1], index: 2, kind: input, shape index: {}]
  %s3 = inlined_call_operand.vmem [shape: f32[4,1], index: 3, kind: input, shape index: {}]
  %s4 = inlined_call_operand.hbm [shape: f32[1024,256], index: 4, kind: input, shape index: {}]
  %s5 = inlined_call_operand.vmem [shape: f32[9,8,4], index: 5, kind: input, shape index: {}]
  %s6 = inlined_call_operand.vmem [shape: f32[8,1], index: 6, kind: input, shape index: {}]
  %s7 = inlined_call_operand.vmem [shape: f32[8,1], index: 7, kind: input, shape index: {}]
  %s8 = inlined_call_operand.vmem [shape: f32[256,64], index: 8, kind: input, shape index: {}]
  %s9 = inlined_call_operand.vmem [shape: f32[8,64,10], index: 9, kind: input, shape index: {}]
  %s10 = inlined_call_operand.vmem [shape: f32[1,10], index: 10, kind: input, shape index: {}]
  %s11 = inlined_call_operand.hbm [shape: f32[2,1,10], index: 11, kind: output, shape index: {}]
  %s12 = sld [smem:[#allocation0]]
  $region81: #{cnn_classifier_forward.1} parent=0
    _
  %s14 = ssub.s32 1, %s12
  %s15 = scalar_select 0, %s14, %s12
  $region1: #{cnn_classifier_forward.1} parent=0
    #allocation6 [shape = 'u8[1048576]{0}', space=vmem, size = 0x100000, scoped, tag = 'input window, operand 4, single buffered']
    #allocation7 [shape = 's32[2]{0}', space=sflag, size = 0x8, scoped, tag = 'scoped memory for cnn_classifier_forward.1']
    #allocation8 [shape = 's32[2]{0}', space=sflag, size = 0x8, scoped, tag = 'scoped memory for cnn_classifier_forward.1']
    #allocation9 [shape = 'u8[1024]{0}', space=vmem, size = 0x400, scoped, tag = 'output window, operand 0']
    %16 = vsyncpa [#allocation7], 0
    %17 = vsyncpa [#allocation8], 0
    %s18 = scalar_lea.sflag [#allocation8], 1
    %19 = vsyncpa %s18, 0
    loop: start=0, step=1, limit=4
    $region2: #{cnn_classifier_forward.1} parent=1 // loop_pre_header
      _
    $region3: #{cnn_classifier_forward.1} parent=1 // loop_header
      %s21 = sphi 0, %s25
      %p22 = scmp.ge.s32.totalorder %s21, 4
      %s31 = sphi 0, %s33
      %s34 = sphi 0, %s31
      %s35 = sphi 0, %s34
      %s51 = sphi 0, %s35
      %s55 = sphi 0, %s55
      %s57 = sphi 0, %s55
      %s58 = sphi 0, %s57
      %s72 = sphi 0, %s58
      %s76 = sphi 0, %s76
      %s78 = sphi 0, %s76
      %s79 = sphi 0, %s78
      %s93 = sphi 0, %s79
      %s97 = sphi 0, %s97
      %s99 = sphi 0, %s97
      %s100 = sphi 0, %s99
      %s114 = sphi 0, %s100
      %s118 = sphi 0, %s118
      %s120 = sphi 0, %s118
      %s121 = sphi 0, %s120
      %s135 = sphi 0, %s121
      %s139 = sphi 0, %s139
      %s141 = sphi 0, %s139
      %s142 = sphi 0, %s141
      %s156 = sphi 0, %s142
      %s160 = sphi 0, %s160
      %s162 = sphi 0, %s160
      %s163 = sphi 0, %s162
      %s177 = sphi 0, %s163
      %s181 = sphi 0, %s181
      %s183 = sphi 0, %s181
      %s184 = sphi 0, %s183
      %s198 = sphi 0, %s184
      %s202 = sphi 0, %s202
      %s204 = sphi 0, %s202
      %s205 = sphi 0, %s204
      %s219 = sphi 0, %s205
      %s223 = sphi 0, %s223
      %s225 = sphi 0, %s223
      %s226 = sphi 0, %s225
      %s240 = sphi 0, %s226
      %s244 = sphi 0, %s244
      %s246 = sphi 0, %s244
      %s247 = sphi 0, %s246
      %s261 = sphi 0, %s247
      %s267 = sphi 0, %s269
      %s270 = sphi 0, %s267
      %s271 = sphi 0, %s270
      %s287 = sphi 0, %s271
    $region4: #{cnn_classifier_forward.1} parent=1 // loop_header_branch
      %24 = sbr.rel (%p22) target = $region8
    $region5: #{cnn_classifier_forward.1} parent=1 // loop_body
      %s26 = ssub.s32 %s21, 1
      %s27 = ssub.s32 %s21, 2
      %s28 = sadd.s32 %s21, 1
      %s29 = ssub.s32 %s21, %s28
      %p30 = scmp.eq.s32.totalorder %s29, 0
      %s32 = sadd.s32 %s31, 1
      %s33 = scalar_select %p30, %s31, %s32
      %p36 = pneg %p30
      %p37 = scmp.eq.s32.totalorder %s21, 1
      %p38 = por %p36, %p37
      %p39 = scmp.ne.s32.totalorder %s31, %s34
      %p40 = scmp.eq.s32.totalorder %s21, 0
      %p41 = por %p39, %p40
      %p42 = scmp.ne.s32.totalorder %s31, %s34
      %p43 = scmp.eq.s32.totalorder %s26, 1
      %p44 = por %p42, %p43
      %p45 = scmp.ne.s32.totalorder %s34, %s35
      %p46 = scmp.eq.s32.totalorder %s26, 0
      %p47 = por %p45, %p46
      %p48 = scmp.ne.s32.totalorder %s34, %s35
      %p49 = scmp.eq.s32.totalorder %s27, 1
      %p50 = por %p48, %p49
      %p52 = scmp.ne.s32.totalorder %s35, %s51
      %p53 = scmp.eq.s32.totalorder %s27, 0
      %p54 = por %p52, %p53
      %s56 = sadd.s32 %s55, 1
      %p59 = scmp.eq.s32.totalorder %s21, 1
      %p60 = scmp.ne.s32.totalorder %s55, %s57
      %p61 = scmp.eq.s32.totalorder %s21, 0
      %p62 = por %p60, %p61
      %p63 = scmp.ne.s32.totalorder %s55, %s57
      %p64 = scmp.eq.s32.totalorder %s26, 1
      %p65 = por %p63, %p64
      %p66 = scmp.ne.s32.totalorder %s57, %s58
      %p67 = scmp.eq.s32.totalorder %s26, 0
      %p68 = por %p66, %p67
      %p69 = scmp.ne.s32.totalorder %s57, %s58
      %p70 = scmp.eq.s32.totalorder %s27, 1
      %p71 = por %p69, %p70
      %p73 = scmp.ne.s32.totalorder %s58, %s72
      %p74 = scmp.eq.s32.totalorder %s27, 0
      %p75 = por %p73, %p74
      %s77 = sadd.s32 %s76, 1
      %p80 = scmp.eq.s32.totalorder %s21, 1
      %p81 = scmp.ne.s32.totalorder %s76, %s78
      %p82 = scmp.eq.s32.totalorder %s21, 0
      %p83 = por %p81, %p82
      %p84 = scmp.ne.s32.totalorder %s76, %s78
      %p85 = scmp.eq.s32.totalorder %s26, 1
      %p86 = por %p84, %p85
      %p87 = scmp.ne.s32.totalorder %s78, %s79
      %p88 = scmp.eq.s32.totalorder %s26, 0
      %p89 = por %p87, %p88
      %p90 = scmp.ne.s32.totalorder %s78, %s79
      %p91 = scmp.eq.s32.totalorder %s27, 1
      %p92 = por %p90, %p91
      %p94 = scmp.ne.s32.totalorder %s79, %s93
      %p95 = scmp.eq.s32.totalorder %s27, 0
      %p96 = por %p94, %p95
      %s98 = sadd.s32 %s97, 1
      %p101 = scmp.eq.s32.totalorder %s21, 1
      %p102 = scmp.ne.s32.totalorder %s97, %s99
      %p103 = scmp.eq.s32.totalorder %s21, 0
      %p104 = por %p102, %p103
      %p105 = scmp.ne.s32.totalorder %s97, %s99
      %p106 = scmp.eq.s32.totalorder %s26, 1
      %p107 = por %p105, %p106
      %p108 = scmp.ne.s32.totalorder %s99, %s100
      %p109 = scmp.eq.s32.totalorder %s26, 0
      %p110 = por %p108, %p109
      %p111 = scmp.ne.s32.totalorder %s99, %s100
      %p112 = scmp.eq.s32.totalorder %s27, 1
      %p113 = por %p111, %p112
      %p115 = scmp.ne.s32.totalorder %s100, %s114
      %p116 = scmp.eq.s32.totalorder %s27, 0
      %p117 = por %p115, %p116
      %s119 = sadd.s32 %s118, 1
      %p122 = scmp.eq.s32.totalorder %s21, 1
      %p123 = scmp.ne.s32.totalorder %s118, %s120
      %p124 = scmp.eq.s32.totalorder %s21, 0
      %p125 = por %p123, %p124
      %p126 = scmp.ne.s32.totalorder %s118, %s120
      %p127 = scmp.eq.s32.totalorder %s26, 1
      %p128 = por %p126, %p127
      %p129 = scmp.ne.s32.totalorder %s120, %s121
      %p130 = scmp.eq.s32.totalorder %s26, 0
      %p131 = por %p129, %p130
      %p132 = scmp.ne.s32.totalorder %s120, %s121
      %p133 = scmp.eq.s32.totalorder %s27, 1
      %p134 = por %p132, %p133
      %p136 = scmp.ne.s32.totalorder %s121, %s135
      %p137 = scmp.eq.s32.totalorder %s27, 0
      %p138 = por %p136, %p137
      %s140 = sadd.s32 %s139, 1
      %p143 = scmp.eq.s32.totalorder %s21, 1
      %p144 = scmp.ne.s32.totalorder %s139, %s141
      %p145 = scmp.eq.s32.totalorder %s21, 0
      %p146 = por %p144, %p145
      %p147 = scmp.ne.s32.totalorder %s139, %s141
      %p148 = scmp.eq.s32.totalorder %s26, 1
      %p149 = por %p147, %p148
      %p150 = scmp.ne.s32.totalorder %s141, %s142
      %p151 = scmp.eq.s32.totalorder %s26, 0
      %p152 = por %p150, %p151
      %p153 = scmp.ne.s32.totalorder %s141, %s142
      %p154 = scmp.eq.s32.totalorder %s27, 1
      %p155 = por %p153, %p154
      %p157 = scmp.ne.s32.totalorder %s142, %s156
      %p158 = scmp.eq.s32.totalorder %s27, 0
      %p159 = por %p157, %p158
      %s161 = sadd.s32 %s160, 1
      %p164 = scmp.eq.s32.totalorder %s21, 1
      %p165 = scmp.ne.s32.totalorder %s160, %s162
      %p166 = scmp.eq.s32.totalorder %s21, 0
      %p167 = por %p165, %p166
      %p168 = scmp.ne.s32.totalorder %s160, %s162
      %p169 = scmp.eq.s32.totalorder %s26, 1
      %p170 = por %p168, %p169
      %p171 = scmp.ne.s32.totalorder %s162, %s163
      %p172 = scmp.eq.s32.totalorder %s26, 0
      %p173 = por %p171, %p172
      %p174 = scmp.ne.s32.totalorder %s162, %s163
      %p175 = scmp.eq.s32.totalorder %s27, 1
      %p176 = por %p174, %p175
      %p178 = scmp.ne.s32.totalorder %s163, %s177
      %p179 = scmp.eq.s32.totalorder %s27, 0
      %p180 = por %p178, %p179
      %s182 = sadd.s32 %s181, 1
      %p185 = scmp.eq.s32.totalorder %s21, 1
      %p186 = scmp.ne.s32.totalorder %s181, %s183
      %p187 = scmp.eq.s32.totalorder %s21, 0
      %p188 = por %p186, %p187
      %p189 = scmp.ne.s32.totalorder %s181, %s183
      %p190 = scmp.eq.s32.totalorder %s26, 1
      %p191 = por %p189, %p190
      %p192 = scmp.ne.s32.totalorder %s183, %s184
      %p193 = scmp.eq.s32.totalorder %s26, 0
      %p194 = por %p192, %p193
      %p195 = scmp.ne.s32.totalorder %s183, %s184
      %p196 = scmp.eq.s32.totalorder %s27, 1
      %p197 = por %p195, %p196
      %p199 = scmp.ne.s32.totalorder %s184, %s198
      %p200 = scmp.eq.s32.totalorder %s27, 0
      %p201 = por %p199, %p200
      %s203 = sadd.s32 %s202, 1
      %p206 = scmp.eq.s32.totalorder %s21, 1
      %p207 = scmp.ne.s32.totalorder %s202, %s204
      %p208 = scmp.eq.s32.totalorder %s21, 0
      %p209 = por %p207, %p208
      %p210 = scmp.ne.s32.totalorder %s202, %s204
      %p211 = scmp.eq.s32.totalorder %s26, 1
      %p212 = por %p210, %p211
      %p213 = scmp.ne.s32.totalorder %s204, %s205
      %p214 = scmp.eq.s32.totalorder %s26, 0
      %p215 = por %p213, %p214
      %p216 = scmp.ne.s32.totalorder %s204, %s205
      %p217 = scmp.eq.s32.totalorder %s27, 1
      %p218 = por %p216, %p217
      %p220 = scmp.ne.s32.totalorder %s205, %s219
      %p221 = scmp.eq.s32.totalorder %s27, 0
      %p222 = por %p220, %p221
      %s224 = sadd.s32 %s223, 1
      %p227 = scmp.eq.s32.totalorder %s21, 1
      %p228 = scmp.ne.s32.totalorder %s223, %s225
      %p229 = scmp.eq.s32.totalorder %s21, 0
      %p230 = por %p228, %p229
      %p231 = scmp.ne.s32.totalorder %s223, %s225
      %p232 = scmp.eq.s32.totalorder %s26, 1
      %p233 = por %p231, %p232
      %p234 = scmp.ne.s32.totalorder %s225, %s226
      %p235 = scmp.eq.s32.totalorder %s26, 0
      %p236 = por %p234, %p235
      %p237 = scmp.ne.s32.totalorder %s225, %s226
      %p238 = scmp.eq.s32.totalorder %s27, 1
      %p239 = por %p237, %p238
      %p241 = scmp.ne.s32.totalorder %s226, %s240
      %p242 = scmp.eq.s32.totalorder %s27, 0
      %p243 = por %p241, %p242
      %s245 = sadd.s32 %s244, 1
      %p248 = scmp.eq.s32.totalorder %s21, 1
      %p249 = scmp.ne.s32.totalorder %s244, %s246
      %p250 = scmp.eq.s32.totalorder %s21, 0
      %p251 = por %p249, %p250
      %p252 = scmp.ne.s32.totalorder %s244, %s246
      %p253 = scmp.eq.s32.totalorder %s26, 1
      %p254 = por %p252, %p253
      %p255 = scmp.ne.s32.totalorder %s246, %s247
      %p256 = scmp.eq.s32.totalorder %s26, 0
      %p257 = por %p255, %p256
      %p258 = scmp.ne.s32.totalorder %s246, %s247
      %p259 = scmp.eq.s32.totalorder %s27, 1
      %p260 = por %p258, %p259
      %p262 = scmp.ne.s32.totalorder %s247, %s261
      %p263 = scmp.eq.s32.totalorder %s27, 0
      %p264 = por %p262, %p263
      %s265 = ssub.s32 %s21, %s28
      %p266 = scmp.eq.s32.totalorder %s265, 0
      %s268 = sadd.s32 %s267, 1
      %s269 = scalar_select %p266, %s267, %s268
      %p272 = pneg %p266
      %p273 = scmp.eq.s32.totalorder %s21, 1
      %p274 = por %p272, %p273
      %p275 = scmp.ne.s32.totalorder %s267, %s270
      %p276 = scmp.eq.s32.totalorder %s21, 0
      %p277 = por %p275, %p276
      %p278 = scmp.ne.s32.totalorder %s267, %s270
      %p279 = scmp.eq.s32.totalorder %s26, 1
      %p280 = por %p278, %p279
      %p281 = scmp.ne.s32.totalorder %s270, %s271
      %p282 = scmp.eq.s32.totalorder %s26, 0
      %p283 = por %p281, %p282
      %p284 = scmp.ne.s32.totalorder %s270, %s271
      %p285 = scmp.eq.s32.totalorder %s27, 1
      %p286 = por %p284, %p285
      %p288 = scmp.ne.s32.totalorder %s271, %s287
      %p289 = scmp.eq.s32.totalorder %s27, 0
      %p290 = por %p288, %p289
      %p291 = scmp.le.s32.totalorder 1, %s21
      %p292 = scmp.lt.s32.totalorder %s21, 3
      %p293 = pnand %p291, %p292
      %p294 = pneg %p293
      // Predicated region
      $region9: #{cnn_classifier_forward.1} parent=5 // pred_check
        _
      $region10: #{cnn_classifier_forward.1} parent=5 // pred_check_branch
        %296 = sbr.rel (%p293) target = $region12
      $region11: #{cnn_classifier_forward.1} parent=5 // pred_region
        %s297 = ssub.s32 %s21, 1
        // Predicated region
        $region13: #{cnn_classifier_forward.1} parent=11 // pred_check
          %p298 = pneg %p68
        $region14: #{cnn_classifier_forward.1} parent=11 // pred_check_branch
          %300 = sbr.rel (%p298) target = $region16
        $region15: #{cnn_classifier_forward.1} parent=11 // pred_region
          _
        $region16: #{cnn_classifier_forward.1} parent=11 // pred_fallthru
          _
        // Predicated region
        $region17: #{cnn_classifier_forward.1} parent=11 // pred_check
          %p301 = pneg %p89
        $region18: #{cnn_classifier_forward.1} parent=11 // pred_check_branch
          %303 = sbr.rel (%p301) target = $region20
        $region19: #{cnn_classifier_forward.1} parent=11 // pred_region
          _
        $region20: #{cnn_classifier_forward.1} parent=11 // pred_fallthru
          _
        // Predicated region
        $region21: #{cnn_classifier_forward.1} parent=11 // pred_check
          %p304 = pneg %p110
        $region22: #{cnn_classifier_forward.1} parent=11 // pred_check_branch
          %306 = sbr.rel (%p304) target = $region24
        $region23: #{cnn_classifier_forward.1} parent=11 // pred_region
          _
        $region24: #{cnn_classifier_forward.1} parent=11 // pred_fallthru
          _
        // Predicated region
        $region25: #{cnn_classifier_forward.1} parent=11 // pred_check
          %p307 = pneg %p131
        $region26: #{cnn_classifier_forward.1} parent=11 // pred_check_branch
          %309 = sbr.rel (%p307) target = $region28
        $region27: #{cnn_classifier_forward.1} parent=11 // pred_region
          %311 = vsyncadd [#allocation7], 0
          %s312 = sshll.u32 %s4, 4
          %s313 = int_to_ptr.hbm [resolvable:$true] %s312
          %s314 = sshll.u32 [#allocation6], 4
          %s315 = int_to_ptr.vmem [resolvable:$true] %s314
          %320 = dma.hbm_to_vmem [thread:$0]  %s313, 32768, %s315, [#allocation7], 256, 256, 16
        $region28: #{cnn_classifier_forward.1} parent=11 // pred_fallthru
          _
        // Predicated region
        $region29: #{cnn_classifier_forward.1} parent=11 // pred_check
          %p321 = pneg %p152
        $region30: #{cnn_classifier_forward.1} parent=11 // pred_check_branch
          %323 = sbr.rel (%p321) target = $region32
        $region31: #{cnn_classifier_forward.1} parent=11 // pred_region
          _
        $region32: #{cnn_classifier_forward.1} parent=11 // pred_fallthru
          _
        // Predicated region
        $region33: #{cnn_classifier_forward.1} parent=11 // pred_check
          %p324 = pneg %p173
        $region34: #{cnn_classifier_forward.1} parent=11 // pred_check_branch
          %326 = sbr.rel (%p324) target = $region36
        $region35: #{cnn_classifier_forward.1} parent=11 // pred_region
          _
        $region36: #{cnn_classifier_forward.1} parent=11 // pred_fallthru
          _
        // Predicated region
        $region37: #{cnn_classifier_forward.1} parent=11 // pred_check
          %p327 = pneg %p194
        $region38: #{cnn_classifier_forward.1} parent=11 // pred_check_branch
          %329 = sbr.rel (%p327) target = $region40
        $region39: #{cnn_classifier_forward.1} parent=11 // pred_region
          _
        $region40: #{cnn_classifier_forward.1} parent=11 // pred_fallthru
          _
        // Predicated region
        $region41: #{cnn_classifier_forward.1} parent=11 // pred_check
          %p330 = pneg %p215
        $region42: #{cnn_classifier_forward.1} parent=11 // pred_check_branch
          %332 = sbr.rel (%p330) target = $region44
        $region43: #{cnn_classifier_forward.1} parent=11 // pred_region
          _
        $region44: #{cnn_classifier_forward.1} parent=11 // pred_fallthru
          _
        // Predicated region
        $region45: #{cnn_classifier_forward.1} parent=11 // pred_check
          %p333 = pneg %p236
        $region46: #{cnn_classifier_forward.1} parent=11 // pred_check_branch
          %335 = sbr.rel (%p333) target = $region48
        $region47: #{cnn_classifier_forward.1} parent=11 // pred_region
          _
        $region48: #{cnn_classifier_forward.1} parent=11 // pred_fallthru
          _
        // Predicated region
        $region49: #{cnn_classifier_forward.1} parent=11 // pred_check
          %p336 = pneg %p257
        $region50: #{cnn_classifier_forward.1} parent=11 // pred_check_branch
          %338 = sbr.rel (%p336) target = $region52
        $region51: #{cnn_classifier_forward.1} parent=11 // pred_region
          _
        $region52: #{cnn_classifier_forward.1} parent=11 // pred_fallthru
          _
      $region12: #{cnn_classifier_forward.1} parent=5 // pred_fallthru
        _
      %p339 = scmp.lt.s32.totalorder %s21, 2
      // Predicated region
      $region53: #{cnn_classifier_forward.1} parent=5 // pred_check
        %p340 = pneg %p339
      $region54: #{cnn_classifier_forward.1} parent=5 // pred_check_branch
        %342 = sbr.rel (%p340) target = $region56
      $region55: #{cnn_classifier_forward.1} parent=5 // pred_region
        // Predicated region
        $region57: #{cnn_classifier_forward.1} parent=55 // pred_check
          %p343 = pneg %p41
        $region58: #{cnn_classifier_forward.1} parent=55 // pred_check_branch
          %345 = sbr.rel (%p343) target = $region60
        $region59: #{cnn_classifier_forward.1} parent=55 // pred_region
          %p346 = scmp.lt.s32.totalorder %s21, 1
          %s347 = scalar_select %p346, %s21, 1
          %s348 = smul.addr %s347, 8
          %s349 = scalar_lea.vmem %s0, %s348
        $region60: #{cnn_classifier_forward.1} parent=55 // pred_fallthru
          _
      $region56: #{cnn_classifier_forward.1} parent=5 // pred_fallthru
        _
      %p350 = scmp.le.s32.totalorder 1, %s21
      %p351 = scmp.lt.s32.totalorder %s21, 3
      %p352 = pnand %p350, %p351
      %p353 = pneg %p352
      // Predicated region
      $region61: #{cnn_classifier_forward.1} parent=5 // pred_check
        _
      $region62: #{cnn_classifier_forward.1} parent=5 // pred_check_branch
        %355 = sbr.rel (%p352) target = $region64
      $region63: #{cnn_classifier_forward.1} parent=5 // pred_region
        %s356 = ssub.s32 %s21, 1
        // Predicated region
        $region65: #{cnn_classifier_forward.1} parent=63 // pred_check
          %p357 = pneg %p131
        $region66: #{cnn_classifier_forward.1} parent=63 // pred_check_branch
          %359 = sbr.rel (%p357) target = $region68
        $region67: #{cnn_classifier_forward.1} parent=63 // pred_region
          %361 = dma.done [#allocation7], 32768
        $region68: #{cnn_classifier_forward.1} parent=63 // pred_fallthru
          _
        %p362 = scmp.lt.s32.totalorder %s26, 1
        %s363 = scalar_select %p362, %s26, 1
        %s364 = smul.addr %s363, 8
        %s365 = scalar_lea.vmem %s0, %s364
        %p366 = pneg %p47
        %p367 = pneg %p44
        %p368 = pneg %p68
        %p369 = pneg %p65
        %p370 = pneg %p89
        %p371 = pneg %p86
        %p372 = pneg %p110
        %p373 = pneg %p107
        %p374 = pneg %p131
        %p375 = pneg %p128
        %p376 = pneg %p152
        %p377 = pneg %p149
        %p378 = pneg %p173
        %p379 = pneg %p170
        %p380 = pneg %p194
        %p381 = pneg %p191
        %p382 = pneg %p215
        %p383 = pneg %p212
        %p384 = pneg %p236
        %p385 = pneg %p233
        %p386 = pneg %p257
        %p387 = pneg %p254
        %p388 = pneg %p283
        %p389 = pneg %p280
        %s390 = sand.u32 %s270, 1
        %s391 = scalar_lea.sflag [#allocation8], %s390
        %s392 = sand.u32 %s270, 1
        %s393 = scalar_lea.vmem [#allocation9], %s392
        %p394 = scmp.lt.s32.totalorder %s26, 1
        %s395 = scalar_select %p394, %s26, 1
        %s396 = smul.addr %s395, 8
        %s397 = scalar_lea.vmem %s0, %s396
        %v398 = vld [vmem:[%s397] sm:$0xff]
        %v399 = vld [vmem:[%s1] sm:$0xf]
        %v400 = vld [vmem:[%s1 + $0x4] sm:$0xf]
        %v401 = vld [vmem:[%s1 + $0x8] sm:$0xf]
        %v402 = vld [vmem:[%s1 + $0xc] sm:$0xf]
        %v403 = vld [vmem:[%s1 + $0x10] sm:$0xf]
        %v404 = vld [vmem:[%s1 + $0x14] sm:$0xf]
        %v405 = vld [vmem:[%s1 + $0x18] sm:$0xf]
        %v406 = vld [vmem:[%s1 + $0x1c] sm:$0xf]
        %v407 = vld [vmem:[%s1 + $0x20] sm:$0xf]
        %408 = vst [vmem:[#allocation2 + $0x1] sm:$0xff] %v398
        %v409 = vlaneseq
        %v410 = vand.u32 %v409, 127
        %v411 = vadd.s32 %v410, 128
        %v412 = vadd.s32 %v410, 256
        %v413 = vadd.s32 %v410, 384
        %v414 = vadd.s32 %v410, 512
        %v415 = vadd.s32 %v410, 640
        %v416 = vadd.s32 %v410, 768
        %v417 = vadd.s32 %v410, 896
        %v418 = vshra.s32 %v410, 5
        %v419 = vshra.s32 %v411, 5
        %v420 = vshra.s32 %v412, 5
        %v421 = vshra.s32 %v413, 5
        %v422 = vshra.s32 %v414, 5
        %v423 = vshra.s32 %v415, 5
        %v424 = vshra.s32 %v416, 5
        %v425 = vshra.s32 %v417, 5
        %v426 = vand.u32 %v410, 31
        %v427 = vand.u32 %v411, 31
        %v428 = vand.u32 %v412, 31
        %v429 = vand.u32 %v413, 31
        %v430 = vand.u32 %v414, 31
        %v431 = vand.u32 %v415, 31
        %v432 = vand.u32 %v416, 31
        %v433 = vand.u32 %v417, 31
        %v434 = vld [vmem:[#allocation2] sm:$0xff]
        %v435 = vld [vmem:[#allocation2 + $0x8] sm:$0x1]
        %v436 = vadd.s32 %v418, 4294967295
        %v437 = vadd.s32 %v419, 4294967295
        %v438 = vadd.s32 %v420, 4294967295
        %v439 = vadd.s32 %v421, 4294967295
        %v440 = vadd.s32 %v422, 4294967295
        %v441 = vadd.s32 %v423, 4294967295
        %v442 = vadd.s32 %v424, 4294967295
        %v443 = vadd.s32 %v425, 4294967295
        %vm444 = vcmp.ge.s32.totalorder %v436, 0
        %vm445 = vcmp.ge.s32.totalorder %v437, 0
        %vm446 = vcmp.ge.s32.totalorder %v438, 0
        %vm447 = vcmp.ge.s32.totalorder %v439, 0
        %vm448 = vcmp.ge.s32.totalorder %v440, 0
        %vm449 = vcmp.ge.s32.totalorder %v441, 0
        %vm450 = vcmp.ge.s32.totalorder %v442, 0
        %vm451 = vcmp.ge.s32.totalorder %v443, 0
        %vm452 = vcmp.lt.s32.totalorder %v436, 32
        %vm453 = vcmp.lt.s32.totalorder %v437, 32
        %vm454 = vcmp.lt.s32.totalorder %v438, 32
        %vm455 = vcmp.lt.s32.totalorder %v439, 32
        %vm456 = vcmp.lt.s32.totalorder %v440, 32
        %vm457 = vcmp.lt.s32.totalorder %v441, 32
        %vm458 = vcmp.lt.s32.totalorder %v442, 32
        %vm459 = vcmp.lt.s32.totalorder %v443, 32
        %vm460 = vmand %vm444, %vm452
        %vm461 = vmand %vm445, %vm453
        %vm462 = vmand %vm446, %vm454
        %vm463 = vmand %vm447, %vm455
        %vm464 = vmand %vm448, %vm456
        %vm465 = vmand %vm449, %vm457
        %vm466 = vmand %vm450, %vm458
        %vm467 = vmand %vm451, %vm459
        %v468 = vadd.s32 %v426, 4294967295
        %v469 = vadd.s32 %v427, 4294967295
        %v470 = vadd.s32 %v428, 4294967295
        %v471 = vadd.s32 %v429, 4294967295
        %v472 = vadd.s32 %v430, 4294967295
        %v473 = vadd.s32 %v431, 4294967295
        %v474 = vadd.s32 %v432, 4294967295
        %v475 = vadd.s32 %v433, 4294967295
        %vm476 = vcmp.ge.s32.totalorder %v468, 0
        %vm477 = vcmp.ge.s32.totalorder %v469, 0
        %vm478 = vcmp.ge.s32.totalorder %v470, 0
        %vm479 = vcmp.ge.s32.totalorder %v471, 0
        %vm480 = vcmp.ge.s32.totalorder %v472, 0
        %vm481 = vcmp.ge.s32.totalorder %v473, 0
        %vm482 = vcmp.ge.s32.totalorder %v474, 0
        %vm483 = vcmp.ge.s32.totalorder %v475, 0
        %vm484 = vmand %vm460, %vm476
        %vm485 = vmand %vm461, %vm477
        %vm486 = vmand %vm462, %vm478
        %vm487 = vmand %vm463, %vm479
        %vm488 = vmand %vm464, %vm480
        %vm489 = vmand %vm465, %vm481
        %vm490 = vmand %vm466, %vm482
        %vm491 = vmand %vm467, %vm483
        %vm492 = vcmp.lt.s32.totalorder %v468, 32
        %vm493 = vcmp.lt.s32.totalorder %v469, 32
        %vm494 = vcmp.lt.s32.totalorder %v470, 32
        %vm495 = vcmp.lt.s32.totalorder %v471, 32
        %vm496 = vcmp.lt.s32.totalorder %v472, 32
        %vm497 = vcmp.lt.s32.totalorder %v473, 32
        %vm498 = vcmp.lt.s32.totalorder %v474, 32
        %vm499 = vcmp.lt.s32.totalorder %v475, 32
        %vm500 = vmand %vm484, %vm492
        %vm501 = vmand %vm485, %vm493
        %vm502 = vmand %vm486, %vm494
        %vm503 = vmand %vm487, %vm495
        %vm504 = vmand %vm488, %vm496
        %vm505 = vmand %vm489, %vm497
        %vm506 = vmand %vm490, %vm498
        %vm507 = vmand %vm491, %vm499
        %v510 = vperm.slane %v434, 0
        %v511 = vperm.slane %v434, 1
        %v512 = vperm.slane %v434, 2
        %v513 = vperm.slane %v434, 3
        %v514 = vperm.slane %v434, 4
        %v515 = vperm.slane %v434, 5
        %v516 = vperm.slane %v434, 6
        %v517 = vperm.slane %v434, 7
        %v518 = vperm.slane %v435, 0
        %519 = vrot.lane.b32.xlu0 %v510, 33
        %v520 = vpop.permute.xlu0 %519
        %521 = vrot.lane.b32.xlu0 %v511, 33
        %v522 = vpop.permute.xlu0 %521
        %523 = vrot.lane.b32.xlu0 %v512, 33
        %v524 = vpop.permute.xlu0 %523
        %525 = vrot.lane.b32.xlu0 %v513, 33
        %v526 = vpop.permute.xlu0 %525
        %527 = vrot.lane.b32.xlu0 %v514, 33
        %v528 = vpop.permute.xlu0 %527
        %529 = vrot.lane.b32.xlu0 %v515, 33
        %v530 = vpop.permute.xlu0 %529
        %531 = vrot.lane.b32.xlu0 %v516, 33
        %v532 = vpop.permute.xlu0 %531
        %533 = vrot.lane.b32.xlu0 %v517, 33
        %v534 = vpop.permute.xlu0 %533
        %535 = vrot.lane.b32.xlu0 %v518, 33
        %v536 = vpop.permute.xlu0 %535
        %vm537 = vcmask 269312
        %v538 = vsel %vm537, %v520, %v522
        %v539 = vsel %vm537, %v522, %v524
        %v540 = vsel %vm537, %v524, %v526
        %v541 = vsel %vm537, %v526, %v528
        %v542 = vsel %vm537, %v528, %v530
        %v543 = vsel %vm537, %v530, %v532
        %v544 = vsel %vm537, %v532, %v534
        %v545 = vsel %vm537, %v534, %v536
        %v554 = vsel %vm500, %v538, 0.0
        %v555 = vsel %vm501, %v539, 0.0
        %v556 = vsel %vm502, %v540, 0.0
        %v557 = vsel %vm503, %v541, 0.0
        %v558 = vsel %vm504, %v542, 0.0
        %v559 = vsel %vm505, %v543, 0.0
        %v560 = vsel %vm506, %v544, 0.0
        %v561 = vsel %vm507, %v545, 0.0
        %563 = vset.pattern.permute.xlu0 0
        %564 = vperm.xlu0 %563, %v399
        %v565 = vpop.permute.xlu0 %564
        %v567 = vperm.slane %v554, 0
        %v568 = vperm.slane %v555, 0
        %v569 = vperm.slane %v556, 0
        %v570 = vperm.slane %v557, 0
        %v571 = vperm.slane %v558, 0
        %v572 = vperm.slane %v559, 0
        %v573 = vperm.slane %v560, 0
        %v574 = vperm.slane %v561, 0
        %v575 = vmul.f32 %v565, %v567
        %v576 = vmul.f32 %v565, %v568
        %v577 = vmul.f32 %v565, %v569
        %v578 = vmul.f32 %v565, %v570
        %v579 = vmul.f32 %v565, %v571
        %v580 = vmul.f32 %v565, %v572
        %v581 = vmul.f32 %v565, %v573
        %v582 = vmul.f32 %v565, %v574
        %v583 = vadd.f32 %v575, 0.0
        %v584 = vadd.f32 %v576, 0.0
        %v585 = vadd.f32 %v577, 0.0
        %v586 = vadd.f32 %v578, 0.0
        %v587 = vadd.f32 %v579, 0.0
        %v588 = vadd.f32 %v580, 0.0
        %v589 = vadd.f32 %v581, 0.0
        %v590 = vadd.f32 %v582, 0.0
        %vm591 = vcmp.ge.s32.totalorder %v426, 0
        %vm592 = vcmp.ge.s32.totalorder %v427, 0
        %vm593 = vcmp.ge.s32.totalorder %v428, 0
        %vm594 = vcmp.ge.s32.totalorder %v429, 0
        %vm595 = vcmp.ge.s32.totalorder %v430, 0
        %vm596 = vcmp.ge.s32.totalorder %v431, 0
        %vm597 = vcmp.ge.s32.totalorder %v432, 0
        %vm598 = vcmp.ge.s32.totalorder %v433, 0
        %vm599 = vmand %vm460, %vm591
        %vm600 = vmand %vm461, %vm592
        %vm601 = vmand %vm462, %vm593
        %vm602 = vmand %vm463, %vm594
        %vm603 = vmand %vm464, %vm595
        %vm604 = vmand %vm465, %vm596
        %vm605 = vmand %vm466, %vm597
        %vm606 = vmand %vm467, %vm598
        %vm607 = vcmp.lt.s32.totalorder %v426, 32
        %vm608 = vcmp.lt.s32.totalorder %v427, 32
        %vm609 = vcmp.lt.s32.totalorder %v428, 32
        %vm610 = vcmp.lt.s32.totalorder %v429, 32
        %vm611 = vcmp.lt.s32.totalorder %v430, 32
        %vm612 = vcmp.lt.s32.totalorder %v431, 32
        %vm613 = vcmp.lt.s32.totalorder %v432, 32
        %vm614 = vcmp.lt.s32.totalorder %v433, 32
        %vm615 = vmand %vm599, %vm607
        %vm616 = vmand %vm600, %vm608
        %vm617 = vmand %vm601, %vm609
        %vm618 = vmand %vm602, %vm610
        %vm619 = vmand %vm603, %vm611
        %vm620 = vmand %vm604, %vm612
        %vm621 = vmand %vm605, %vm613
        %vm622 = vmand %vm606, %vm614
        %623 = vrot.lane.b32.xlu0 %v510, 32
        %v624 = vpop.permute.xlu0 %623
        %625 = vrot.lane.b32.xlu0 %v511, 32
        %v626 = vpop.permute.xlu0 %625
        %627 = vrot.lane.b32.xlu0 %v512, 32
        %v628 = vpop.permute.xlu0 %627
        %629 = vrot.lane.b32.xlu0 %v513, 32
        %v630 = vpop.permute.xlu0 %629
        %631 = vrot.lane.b32.xlu0 %v514, 32
        %v632 = vpop.permute.xlu0 %631
        %633 = vrot.lane.b32.xlu0 %v515, 32
        %v634 = vpop.permute.xlu0 %633
        %635 = vrot.lane.b32.xlu0 %v516, 32
        %v636 = vpop.permute.xlu0 %635
        %637 = vrot.lane.b32.xlu0 %v517, 32
        %v638 = vpop.permute.xlu0 %637
        %639 = vrot.lane.b32.xlu0 %v518, 32
        %v640 = vpop.permute.xlu0 %639
        %vm641 = vcmask 261120
        %v642 = vsel %vm641, %v624, %v626
        %v643 = vsel %vm641, %v626, %v628
        %v644 = vsel %vm641, %v628, %v630
        %v645 = vsel %vm641, %v630, %v632
        %v646 = vsel %vm641, %v632, %v634
        %v647 = vsel %vm641, %v634, %v636
        %v648 = vsel %vm641, %v636, %v638
        %v649 = vsel %vm641, %v638, %v640
        %v658 = vsel %vm615, %v642, 0.0
        %v659 = vsel %vm616, %v643, 0.0
        %v660 = vsel %vm617, %v644, 0.0
        %v661 = vsel %vm618, %v645, 0.0
        %v662 = vsel %vm619, %v646, 0.0
        %v663 = vsel %vm620, %v647, 0.0
        %v664 = vsel %vm621, %v648, 0.0
        %v665 = vsel %vm622, %v649, 0.0
        %667 = vset.pattern.permute.xlu0 0
        %668 = vperm.xlu0 %667, %v400
        %v669 = vpop.permute.xlu0 %668
        %v671 = vperm.slane %v658, 0
        %v672 = vperm.slane %v659, 0
        %v673 = vperm.slane %v660, 0
        %v674 = vperm.slane %v661, 0
        %v675 = vperm.slane %v662, 0
        %v676 = vperm.slane %v663, 0
        %v677 = vperm.slane %v664, 0
        %v678 = vperm.slane %v665, 0
        %v679 = vmul.f32 %v669, %v671
        %v680 = vmul.f32 %v669, %v672
        %v681 = vmul.f32 %v669, %v673
        %v682 = vmul.f32 %v669, %v674
        %v683 = vmul.f32 %v669, %v675
        %v684 = vmul.f32 %v669, %v676
        %v685 = vmul.f32 %v669, %v677
        %v686 = vmul.f32 %v669, %v678
        %v687 = vadd.f32 %v583, %v679
        %v688 = vadd.f32 %v584, %v680
        %v689 = vadd.f32 %v585, %v681
        %v690 = vadd.f32 %v586, %v682
        %v691 = vadd.f32 %v587, %v683
        %v692 = vadd.f32 %v588, %v684
        %v693 = vadd.f32 %v589, %v685
        %v694 = vadd.f32 %v590, %v686
        %v695 = vadd.s32 %v426, 1
        %v696 = vadd.s32 %v427, 1
        %v697 = vadd.s32 %v428, 1
        %v698 = vadd.s32 %v429, 1
        %v699 = vadd.s32 %v430, 1
        %v700 = vadd.s32 %v431, 1
        %v701 = vadd.s32 %v432, 1
        %v702 = vadd.s32 %v433, 1
        %vm703 = vcmp.ge.s32.totalorder %v695, 0
        %vm704 = vcmp.ge.s32.totalorder %v696, 0
        %vm705 = vcmp.ge.s32.totalorder %v697, 0
        %vm706 = vcmp.ge.s32.totalorder %v698, 0
        %vm707 = vcmp.ge.s32.totalorder %v699, 0
        %vm708 = vcmp.ge.s32.totalorder %v700, 0
        %vm709 = vcmp.ge.s32.totalorder %v701, 0
        %vm710 = vcmp.ge.s32.totalorder %v702, 0
        %vm711 = vmand %vm460, %vm703
        %vm712 = vmand %vm461, %vm704
        %vm713 = vmand %vm462, %vm705
        %vm714 = vmand %vm463, %vm706
        %vm715 = vmand %vm464, %vm707
        %vm716 = vmand %vm465, %vm708
        %vm717 = vmand %vm466, %vm709
        %vm718 = vmand %vm467, %vm710
        %vm719 = vcmp.lt.s32.totalorder %v695, 32
        %vm720 = vcmp.lt.s32.totalorder %v696, 32
        %vm721 = vcmp.lt.s32.totalorder %v697, 32
        %vm722 = vcmp.lt.s32.totalorder %v698, 32
        %vm723 = vcmp.lt.s32.totalorder %v699, 32
        %vm724 = vcmp.lt.s32.totalorder %v700, 32
        %vm725 = vcmp.lt.s32.totalorder %v701, 32
        %vm726 = vcmp.lt.s32.totalorder %v702, 32
        %vm727 = vmand %vm711, %vm719
        %vm728 = vmand %vm712, %vm720
        %vm729 = vmand %vm713, %vm721
        %vm730 = vmand %vm714, %vm722
        %vm731 = vmand %vm715, %vm723
        %vm732 = vmand %vm716, %vm724
        %vm733 = vmand %vm717, %vm725
        %vm734 = vmand %vm718, %vm726
        %735 = vrot.lane.b32.xlu0 %v510, 31
        %v736 = vpop.permute.xlu0 %735
        %737 = vrot.lane.b32.xlu0 %v511, 31
        %v738 = vpop.permute.xlu0 %737
        %739 = vrot.lane.b32.xlu0 %v512, 31
        %v740 = vpop.permute.xlu0 %739
        %741 = vrot.lane.b32.xlu0 %v513, 31
        %v742 = vpop.permute.xlu0 %741
        %743 = vrot.lane.b32.xlu0 %v514, 31
        %v744 = vpop.permute.xlu0 %743
        %745 = vrot.lane.b32.xlu0 %v515, 31
        %v746 = vpop.permute.xlu0 %745
        %747 = vrot.lane.b32.xlu0 %v516, 31
        %v748 = vpop.permute.xlu0 %747
        %749 = vrot.lane.b32.xlu0 %v517, 31
        %v750 = vpop.permute.xlu0 %749
        %751 = vrot.lane.b32.xlu0 %v518, 31
        %v752 = vpop.permute.xlu0 %751
        %vm753 = vcmask 252928
        %v754 = vsel %vm753, %v736, %v738
        %v755 = vsel %vm753, %v738, %v740
        %v756 = vsel %vm753, %v740, %v742
        %v757 = vsel %vm753, %v742, %v744
        %v758 = vsel %vm753, %v744, %v746
        %v759 = vsel %vm753, %v746, %v748
        %v760 = vsel %vm753, %v748, %v750
        %v761 = vsel %vm753, %v750, %v752
        %v770 = vsel %vm727, %v754, 0.0
        %v771 = vsel %vm728, %v755, 0.0
        %v772 = vsel %vm729, %v756, 0.0
        %v773 = vsel %vm730, %v757, 0.0
        %v774 = vsel %vm731, %v758, 0.0
        %v775 = vsel %vm732, %v759, 0.0
        %v776 = vsel %vm733, %v760, 0.0
        %v777 = vsel %vm734, %v761, 0.0
        %779 = vset.pattern.permute.xlu0 0
        %780 = vperm.xlu0 %779, %v401
        %v781 = vpop.permute.xlu0 %780
        %v783 = vperm.slane %v770, 0
        %v784 = vperm.slane %v771, 0
        %v785 = vperm.slane %v772, 0
        %v786 = vperm.slane %v773, 0
        %v787 = vperm.slane %v774, 0
        %v788 = vperm.slane %v775, 0
        %v789 = vperm.slane %v776, 0
        %v790 = vperm.slane %v777, 0
        %v791 = vmul.f32 %v781, %v783
        %v792 = vmul.f32 %v781, %v784
        %v793 = vmul.f32 %v781, %v785
        %v794 = vmul.f32 %v781, %v786
        %v795 = vmul.f32 %v781, %v787
        %v796 = vmul.f32 %v781, %v788
        %v797 = vmul.f32 %v781, %v789
        %v798 = vmul.f32 %v781, %v790
        %v799 = vadd.f32 %v687, %v791
        %v800 = vadd.f32 %v688, %v792
        %v801 = vadd.f32 %v689, %v793
        %v802 = vadd.f32 %v690, %v794
        %v803 = vadd.f32 %v691, %v795
        %v804 = vadd.f32 %v692, %v796
        %v805 = vadd.f32 %v693, %v797
        %v806 = vadd.f32 %v694, %v798
        %vm807 = vcmp.ge.s32.totalorder %v418, 0
        %vm808 = vcmp.ge.s32.totalorder %v419, 0
        %vm809 = vcmp.ge.s32.totalorder %v420, 0
        %vm810 = vcmp.ge.s32.totalorder %v421, 0
        %vm811 = vcmp.ge.s32.totalorder %v422, 0
        %vm812 = vcmp.ge.s32.totalorder %v423, 0
        %vm813 = vcmp.ge.s32.totalorder %v424, 0
        %vm814 = vcmp.ge.s32.totalorder %v425, 0
        %vm815 = vcmp.lt.s32.totalorder %v418, 32
        %vm816 = vcmp.lt.s32.totalorder %v419, 32
        %vm817 = vcmp.lt.s32.totalorder %v420, 32
        %vm818 = vcmp.lt.s32.totalorder %v421, 32
        %vm819 = vcmp.lt.s32.totalorder %v422, 32
        %vm820 = vcmp.lt.s32.totalorder %v423, 32
        %vm821 = vcmp.lt.s32.totalorder %v424, 32
        %vm822 = vcmp.lt.s32.totalorder %v425, 32
        %vm823 = vmand %vm807, %vm815
        %vm824 = vmand %vm808, %vm816
        %vm825 = vmand %vm809, %vm817
        %vm826 = vmand %vm810, %vm818
        %vm827 = vmand %vm811, %vm819
        %vm828 = vmand %vm812, %vm820
        %vm829 = vmand %vm813, %vm821
        %vm830 = vmand %vm814, %vm822
        %vm831 = vmand %vm823, %vm476
        %vm832 = vmand %vm824, %vm477
        %vm833 = vmand %vm825, %vm478
        %vm834 = vmand %vm826, %vm479
        %vm835 = vmand %vm827, %vm480
        %vm836 = vmand %vm828, %vm481
        %vm837 = vmand %vm829, %vm482
        %vm838 = vmand %vm830, %vm483
        %vm839 = vmand %vm831, %vm492
        %vm840 = vmand %vm832, %vm493
        %vm841 = vmand %vm833, %vm494
        %vm842 = vmand %vm834, %vm495
        %vm843 = vmand %vm835, %vm496
        %vm844 = vmand %vm836, %vm497
        %vm845 = vmand %vm837, %vm498
        %vm846 = vmand %vm838, %vm499
        %847 = vrot.lane.b32.xlu0 %v510, 1
        %v848 = vpop.permute.xlu0 %847
        %849 = vrot.lane.b32.xlu0 %v511, 1
        %v850 = vpop.permute.xlu0 %849
        %851 = vrot.lane.b32.xlu0 %v512, 1
        %v852 = vpop.permute.xlu0 %851
        %853 = vrot.lane.b32.xlu0 %v513, 1
        %v854 = vpop.permute.xlu0 %853
        %855 = vrot.lane.b32.xlu0 %v514, 1
        %v856 = vpop.permute.xlu0 %855
        %857 = vrot.lane.b32.xlu0 %v515, 1
        %v858 = vpop.permute.xlu0 %857
        %859 = vrot.lane.b32.xlu0 %v516, 1
        %v860 = vpop.permute.xlu0 %859
        %861 = vrot.lane.b32.xlu0 %v517, 1
        %v862 = vpop.permute.xlu0 %861
        %863 = vrot.lane.b32.xlu0 %v518, 1
        %v864 = vpop.permute.xlu0 %863
        %vm865 = vcmask 7168
        %v866 = vsel %vm865, %v848, %v850
        %v867 = vsel %vm865, %v850, %v852
        %v868 = vsel %vm865, %v852, %v854
        %v869 = vsel %vm865, %v854, %v856
        %v870 = vsel %vm865, %v856, %v858
        %v871 = vsel %vm865, %v858, %v860
        %v872 = vsel %vm865, %v860, %v862
        %v873 = vsel %vm865, %v862, %v864
        %v882 = vsel %vm839, %v866, 0.0
        %v883 = vsel %vm840, %v867, 0.0
        %v884 = vsel %vm841, %v868, 0.0
        %v885 = vsel %vm842, %v869, 0.0
        %v886 = vsel %vm843, %v870, 0.0
        %v887 = vsel %vm844, %v871, 0.0
        %v888 = vsel %vm845, %v872, 0.0
        %v889 = vsel %vm846, %v873, 0.0
        %891 = vset.pattern.permute.xlu0 0
        %892 = vperm.xlu0 %891, %v402
        %v893 = vpop.permute.xlu0 %892
        %v895 = vperm.slane %v882, 0
        %v896 = vperm.slane %v883, 0
        %v897 = vperm.slane %v884, 0
        %v898 = vperm.slane %v885, 0
        %v899 = vperm.slane %v886, 0
        %v900 = vperm.slane %v887, 0
        %v901 = vperm.slane %v888, 0
        %v902 = vperm.slane %v889, 0
        %v903 = vmul.f32 %v893, %v895
        %v904 = vmul.f32 %v893, %v896
        %v905 = vmul.f32 %v893, %v897
        %v906 = vmul.f32 %v893, %v898
        %v907 = vmul.f32 %v893, %v899
        %v908 = vmul.f32 %v893, %v900
        %v909 = vmul.f32 %v893, %v901
        %v910 = vmul.f32 %v893, %v902
        %v911 = vadd.f32 %v799, %v903
        %v912 = vadd.f32 %v800, %v904
        %v913 = vadd.f32 %v801, %v905
        %v914 = vadd.f32 %v802, %v906
        %v915 = vadd.f32 %v803, %v907
        %v916 = vadd.f32 %v804, %v908
        %v917 = vadd.f32 %v805, %v909
        %v918 = vadd.f32 %v806, %v910
        %v919 = vld [vmem:[#allocation2 + $0x1] sm:$0xff]
        %vm920 = vmand %vm823, %vm591
        %vm921 = vmand %vm824, %vm592
        %vm922 = vmand %vm825, %vm593
        %vm923 = vmand %vm826, %vm594
        %vm924 = vmand %vm827, %vm595
        %vm925 = vmand %vm828, %vm596
        %vm926 = vmand %vm829, %vm597
        %vm927 = vmand %vm830, %vm598
        %vm928 = vmand %vm920, %vm607
        %vm929 = vmand %vm921, %vm608
        %vm930 = vmand %vm922, %vm609
        %vm931 = vmand %vm923, %vm610
        %vm932 = vmand %vm924, %vm611
        %vm933 = vmand %vm925, %vm612
        %vm934 = vmand %vm926, %vm613
        %vm935 = vmand %vm927, %vm614
        %v937 = vperm.slane %v919, 0
        %v938 = vperm.slane %v919, 1
        %v939 = vperm.slane %v919, 2
        %v940 = vperm.slane %v919, 3
        %v941 = vperm.slane %v919, 4
        %v942 = vperm.slane %v919, 5
        %v943 = vperm.slane %v919, 6
        %v944 = vperm.slane %v919, 7
        %v953 = vsel %vm928, %v937, 0.0
        %v954 = vsel %vm929, %v938, 0.0
        %v955 = vsel %vm930, %v939, 0.0
        %v956 = vsel %vm931, %v940, 0.0
        %v957 = vsel %vm932, %v941, 0.0
        %v958 = vsel %vm933, %v942, 0.0
        %v959 = vsel %vm934, %v943, 0.0
        %v960 = vsel %vm935, %v944, 0.0
        %962 = vset.pattern.permute.xlu0 0
        %963 = vperm.xlu0 %962, %v403
        %v964 = vpop.permute.xlu0 %963
        %v966 = vperm.slane %v953, 0
        %v967 = vperm.slane %v954, 0
        %v968 = vperm.slane %v955, 0
        %v969 = vperm.slane %v956, 0
        %v970 = vperm.slane %v957, 0
        %v971 = vperm.slane %v958, 0
        %v972 = vperm.slane %v959, 0
        %v973 = vperm.slane %v960, 0
        %v974 = vmul.f32 %v964, %v966
        %v975 = vmul.f32 %v964, %v967
        %v976 = vmul.f32 %v964, %v968
        %v977 = vmul.f32 %v964, %v969
        %v978 = vmul.f32 %v964, %v970
        %v979 = vmul.f32 %v964, %v971
        %v980 = vmul.f32 %v964, %v972
        %v981 = vmul.f32 %v964, %v973
        %v982 = vadd.f32 %v911, %v974
        %v983 = vadd.f32 %v912, %v975
        %v984 = vadd.f32 %v913, %v976
        %v985 = vadd.f32 %v914, %v977
        %v986 = vadd.f32 %v915, %v978
        %v987 = vadd.f32 %v916, %v979
        %v988 = vadd.f32 %v917, %v980
        %v989 = vadd.f32 %v918, %v981
        %v990 = vld [vmem:[#allocation2 + $0x1] sm:$0xff]
        %v991 = vld [vmem:[#allocation2 + $0x9] sm:$0x1]
        %vm992 = vmand %vm823, %vm703
        %vm993 = vmand %vm824, %vm704
        %vm994 = vmand %vm825, %vm705
        %vm995 = vmand %vm826, %vm706
        %vm996 = vmand %vm827, %vm707
        %vm997 = vmand %vm828, %vm708
        %vm998 = vmand %vm829, %vm709
        %vm999 = vmand %vm830, %vm710
        %vm1000 = vmand %vm992, %vm719
        %vm1001 = vmand %vm993, %vm720
        %vm1002 = vmand %vm994, %vm721
        %vm1003 = vmand %vm995, %vm722
        %vm1004 = vmand %vm996, %vm723
        %vm1005 = vmand %vm997, %vm724
        %vm1006 = vmand %vm998, %vm725
        %vm1007 = vmand %vm999, %vm726
        %v1010 = vperm.slane %v990, 0
        %v1011 = vperm.slane %v990, 1
        %v1012 = vperm.slane %v990, 2
        %v1013 = vperm.slane %v990, 3
        %v1014 = vperm.slane %v990, 4
        %v1015 = vperm.slane %v990, 5
        %v1016 = vperm.slane %v990, 6
        %v1017 = vperm.slane %v990, 7
        %v1018 = vperm.slane %v991, 0
        %1019 = vrot.lane.b32.xlu0 %v1010, 127
        %v1020 = vpop.permute.xlu0 %1019
        %1021 = vrot.lane.b32.xlu0 %v1011, 127
        %v1022 = vpop.permute.xlu0 %1021
        %1023 = vrot.lane.b32.xlu0 %v1012, 127
        %v1024 = vpop.permute.xlu0 %1023
        %1025 = vrot.lane.b32.xlu0 %v1013, 127
        %v1026 = vpop.permute.xlu0 %1025
        %1027 = vrot.lane.b32.xlu0 %v1014, 127
        %v1028 = vpop.permute.xlu0 %1027
        %1029 = vrot.lane.b32.xlu0 %v1015, 127
        %v1030 = vpop.permute.xlu0 %1029
        %1031 = vrot.lane.b32.xlu0 %v1016, 127
        %v1032 = vpop.permute.xlu0 %1031
        %1033 = vrot.lane.b32.xlu0 %v1017, 127
        %v1034 = vpop.permute.xlu0 %1033
        %1035 = vrot.lane.b32.xlu0 %v1018, 127
        %v1036 = vpop.permute.xlu0 %1035
        %vm1037 = vcmask 1039360
        %v1038 = vsel %vm1037, %v1020, %v1022
        %v1039 = vsel %vm1037, %v1022, %v1024
        %v1040 = vsel %vm1037, %v1024, %v1026
        %v1041 = vsel %vm1037, %v1026, %v1028
        %v1042 = vsel %vm1037, %v1028, %v1030
        %v1043 = vsel %vm1037, %v1030, %v1032
        %v1044 = vsel %vm1037, %v1032, %v1034
        %v1045 = vsel %vm1037, %v1034, %v1036
        %v1054 = vsel %vm1000, %v1038, 0.0
        %v1055 = vsel %vm1001, %v1039, 0.0
        %v1056 = vsel %vm1002, %v1040, 0.0
        %v1057 = vsel %vm1003, %v1041, 0.0
        %v1058 = vsel %vm1004, %v1042, 0.0
        %v1059 = vsel %vm1005, %v1043, 0.0
        %v1060 = vsel %vm1006, %v1044, 0.0
        %v1061 = vsel %vm1007, %v1045, 0.0
        %1063 = vset.pattern.permute.xlu0 0
        %1064 = vperm.xlu0 %1063, %v404
        %v1065 = vpop.permute.xlu0 %1064
        %v1067 = vperm.slane %v1054, 0
        %v1068 = vperm.slane %v1055, 0
        %v1069 = vperm.slane %v1056, 0
        %v1070 = vperm.slane %v1057, 0
        %v1071 = vperm.slane %v1058, 0
        %v1072 = vperm.slane %v1059, 0
        %v1073 = vperm.slane %v1060, 0
        %v1074 = vperm.slane %v1061, 0
        %v1075 = vmul.f32 %v1065, %v1067
        %v1076 = vmul.f32 %v1065, %v1068
        %v1077 = vmul.f32 %v1065, %v1069
        %v1078 = vmul.f32 %v1065, %v1070
        %v1079 = vmul.f32 %v1065, %v1071
        %v1080 = vmul.f32 %v1065, %v1072
        %v1081 = vmul.f32 %v1065, %v1073
        %v1082 = vmul.f32 %v1065, %v1074
        %v1083 = vadd.f32 %v982, %v1075
        %v1084 = vadd.f32 %v983, %v1076
        %v1085 = vadd.f32 %v984, %v1077
        %v1086 = vadd.f32 %v985, %v1078
        %v1087 = vadd.f32 %v986, %v1079
        %v1088 = vadd.f32 %v987, %v1080
        %v1089 = vadd.f32 %v988, %v1081
        %v1090 = vadd.f32 %v989, %v1082
        %v1091 = vadd.s32 %v418, 1
        %v1092 = vadd.s32 %v419, 1
        %v1093 = vadd.s32 %v420, 1
        %v1094 = vadd.s32 %v421, 1
        %v1095 = vadd.s32 %v422, 1
        %v1096 = vadd.s32 %v423, 1
        %v1097 = vadd.s32 %v424, 1
        %v1098 = vadd.s32 %v425, 1
        %vm1099 = vcmp.ge.s32.totalorder %v1091, 0
        %vm1100 = vcmp.ge.s32.totalorder %v1092, 0
        %vm1101 = vcmp.ge.s32.totalorder %v1093, 0
        %vm1102 = vcmp.ge.s32.totalorder %v1094, 0
        %vm1103 = vcmp.ge.s32.totalorder %v1095, 0
        %vm1104 = vcmp.ge.s32.totalorder %v1096, 0
        %vm1105 = vcmp.ge.s32.totalorder %v1097, 0
        %vm1106 = vcmp.ge.s32.totalorder %v1098, 0
        %vm1107 = vcmp.lt.s32.totalorder %v1091, 32
        %vm1108 = vcmp.lt.s32.totalorder %v1092, 32
        %vm1109 = vcmp.lt.s32.totalorder %v1093, 32
        %vm1110 = vcmp.lt.s32.totalorder %v1094, 32
        %vm1111 = vcmp.lt.s32.totalorder %v1095, 32
        %vm1112 = vcmp.lt.s32.totalorder %v1096, 32
        %vm1113 = vcmp.lt.s32.totalorder %v1097, 32
        %vm1114 = vcmp.lt.s32.totalorder %v1098, 32
        %vm1115 = vmand %vm1099, %vm1107
        %vm1116 = vmand %vm1100, %vm1108
        %vm1117 = vmand %vm1101, %vm1109
        %vm1118 = vmand %vm1102, %vm1110
        %vm1119 = vmand %vm1103, %vm1111
        %vm1120 = vmand %vm1104, %vm1112
        %vm1121 = vmand %vm1105, %vm1113
        %vm1122 = vmand %vm1106, %vm1114
        %vm1123 = vmand %vm1115, %vm476
        %vm1124 = vmand %vm1116, %vm477
        %vm1125 = vmand %vm1117, %vm478
        %vm1126 = vmand %vm1118, %vm479
        %vm1127 = vmand %vm1119, %vm480
        %vm1128 = vmand %vm1120, %vm481
        %vm1129 = vmand %vm1121, %vm482
        %vm1130 = vmand %vm1122, %vm483
        %vm1131 = vmand %vm1123, %vm492
        %vm1132 = vmand %vm1124, %vm493
        %vm1133 = vmand %vm1125, %vm494
        %vm1134 = vmand %vm1126, %vm495
        %vm1135 = vmand %vm1127, %vm496
        %vm1136 = vmand %vm1128, %vm497
        %vm1137 = vmand %vm1129, %vm498
        %vm1138 = vmand %vm1130, %vm499
        %1139 = vrot.lane.b32.xlu0 %v1010, 97
        %v1140 = vpop.permute.xlu0 %1139
        %1141 = vrot.lane.b32.xlu0 %v1011, 97
        %v1142 = vpop.permute.xlu0 %1141
        %1143 = vrot.lane.b32.xlu0 %v1012, 97
        %v1144 = vpop.permute.xlu0 %1143
        %1145 = vrot.lane.b32.xlu0 %v1013, 97
        %v1146 = vpop.permute.xlu0 %1145
        %1147 = vrot.lane.b32.xlu0 %v1014, 97
        %v1148 = vpop.permute.xlu0 %1147
        %1149 = vrot.lane.b32.xlu0 %v1015, 97
        %v1150 = vpop.permute.xlu0 %1149
        %1151 = vrot.lane.b32.xlu0 %v1016, 97
        %v1152 = vpop.permute.xlu0 %1151
        %1153 = vrot.lane.b32.xlu0 %v1017, 97
        %v1154 = vpop.permute.xlu0 %1153
        %1155 = vrot.lane.b32.xlu0 %v1018, 97
        %v1156 = vpop.permute.xlu0 %1155
        %vm1157 = vcmask 793600
        %v1158 = vsel %vm1157, %v1140, %v1142
        %v1159 = vsel %vm1157, %v1142, %v1144
        %v1160 = vsel %vm1157, %v1144, %v1146
        %v1161 = vsel %vm1157, %v1146, %v1148
        %v1162 = vsel %vm1157, %v1148, %v1150
        %v1163 = vsel %vm1157, %v1150, %v1152
        %v1164 = vsel %vm1157, %v1152, %v1154
        %v1165 = vsel %vm1157, %v1154, %v1156
        %v1174 = vsel %vm1131, %v1158, 0.0
        %v1175 = vsel %vm1132, %v1159, 0.0
        %v1176 = vsel %vm1133, %v1160, 0.0
        %v1177 = vsel %vm1134, %v1161, 0.0
        %v1178 = vsel %vm1135, %v1162, 0.0
        %v1179 = vsel %vm1136, %v1163, 0.0
        %v1180 = vsel %vm1137, %v1164, 0.0
        %v1181 = vsel %vm1138, %v1165, 0.0
        %1183 = vset.pattern.permute.xlu0 0
        %1184 = vperm.xlu0 %1183, %v405
        %v1185 = vpop.permute.xlu0 %1184
        %v1187 = vperm.slane %v1174, 0
        %v1188 = vperm.slane %v1175, 0
        %v1189 = vperm.slane %v1176, 0
        %v1190 = vperm.slane %v1177, 0
        %v1191 = vperm.slane %v1178, 0
        %v1192 = vperm.slane %v1179, 0
        %v1193 = vperm.slane %v1180, 0
        %v1194 = vperm.slane %v1181, 0
        %v1195 = vmul.f32 %v1185, %v1187
        %v1196 = vmul.f32 %v1185, %v1188
        %v1197 = vmul.f32 %v1185, %v1189
        %v1198 = vmul.f32 %v1185, %v1190
        %v1199 = vmul.f32 %v1185, %v1191
        %v1200 = vmul.f32 %v1185, %v1192
        %v1201 = vmul.f32 %v1185, %v1193
        %v1202 = vmul.f32 %v1185, %v1194
        %v1203 = vadd.f32 %v1083, %v1195
        %v1204 = vadd.f32 %v1084, %v1196
        %v1205 = vadd.f32 %v1085, %v1197
        %v1206 = vadd.f32 %v1086, %v1198
        %v1207 = vadd.f32 %v1087, %v1199
        %v1208 = vadd.f32 %v1088, %v1200
        %v1209 = vadd.f32 %v1089, %v1201
        %v1210 = vadd.f32 %v1090, %v1202
        %vm1211 = vmand %vm1115, %vm591
        %vm1212 = vmand %vm1116, %vm592
        %vm1213 = vmand %vm1117, %vm593
        %vm1214 = vmand %vm1118, %vm594
        %vm1215 = vmand %vm1119, %vm595
        %vm1216 = vmand %vm1120, %vm596
        %vm1217 = vmand %vm1121, %vm597
        %vm1218 = vmand %vm1122, %vm598
        %vm1219 = vmand %vm1211, %vm607
        %vm1220 = vmand %vm1212, %vm608
        %vm1221 = vmand %vm1213, %vm609
        %vm1222 = vmand %vm1214, %vm610
        %vm1223 = vmand %vm1215, %vm611
        %vm1224 = vmand %vm1216, %vm612
        %vm1225 = vmand %vm1217, %vm613
        %vm1226 = vmand %vm1218, %vm614
        %1227 = vrot.lane.b32.xlu0 %v1010, 96
        %v1228 = vpop.permute.xlu0 %1227
        %1229 = vrot.lane.b32.xlu0 %v1011, 96
        %v1230 = vpop.permute.xlu0 %1229
        %1231 = vrot.lane.b32.xlu0 %v1012, 96
        %v1232 = vpop.permute.xlu0 %1231
        %1233 = vrot.lane.b32.xlu0 %v1013, 96
        %v1234 = vpop.permute.xlu0 %1233
        %1235 = vrot.lane.b32.xlu0 %v1014, 96
        %v1236 = vpop.permute.xlu0 %1235
        %1237 = vrot.lane.b32.xlu0 %v1015, 96
        %v1238 = vpop.permute.xlu0 %1237
        %1239 = vrot.lane.b32.xlu0 %v1016, 96
        %v1240 = vpop.permute.xlu0 %1239
        %1241 = vrot.lane.b32.xlu0 %v1017, 96
        %v1242 = vpop.permute.xlu0 %1241
        %1243 = vrot.lane.b32.xlu0 %v1018, 96
        %v1244 = vpop.permute.xlu0 %1243
        %vm1245 = vcmask 785408
        %v1246 = vsel %vm1245, %v1228, %v1230
        %v1247 = vsel %vm1245, %v1230, %v1232
        %v1248 = vsel %vm1245, %v1232, %v1234
        %v1249 = vsel %vm1245, %v1234, %v1236
        %v1250 = vsel %vm1245, %v1236, %v1238
        %v1251 = vsel %vm1245, %v1238, %v1240
        %v1252 = vsel %vm1245, %v1240, %v1242
        %v1253 = vsel %vm1245, %v1242, %v1244
        %v1262 = vsel %vm1219, %v1246, 0.0
        %v1263 = vsel %vm1220, %v1247, 0.0
        %v1264 = vsel %vm1221, %v1248, 0.0
        %v1265 = vsel %vm1222, %v1249, 0.0
        %v1266 = vsel %vm1223, %v1250, 0.0
        %v1267 = vsel %vm1224, %v1251, 0.0
        %v1268 = vsel %vm1225, %v1252, 0.0
        %v1269 = vsel %vm1226, %v1253, 0.0
        %1271 = vset.pattern.permute.xlu0 0
        %1272 = vperm.xlu0 %1271, %v406
        %v1273 = vpop.permute.xlu0 %1272
        %v1275 = vperm.slane %v1262, 0
        %v1276 = vperm.slane %v1263, 0
        %v1277 = vperm.slane %v1264, 0
        %v1278 = vperm.slane %v1265, 0
        %v1279 = vperm.slane %v1266, 0
        %v1280 = vperm.slane %v1267, 0
        %v1281 = vperm.slane %v1268, 0
        %v1282 = vperm.slane %v1269, 0
        %v1283 = vmul.f32 %v1273, %v1275
        %v1284 = vmul.f32 %v1273, %v1276
        %v1285 = vmul.f32 %v1273, %v1277
        %v1286 = vmul.f32 %v1273, %v1278
        %v1287 = vmul.f32 %v1273, %v1279
        %v1288 = vmul.f32 %v1273, %v1280
        %v1289 = vmul.f32 %v1273, %v1281
        %v1290 = vmul.f32 %v1273, %v1282
        %v1291 = vadd.f32 %v1203, %v1283
        %v1292 = vadd.f32 %v1204, %v1284
        %v1293 = vadd.f32 %v1205, %v1285
        %v1294 = vadd.f32 %v1206, %v1286
        %v1295 = vadd.f32 %v1207, %v1287
        %v1296 = vadd.f32 %v1208, %v1288
        %v1297 = vadd.f32 %v1209, %v1289
        %v1298 = vadd.f32 %v1210, %v1290
        %vm1299 = vmand %vm1115, %vm703
        %vm1300 = vmand %vm1116, %vm704
        %vm1301 = vmand %vm1117, %vm705
        %vm1302 = vmand %vm1118, %vm706
        %vm1303 = vmand %vm1119, %vm707
        %vm1304 = vmand %vm1120, %vm708
        %vm1305 = vmand %vm1121, %vm709
        %vm1306 = vmand %vm1122, %vm710
        %vm1307 = vmand %vm1299, %vm719
        %vm1308 = vmand %vm1300, %vm720
        %vm1309 = vmand %vm1301, %vm721
        %vm1310 = vmand %vm1302, %vm722
        %vm1311 = vmand %vm1303, %vm723
        %vm1312 = vmand %vm1304, %vm724
        %vm1313 = vmand %vm1305, %vm725
        %vm1314 = vmand %vm1306, %vm726
        %1315 = vrot.lane.b32.xlu0 %v1010, 95
        %v1316 = vpop.permute.xlu0 %1315
        %1317 = vrot.lane.b32.xlu0 %v1011, 95
        %v1318 = vpop.permute.xlu0 %1317
        %1319 = vrot.lane.b32.xlu0 %v1012, 95
        %v1320 = vpop.permute.xlu0 %1319
        %1321 = vrot.lane.b32.xlu0 %v1013, 95
        %v1322 = vpop.permute.xlu0 %1321
        %1323 = vrot.lane.b32.xlu0 %v1014, 95
        %v1324 = vpop.permute.xlu0 %1323
        %1325 = vrot.lane.b32.xlu0 %v1015, 95
        %v1326 = vpop.permute.xlu0 %1325
        %1327 = vrot.lane.b32.xlu0 %v1016, 95
        %v1328 = vpop.permute.xlu0 %1327
        %1329 = vrot.lane.b32.xlu0 %v1017, 95
        %v1330 = vpop.permute.xlu0 %1329
        %1331 = vrot.lane.b32.xlu0 %v1018, 95
        %v1332 = vpop.permute.xlu0 %1331
        %vm1333 = vcmask 777216
        %v1334 = vsel %vm1333, %v1316, %v1318
        %v1335 = vsel %vm1333, %v1318, %v1320
        %v1336 = vsel %vm1333, %v1320, %v1322
        %v1337 = vsel %vm1333, %v1322, %v1324
        %v1338 = vsel %vm1333, %v1324, %v1326
        %v1339 = vsel %vm1333, %v1326, %v1328
        %v1340 = vsel %vm1333, %v1328, %v1330
        %v1341 = vsel %vm1333, %v1330, %v1332
        %v1350 = vsel %vm1307, %v1334, 0.0
        %v1351 = vsel %vm1308, %v1335, 0.0
        %v1352 = vsel %vm1309, %v1336, 0.0
        %v1353 = vsel %vm1310, %v1337, 0.0
        %v1354 = vsel %vm1311, %v1338, 0.0
        %v1355 = vsel %vm1312, %v1339, 0.0
        %v1356 = vsel %vm1313, %v1340, 0.0
        %v1357 = vsel %vm1314, %v1341, 0.0
        %1359 = vset.pattern.permute.xlu0 0
        %1360 = vperm.xlu0 %1359, %v407
        %v1361 = vpop.permute.xlu0 %1360
        %v1363 = vperm.slane %v1350, 0
        %v1364 = vperm.slane %v1351, 0
        %v1365 = vperm.slane %v1352, 0
        %v1366 = vperm.slane %v1353, 0
        %v1367 = vperm.slane %v1354, 0
        %v1368 = vperm.slane %v1355, 0
        %v1369 = vperm.slane %v1356, 0
        %v1370 = vperm.slane %v1357, 0
        %v1371 = vmul.f32 %v1361, %v1363
        %v1372 = vmul.f32 %v1361, %v1364
        %v1373 = vmul.f32 %v1361, %v1365
        %v1374 = vmul.f32 %v1361, %v1366
        %v1375 = vmul.f32 %v1361, %v1367
        %v1376 = vmul.f32 %v1361, %v1368
        %v1377 = vmul.f32 %v1361, %v1369
        %v1378 = vmul.f32 %v1361, %v1370
        %v1379 = vadd.f32 %v1291, %v1371
        %v1380 = vadd.f32 %v1292, %v1372
        %v1381 = vadd.f32 %v1293, %v1373
        %v1382 = vadd.f32 %v1294, %v1374
        %v1383 = vadd.f32 %v1295, %v1375
        %v1384 = vadd.f32 %v1296, %v1376
        %v1385 = vadd.f32 %v1297, %v1377
        %v1386 = vadd.f32 %v1298, %v1378
        %v1387 = vld [vmem:[%s2] sm:$0xf]
        %1389 = vset.pattern.permute.xlu0 0
        %1390 = vperm.xlu0 %1389, %v1387
        %v1391 = vpop.permute.xlu0 %1390
        %v1393 = vmul.f32 %v1379, %v1391
        %v1394 = vmul.f32 %v1380, %v1391
        %v1395 = vmul.f32 %v1381, %v1391
        %v1396 = vmul.f32 %v1382, %v1391
        %v1397 = vmul.f32 %v1383, %v1391
        %v1398 = vmul.f32 %v1384, %v1391
        %v1399 = vmul.f32 %v1385, %v1391
        %v1400 = vmul.f32 %v1386, %v1391
        %v1401 = vld [vmem:[%s3] sm:$0xf]
        %1403 = vset.pattern.permute.xlu0 0
        %1404 = vperm.xlu0 %1403, %v1401
        %v1405 = vpop.permute.xlu0 %1404
        %v1407 = vadd.f32 %v1393, %v1405
        %v1408 = vadd.f32 %v1394, %v1405
        %v1409 = vadd.f32 %v1395, %v1405
        %v1410 = vadd.f32 %v1396, %v1405
        %v1411 = vadd.f32 %v1397, %v1405
        %v1412 = vadd.f32 %v1398, %v1405
        %v1413 = vadd.f32 %v1399, %v1405
        %v1414 = vadd.f32 %v1400, %v1405
        %v1415 = vmax.f32 %v1407, 0.0
        %v1416 = vmax.f32 %v1408, 0.0
        %v1417 = vmax.f32 %v1409, 0.0
        %v1418 = vmax.f32 %v1410, 0.0
        %v1419 = vmax.f32 %v1411, 0.0
        %v1420 = vmax.f32 %v1412, 0.0
        %v1421 = vmax.f32 %v1413, 0.0
        %v1422 = vmax.f32 %v1414, 0.0
        %v1423 = vld [vmem:[#allocation6] sm:$0xff]
        %v1424 = vld [vmem:[#allocation6 + $0x8] sm:$0xff]
        %v1425 = vld [vmem:[#allocation6 + $0x10] sm:$0xff]
        %v1426 = vld [vmem:[#allocation6 + $0x18] sm:$0xff]
        %v1427 = vld [vmem:[#allocation6 + $0x20] sm:$0xff]
        %v1428 = vld [vmem:[#allocation6 + $0x28] sm:$0xff]
        %v1429 = vld [vmem:[#allocation6 + $0x30] sm:$0xff]
        %v1430 = vld [vmem:[#allocation6 + $0x38] sm:$0xff]
        %v1431 = vld [vmem:[#allocation6 + $0x40] sm:$0xff]
        %v1432 = vld [vmem:[#allocation6 + $0x48] sm:$0xff]
        %v1433 = vld [vmem:[#allocation6 + $0x50] sm:$0xff]
        %v1434 = vld [vmem:[#allocation6 + $0x58] sm:$0xff]
        %v1435 = vld [vmem:[#allocation6 + $0x60] sm:$0xff]
        %v1436 = vld [vmem:[#allocation6 + $0x68] sm:$0xff]
        %v1437 = vld [vmem:[#allocation6 + $0x70] sm:$0xff]
        %v1438 = vld [vmem:[#allocation6 + $0x78] sm:$0xff]
        %v1439 = vld [vmem:[#allocation6 + $0x80] sm:$0xff]
        %v1440 = vld [vmem:[#allocation6 + $0x88] sm:$0xff]
        %v1441 = vld [vmem:[#allocation6 + $0x90] sm:$0xff]
        %v1442 = vld [vmem:[#allocation6 + $0x98] sm:$0xff]
        %v1443 = vld [vmem:[#allocation6 + $0xa0] sm:$0xff]
        %v1444 = vld [vmem:[#allocation6 + $0xa8] sm:$0xff]
        %v1445 = vld [vmem:[#allocation6 + $0xb0] sm:$0xff]
        %v1446 = vld [vmem:[#allocation6 + $0xb8] sm:$0xff]
        %v1447 = vld [vmem:[#allocation6 + $0xc0] sm:$0xff]
        %v1448 = vld [vmem:[#allocation6 + $0xc8] sm:$0xff]
        %v1449 = vld [vmem:[#allocation6 + $0xd0] sm:$0xff]
        %v1450 = vld [vmem:[#allocation6 + $0xd8] sm:$0xff]
        %v1451 = vld [vmem:[#allocation6 + $0xe0] sm:$0xff]
        %v1452 = vld [vmem:[#allocation6 + $0xe8] sm:$0xff]
        %v1453 = vld [vmem:[#allocation6 + $0xf0] sm:$0xff]
        %v1454 = vld [vmem:[#allocation6 + $0xf8] sm:$0xff]
        %v1455 = vld [vmem:[#allocation6 + $0x100] sm:$0xff]
        %v1456 = vld [vmem:[#allocation6 + $0x108] sm:$0xff]
        %v1457 = vld [vmem:[#allocation6 + $0x110] sm:$0xff]
        %v1458 = vld [vmem:[#allocation6 + $0x118] sm:$0xff]
        %v1459 = vld [vmem:[#allocation6 + $0x120] sm:$0xff]
        %v1460 = vld [vmem:[#allocation6 + $0x128] sm:$0xff]
        %v1461 = vld [vmem:[#allocation6 + $0x130] sm:$0xff]
        %v1462 = vld [vmem:[#allocation6 + $0x138] sm:$0xff]
        %v1463 = vld [vmem:[#allocation6 + $0x140] sm:$0xff]
        %v1464 = vld [vmem:[#allocation6 + $0x148] sm:$0xff]
        %v1465 = vld [vmem:[#allocation6 + $0x150] sm:$0xff]
        %v1466 = vld [vmem:[#allocation6 + $0x158] sm:$0xff]
        %v1467 = vld [vmem:[#allocation6 + $0x160] sm:$0xff]
        %v1468 = vld [vmem:[#allocation6 + $0x168] sm:$0xff]
        %v1469 = vld [vmem:[#allocation6 + $0x170] sm:$0xff]
        %v1470 = vld [vmem:[#allocation6 + $0x178] sm:$0xff]
        %v1471 = vld [vmem:[#allocation6 + $0x180] sm:$0xff]
        %v1472 = vld [vmem:[#allocation6 + $0x188] sm:$0xff]
        %v1473 = vld [vmem:[#allocation6 + $0x190] sm:$0xff]
        %v1474 = vld [vmem:[#allocation6 + $0x198] sm:$0xff]
        %v1475 = vld [vmem:[#allocation6 + $0x1a0] sm:$0xff]
        %v1476 = vld [vmem:[#allocation6 + $0x1a8] sm:$0xff]
        %v1477 = vld [vmem:[#allocation6 + $0x1b0] sm:$0xff]
        %v1478 = vld [vmem:[#allocation6 + $0x1b8] sm:$0xff]
        %v1479 = vld [vmem:[#allocation6 + $0x1c0] sm:$0xff]
        %v1480 = vld [vmem:[#allocation6 + $0x1c8] sm:$0xff]
        %v1481 = vld [vmem:[#allocation6 + $0x1d0] sm:$0xff]
        %v1482 = vld [vmem:[#allocation6 + $0x1d8] sm:$0xff]
        %v1483 = vld [vmem:[#allocation6 + $0x1e0] sm:$0xff]
        %v1484 = vld [vmem:[#allocation6 + $0x1e8] sm:$0xff]
        %v1485 = vld [vmem:[#allocation6 + $0x1f0] sm:$0xff]
        %v1486 = vld [vmem:[#allocation6 + $0x1f8] sm:$0xff]
        %v1487 = vld [vmem:[#allocation6 + $0x200] sm:$0xff]
        %v1488 = vld [vmem:[#allocation6 + $0x208] sm:$0xff]
        %v1489 = vld [vmem:[#allocation6 + $0x210] sm:$0xff]
        %v1490 = vld [vmem:[#allocation6 + $0x218] sm:$0xff]
        %v1491 = vld [vmem:[#allocation6 + $0x220] sm:$0xff]
        %v1492 = vld [vmem:[#allocation6 + $0x228] sm:$0xff]
        %v1493 = vld [vmem:[#allocation6 + $0x230] sm:$0xff]
        %v1494 = vld [vmem:[#allocation6 + $0x238] sm:$0xff]
        %v1495 = vld [vmem:[#allocation6 + $0x240] sm:$0xff]
        %v1496 = vld [vmem:[#allocation6 + $0x248] sm:$0xff]
        %v1497 = vld [vmem:[#allocation6 + $0x250] sm:$0xff]
        %v1498 = vld [vmem:[#allocation6 + $0x258] sm:$0xff]
        %v1499 = vld [vmem:[#allocation6 + $0x260] sm:$0xff]
        %v1500 = vld [vmem:[#allocation6 + $0x268] sm:$0xff]
        %v1501 = vld [vmem:[#allocation6 + $0x270] sm:$0xff]
        %v1502 = vld [vmem:[#allocation6 + $0x278] sm:$0xff]
        %v1503 = vld [vmem:[#allocation6 + $0x280] sm:$0xff]
        %v1504 = vld [vmem:[#allocation6 + $0x288] sm:$0xff]
        %v1505 = vld [vmem:[#allocation6 + $0x290] sm:$0xff]
        %v1506 = vld [vmem:[#allocation6 + $0x298] sm:$0xff]
        %v1507 = vld [vmem:[#allocation6 + $0x2a0] sm:$0xff]
        %v1508 = vld [vmem:[#allocation6 + $0x2a8] sm:$0xff]
        %v1509 = vld [vmem:[#allocation6 + $0x2b0] sm:$0xff]
        %v1510 = vld [vmem:[#allocation6 + $0x2b8] sm:$0xff]
        %v1511 = vld [vmem:[#allocation6 + $0x2c0] sm:$0xff]
        %v1512 = vld [vmem:[#allocation6 + $0x2c8] sm:$0xff]
        %v1513 = vld [vmem:[#allocation6 + $0x2d0] sm:$0xff]
        %v1514 = vld [vmem:[#allocation6 + $0x2d8] sm:$0xff]
        %v1515 = vld [vmem:[#allocation6 + $0x2e0] sm:$0xff]
        %v1516 = vld [vmem:[#allocation6 + $0x2e8] sm:$0xff]
        %v1517 = vld [vmem:[#allocation6 + $0x2f0] sm:$0xff]
        %v1518 = vld [vmem:[#allocation6 + $0x2f8] sm:$0xff]
        %v1519 = vld [vmem:[#allocation6 + $0x300] sm:$0xff]
        %v1520 = vld [vmem:[#allocation6 + $0x308] sm:$0xff]
        %v1521 = vld [vmem:[#allocation6 + $0x310] sm:$0xff]
        %v1522 = vld [vmem:[#allocation6 + $0x318] sm:$0xff]
        %v1523 = vld [vmem:[#allocation6 + $0x320] sm:$0xff]
        %v1524 = vld [vmem:[#allocation6 + $0x328] sm:$0xff]
        %v1525 = vld [vmem:[#allocation6 + $0x330] sm:$0xff]
        %v1526 = vld [vmem:[#allocation6 + $0x338] sm:$0xff]
        %v1527 = vld [vmem:[#allocation6 + $0x340] sm:$0xff]
        %v1528 = vld [vmem:[#allocation6 + $0x348] sm:$0xff]
        %v1529 = vld [vmem:[#allocation6 + $0x350] sm:$0xff]
        %v1530 = vld [vmem:[#allocation6 + $0x358] sm:$0xff]
        %v1531 = vld [vmem:[#allocation6 + $0x360] sm:$0xff]
        %v1532 = vld [vmem:[#allocation6 + $0x368] sm:$0xff]
        %v1533 = vld [vmem:[#allocation6 + $0x370] sm:$0xff]
        %v1534 = vld [vmem:[#allocation6 + $0x378] sm:$0xff]
        %v1535 = vld [vmem:[#allocation6 + $0x380] sm:$0xff]
        %v1536 = vld [vmem:[#allocation6 + $0x388] sm:$0xff]
        %v1537 = vld [vmem:[#allocation6 + $0x390] sm:$0xff]
        %v1538 = vld [vmem:[#allocation6 + $0x398] sm:$0xff]
        %v1539 = vld [vmem:[#allocation6 + $0x3a0] sm:$0xff]
        %v1540 = vld [vmem:[#allocation6 + $0x3a8] sm:$0xff]
        %v1541 = vld [vmem:[#allocation6 + $0x3b0] sm:$0xff]
        %v1542 = vld [vmem:[#allocation6 + $0x3b8] sm:$0xff]
        %v1543 = vld [vmem:[#allocation6 + $0x3c0] sm:$0xff]
        %v1544 = vld [vmem:[#allocation6 + $0x3c8] sm:$0xff]
        %v1545 = vld [vmem:[#allocation6 + $0x3d0] sm:$0xff]
        %v1546 = vld [vmem:[#allocation6 + $0x3d8] sm:$0xff]
        %v1547 = vld [vmem:[#allocation6 + $0x3e0] sm:$0xff]
        %v1548 = vld [vmem:[#allocation6 + $0x3e8] sm:$0xff]
        %v1549 = vld [vmem:[#allocation6 + $0x3f0] sm:$0xff]
        %v1550 = vld [vmem:[#allocation6 + $0x3f8] sm:$0xff]
        %v1551 = vld [vmem:[#allocation6 + $0x400] sm:$0xff]
        %v1552 = vld [vmem:[#allocation6 + $0x408] sm:$0xff]
        %v1553 = vld [vmem:[#allocation6 + $0x410] sm:$0xff]
        %v1554 = vld [vmem:[#allocation6 + $0x418] sm:$0xff]
        %v1555 = vld [vmem:[#allocation6 + $0x420] sm:$0xff]
        %v1556 = vld [vmem:[#allocation6 + $0x428] sm:$0xff]
        %v1557 = vld [vmem:[#allocation6 + $0x430] sm:$0xff]
        %v1558 = vld [vmem:[#allocation6 + $0x438] sm:$0xff]
        %v1559 = vld [vmem:[#allocation6 + $0x440] sm:$0xff]
        %v1560 = vld [vmem:[#allocation6 + $0x448] sm:$0xff]
        %v1561 = vld [vmem:[#allocation6 + $0x450] sm:$0xff]
        %v1562 = vld [vmem:[#allocation6 + $0x458] sm:$0xff]
        %v1563 = vld [vmem:[#allocation6 + $0x460] sm:$0xff]
        %v1564 = vld [vmem:[#allocation6 + $0x468] sm:$0xff]
        %v1565 = vld [vmem:[#allocation6 + $0x470] sm:$0xff]
        %v1566 = vld [vmem:[#allocation6 + $0x478] sm:$0xff]
        %v1567 = vld [vmem:[#allocation6 + $0x480] sm:$0xff]
        %v1568 = vld [vmem:[#allocation6 + $0x488] sm:$0xff]
        %v1569 = vld [vmem:[#allocation6 + $0x490] sm:$0xff]
        %v1570 = vld [vmem:[#allocation6 + $0x498] sm:$0xff]
        %v1571 = vld [vmem:[#allocation6 + $0x4a0] sm:$0xff]
        %v1572 = vld [vmem:[#allocation6 + $0x4a8] sm:$0xff]
        %v1573 = vld [vmem:[#allocation6 + $0x4b0] sm:$0xff]
        %v1574 = vld [vmem:[#allocation6 + $0x4b8] sm:$0xff]
        %v1575 = vld [vmem:[#allocation6 + $0x4c0] sm:$0xff]
        %v1576 = vld [vmem:[#allocation6 + $0x4c8] sm:$0xff]
        %v1577 = vld [vmem:[#allocation6 + $0x4d0] sm:$0xff]
        %v1578 = vld [vmem:[#allocation6 + $0x4d8] sm:$0xff]
        %v1579 = vld [vmem:[#allocation6 + $0x4e0] sm:$0xff]
        %v1580 = vld [vmem:[#allocation6 + $0x4e8] sm:$0xff]
        %v1581 = vld [vmem:[#allocation6 + $0x4f0] sm:$0xff]
        %v1582 = vld [vmem:[#allocation6 + $0x4f8] sm:$0xff]
        %v1583 = vld [vmem:[#allocation6 + $0x500] sm:$0xff]
        %v1584 = vld [vmem:[#allocation6 + $0x508] sm:$0xff]
        %v1585 = vld [vmem:[#allocation6 + $0x510] sm:$0xff]
        %v1586 = vld [vmem:[#allocation6 + $0x518] sm:$0xff]
        %v1587 = vld [vmem:[#allocation6 + $0x520] sm:$0xff]
        %v1588 = vld [vmem:[#allocation6 + $0x528] sm:$0xff]
        %v1589 = vld [vmem:[#allocation6 + $0x530] sm:$0xff]
        %v1590 = vld [vmem:[#allocation6 + $0x538] sm:$0xff]
        %v1591 = vld [vmem:[#allocation6 + $0x540] sm:$0xff]
        %v1592 = vld [vmem:[#allocation6 + $0x548] sm:$0xff]
        %v1593 = vld [vmem:[#allocation6 + $0x550] sm:$0xff]
        %v1594 = vld [vmem:[#allocation6 + $0x558] sm:$0xff]
        %v1595 = vld [vmem:[#allocation6 + $0x560] sm:$0xff]
        %v1596 = vld [vmem:[#allocation6 + $0x568] sm:$0xff]
        %v1597 = vld [vmem:[#allocation6 + $0x570] sm:$0xff]
        %v1598 = vld [vmem:[#allocation6 + $0x578] sm:$0xff]
        %v1599 = vld [vmem:[#allocation6 + $0x580] sm:$0xff]
        %v1600 = vld [vmem:[#allocation6 + $0x588] sm:$0xff]
        %v1601 = vld [vmem:[#allocation6 + $0x590] sm:$0xff]
        %v1602 = vld [vmem:[#allocation6 + $0x598] sm:$0xff]
        %v1603 = vld [vmem:[#allocation6 + $0x5a0] sm:$0xff]
        %v1604 = vld [vmem:[#allocation6 + $0x5a8] sm:$0xff]
        %v1605 = vld [vmem:[#allocation6 + $0x5b0] sm:$0xff]
        %v1606 = vld [vmem:[#allocation6 + $0x5b8] sm:$0xff]
        %v1607 = vld [vmem:[#allocation6 + $0x5c0] sm:$0xff]
        %v1608 = vld [vmem:[#allocation6 + $0x5c8] sm:$0xff]
        %v1609 = vld [vmem:[#allocation6 + $0x5d0] sm:$0xff]
        %v1610 = vld [vmem:[#allocation6 + $0x5d8] sm:$0xff]
        %v1611 = vld [vmem:[#allocation6 + $0x5e0] sm:$0xff]
        %v1612 = vld [vmem:[#allocation6 + $0x5e8] sm:$0xff]
        %v1613 = vld [vmem:[#allocation6 + $0x5f0] sm:$0xff]
        %v1614 = vld [vmem:[#allocation6 + $0x5f8] sm:$0xff]
        %v1615 = vld [vmem:[#allocation6 + $0x600] sm:$0xff]
        %v1616 = vld [vmem:[#allocation6 + $0x608] sm:$0xff]
        %v1617 = vld [vmem:[#allocation6 + $0x610] sm:$0xff]
        %v1618 = vld [vmem:[#allocation6 + $0x618] sm:$0xff]
        %v1619 = vld [vmem:[#allocation6 + $0x620] sm:$0xff]
        %v1620 = vld [vmem:[#allocation6 + $0x628] sm:$0xff]
        %v1621 = vld [vmem:[#allocation6 + $0x630] sm:$0xff]
        %v1622 = vld [vmem:[#allocation6 + $0x638] sm:$0xff]
        %v1623 = vld [vmem:[#allocation6 + $0x640] sm:$0xff]
        %v1624 = vld [vmem:[#allocation6 + $0x648] sm:$0xff]
        %v1625 = vld [vmem:[#allocation6 + $0x650] sm:$0xff]
        %v1626 = vld [vmem:[#allocation6 + $0x658] sm:$0xff]
        %v1627 = vld [vmem:[#allocation6 + $0x660] sm:$0xff]
        %v1628 = vld [vmem:[#allocation6 + $0x668] sm:$0xff]
        %v1629 = vld [vmem:[#allocation6 + $0x670] sm:$0xff]
        %v1630 = vld [vmem:[#allocation6 + $0x678] sm:$0xff]
        %v1631 = vld [vmem:[#allocation6 + $0x680] sm:$0xff]
        %v1632 = vld [vmem:[#allocation6 + $0x688] sm:$0xff]
        %v1633 = vld [vmem:[#allocation6 + $0x690] sm:$0xff]
        %v1634 = vld [vmem:[#allocation6 + $0x698] sm:$0xff]
        %v1635 = vld [vmem:[#allocation6 + $0x6a0] sm:$0xff]
        %v1636 = vld [vmem:[#allocation6 + $0x6a8] sm:$0xff]
        %v1637 = vld [vmem:[#allocation6 + $0x6b0] sm:$0xff]
        %v1638 = vld [vmem:[#allocation6 + $0x6b8] sm:$0xff]
        %v1639 = vld [vmem:[#allocation6 + $0x6c0] sm:$0xff]
        %v1640 = vld [vmem:[#allocation6 + $0x6c8] sm:$0xff]
        %v1641 = vld [vmem:[#allocation6 + $0x6d0] sm:$0xff]
        %v1642 = vld [vmem:[#allocation6 + $0x6d8] sm:$0xff]
        %v1643 = vld [vmem:[#allocation6 + $0x6e0] sm:$0xff]
        %v1644 = vld [vmem:[#allocation6 + $0x6e8] sm:$0xff]
        %v1645 = vld [vmem:[#allocation6 + $0x6f0] sm:$0xff]
        %v1646 = vld [vmem:[#allocation6 + $0x6f8] sm:$0xff]
        %v1647 = vld [vmem:[#allocation6 + $0x700] sm:$0xff]
        %v1648 = vld [vmem:[#allocation6 + $0x708] sm:$0xff]
        %v1649 = vld [vmem:[#allocation6 + $0x710] sm:$0xff]
        %v1650 = vld [vmem:[#allocation6 + $0x718] sm:$0xff]
        %v1651 = vld [vmem:[#allocation6 + $0x720] sm:$0xff]
        %v1652 = vld [vmem:[#allocation6 + $0x728] sm:$0xff]
        %v1653 = vld [vmem:[#allocation6 + $0x730] sm:$0xff]
        %v1654 = vld [vmem:[#allocation6 + $0x738] sm:$0xff]
        %v1655 = vld [vmem:[#allocation6 + $0x740] sm:$0xff]
        %v1656 = vld [vmem:[#allocation6 + $0x748] sm:$0xff]
        %v1657 = vld [vmem:[#allocation6 + $0x750] sm:$0xff]
        %v1658 = vld [vmem:[#allocation6 + $0x758] sm:$0xff]
        %v1659 = vld [vmem:[#allocation6 + $0x760] sm:$0xff]
        %v1660 = vld [vmem:[#allocation6 + $0x768] sm:$0xff]
        %v1661 = vld [vmem:[#allocation6 + $0x770] sm:$0xff]
        %v1662 = vld [vmem:[#allocation6 + $0x778] sm:$0xff]
        %v1663 = vld [vmem:[#allocation6 + $0x780] sm:$0xff]
        %v1664 = vld [vmem:[#allocation6 + $0x788] sm:$0xff]
        %v1665 = vld [vmem:[#allocation6 + $0x790] sm:$0xff]
        %v1666 = vld [vmem:[#allocation6 + $0x798] sm:$0xff]
        %v1667 = vld [vmem:[#allocation6 + $0x7a0] sm:$0xff]
        %v1668 = vld [vmem:[#allocation6 + $0x7a8] sm:$0xff]
        %v1669 = vld [vmem:[#allocation6 + $0x7b0] sm:$0xff]
        %v1670 = vld [vmem:[#allocation6 + $0x7b8] sm:$0xff]
        %v1671 = vld [vmem:[#allocation6 + $0x7c0] sm:$0xff]
        %v1672 = vld [vmem:[#allocation6 + $0x7c8] sm:$0xff]
        %v1673 = vld [vmem:[#allocation6 + $0x7d0] sm:$0xff]
        %v1674 = vld [vmem:[#allocation6 + $0x7d8] sm:$0xff]
        %v1675 = vld [vmem:[#allocation6 + $0x7e0] sm:$0xff]
        %v1676 = vld [vmem:[#allocation6 + $0x7e8] sm:$0xff]
        %v1677 = vld [vmem:[#allocation6 + $0x7f0] sm:$0xff]
        %v1678 = vld [vmem:[#allocation6 + $0x7f8] sm:$0xff]
        %1679 = vst [vmem:[#allocation3 + $0x24] sm:$0xf] 0.0
        %v1688 = vrot.slane %v1416, 4
        %v1689 = vrot.slane %v1418, 4
        %v1690 = vrot.slane %v1420, 4
        %v1691 = vrot.slane %v1422, 4
        %vm1692 = vcmask 1043456
        %v1693 = vsel %vm1692, %v1415, %v1688
        %v1694 = vsel %vm1692, %v1417, %v1689
        %v1695 = vsel %vm1692, %v1419, %v1690
        %v1696 = vsel %vm1692, %v1421, %v1691
        %1701 = vst [vmem:[#allocation3 + $0x4] sm:$0xff] %v1693
        %1702 = vst [vmem:[#allocation3 + $0xc] sm:$0xff] %v1694
        %1703 = vst [vmem:[#allocation3 + $0x14] sm:$0xff] %v1695
        %1704 = vst [vmem:[#allocation3 + $0x1c] sm:$0xff] %v1696
        %v1705 = vld [vmem:[#allocation3 + $0x4] sm:$0xff]
        %v1706 = vld [vmem:[#allocation3 + $0xc] sm:$0xff]
        %v1707 = vld [vmem:[#allocation3 + $0x14] sm:$0xff]
        %v1708 = vld [vmem:[#allocation3 + $0x1c] sm:$0xff]
        %v1709 = vld [vmem:[#allocation3 + $0x24] sm:$0xf]
        %1715 = vst [vmem:[#allocation1] ss:$2 sm:$0xff] %v1705
        %s1716 = scalar_lea.vmem [#allocation1], 16
        %1717 = vst [vmem:[%s1716] ss:$2 sm:$0xff] %v1706
        %s1718 = scalar_lea.vmem [#allocation1], 32
        %1719 = vst [vmem:[%s1718] ss:$2 sm:$0xff] %v1707
        %s1720 = scalar_lea.vmem [#allocation1], 48
        %1721 = vst [vmem:[%s1720] ss:$2 sm:$0xff] %v1708
        %v1722 = vld.sshfl [vmem:[#allocation1] sm:$0xff pattern:$0x75316420]
        %v1723 = vld.sshfl [vmem:[#allocation1 + $0x8] sm:$0xff pattern:$0x75316420]
        %v1724 = vld.sshfl [vmem:[#allocation1 + $0x10] sm:$0xff pattern:$0x75316420]
        %v1725 = vld.sshfl [vmem:[#allocation1 + $0x18] sm:$0xff pattern:$0x75316420]
        %v1726 = vld.sshfl [vmem:[#allocation1 + $0x20] sm:$0xff pattern:$0x75316420]
        %v1727 = vld.sshfl [vmem:[#allocation1 + $0x28] sm:$0xff pattern:$0x75316420]
        %v1728 = vld.sshfl [vmem:[#allocation1 + $0x30] sm:$0xff pattern:$0x75316420]
        %v1729 = vld.sshfl [vmem:[#allocation1 + $0x38] sm:$0xff pattern:$0x75316420]
        %1730 = vst [vmem:[#allocation1] ss:$2 sm:$0xff] %v1709
        %v1731 = vld.sshfl [vmem:[#allocation1] sm:$0xff pattern:$0x75316420]
        %1732 = vrot.lane.b32.xlu0 %v1722, 127
        %v1733 = vpop.permute.xlu0 %1732
        %1734 = vrot.lane.b32.xlu0 %v1723, 127
        %v1735 = vpop.permute.xlu0 %1734
        %1736 = vrot.lane.b32.xlu0 %v1724, 127
        %v1737 = vpop.permute.xlu0 %1736
        %1738 = vrot.lane.b32.xlu0 %v1725, 127
        %v1739 = vpop.permute.xlu0 %1738
        %1740 = vrot.lane.b32.xlu0 %v1726, 127
        %v1741 = vpop.permute.xlu0 %1740
        %1742 = vrot.lane.b32.xlu0 %v1727, 127
        %v1743 = vpop.permute.xlu0 %1742
        %1744 = vrot.lane.b32.xlu0 %v1728, 127
        %v1745 = vpop.permute.xlu0 %1744
        %1746 = vrot.lane.b32.xlu0 %v1729, 127
        %v1747 = vpop.permute.xlu0 %1746
        %1748 = vrot.lane.b32.xlu0 %v1731, 127
        %v1749 = vpop.permute.xlu0 %1748
        %v1750 = vsel %vm1037, %v1733, %v1735
        %v1751 = vsel %vm1037, %v1735, %v1737
        %v1752 = vsel %vm1037, %v1737, %v1739
        %v1753 = vsel %vm1037, %v1739, %v1741
        %v1754 = vsel %vm1037, %v1741, %v1743
        %v1755 = vsel %vm1037, %v1743, %v1745
        %v1756 = vsel %vm1037, %v1745, %v1747
        %v1757 = vsel %vm1037, %v1747, %v1749
        %v1766 = vmax.f32 %v1415, %v1750
        %v1767 = vmax.f32 %v1416, %v1751
        %v1768 = vmax.f32 %v1417, %v1752
        %v1769 = vmax.f32 %v1418, %v1753
        %v1770 = vmax.f32 %v1419, %v1754
        %v1771 = vmax.f32 %v1420, %v1755
        %v1772 = vmax.f32 %v1421, %v1756
        %v1773 = vmax.f32 %v1422, %v1757
        %1774 = vrot.lane.b32.xlu0 %v1705, 127
        %v1775 = vpop.permute.xlu0 %1774
        %1776 = vrot.lane.b32.xlu0 %v1706, 127
        %v1777 = vpop.permute.xlu0 %1776
        %1778 = vrot.lane.b32.xlu0 %v1707, 127
        %v1779 = vpop.permute.xlu0 %1778
        %1780 = vrot.lane.b32.xlu0 %v1708, 127
        %v1781 = vpop.permute.xlu0 %1780
        %1782 = vrot.lane.b32.xlu0 %v1709, 127
        %v1783 = vpop.permute.xlu0 %1782
        %v1784 = vrot.slane %v1775, 4
        %v1785 = vrot.slane %v1777, 4
        %v1786 = vrot.slane %v1779, 4
        %v1787 = vrot.slane %v1781, 4
        %v1788 = vrot.slane %v1783, 4
        %v1789 = vsel %vm1692, %v1784, %v1785
        %v1790 = vsel %vm1037, %v1775, %v1789
        %v1791 = vsel %vm1692, %v1785, %v1786
        %v1792 = vsel %vm1037, %v1777, %v1791
        %v1793 = vsel %vm1692, %v1786, %v1787
        %v1794 = vsel %vm1037, %v1779, %v1793
        %v1795 = vsel %vm1692, %v1787, %v1788
        %v1796 = vsel %vm1037, %v1781, %v1795
        %v1802 = vmax.f32 %v1705, %v1790
        %v1803 = vmax.f32 %v1706, %v1792
        %v1804 = vmax.f32 %v1707, %v1794
        %v1805 = vmax.f32 %v1708, %v1796
        %v1806 = vmax.f32 %v1709, %v1783
        %1812 = vst [vmem:[#allocation1] ss:$2 sm:$0xff] %v1802
        %s1813 = scalar_lea.vmem [#allocation1], 16
        %1814 = vst [vmem:[%s1813] ss:$2 sm:$0xff] %v1803
        %s1815 = scalar_lea.vmem [#allocation1], 32
        %1816 = vst [vmem:[%s1815] ss:$2 sm:$0xff] %v1804
        %s1817 = scalar_lea.vmem [#allocation1], 48
        %1818 = vst [vmem:[%s1817] ss:$2 sm:$0xff] %v1805
        %v1819 = vld.sshfl [vmem:[#allocation1] sm:$0xff pattern:$0x75316420]
        %v1820 = vld.sshfl [vmem:[#allocation1 + $0x8] sm:$0xff pattern:$0x75316420]
        %v1821 = vld.sshfl [vmem:[#allocation1 + $0x10] sm:$0xff pattern:$0x75316420]
        %v1822 = vld.sshfl [vmem:[#allocation1 + $0x18] sm:$0xff pattern:$0x75316420]
        %v1823 = vld.sshfl [vmem:[#allocation1 + $0x20] sm:$0xff pattern:$0x75316420]
        %v1824 = vld.sshfl [vmem:[#allocation1 + $0x28] sm:$0xff pattern:$0x75316420]
        %v1825 = vld.sshfl [vmem:[#allocation1 + $0x30] sm:$0xff pattern:$0x75316420]
        %v1826 = vld.sshfl [vmem:[#allocation1 + $0x38] sm:$0xff pattern:$0x75316420]
        %1827 = vst [vmem:[#allocation1] ss:$2 sm:$0xff] %v1806
        %v1828 = vld.sshfl [vmem:[#allocation1] sm:$0xff pattern:$0x75316420]
        %1829 = vrot.lane.b32.xlu0 %v1819, 96
        %v1830 = vpop.permute.xlu0 %1829
        %1831 = vrot.lane.b32.xlu0 %v1820, 96
        %v1832 = vpop.permute.xlu0 %1831
        %1833 = vrot.lane.b32.xlu0 %v1821, 96
        %v1834 = vpop.permute.xlu0 %1833
        %1835 = vrot.lane.b32.xlu0 %v1822, 96
        %v1836 = vpop.permute.xlu0 %1835
        %1837 = vrot.lane.b32.xlu0 %v1823, 96
        %v1838 = vpop.permute.xlu0 %1837
        %1839 = vrot.lane.b32.xlu0 %v1824, 96
        %v1840 = vpop.permute.xlu0 %1839
        %1841 = vrot.lane.b32.xlu0 %v1825, 96
        %v1842 = vpop.permute.xlu0 %1841
        %1843 = vrot.lane.b32.xlu0 %v1826, 96
        %v1844 = vpop.permute.xlu0 %1843
        %1845 = vrot.lane.b32.xlu0 %v1828, 96
        %v1846 = vpop.permute.xlu0 %1845
        %v1847 = vsel %vm1245, %v1830, %v1832
        %v1848 = vsel %vm1245, %v1832, %v1834
        %v1849 = vsel %vm1245, %v1834, %v1836
        %v1850 = vsel %vm1245, %v1836, %v1838
        %v1851 = vsel %vm1245, %v1838, %v1840
        %v1852 = vsel %vm1245, %v1840, %v1842
        %v1853 = vsel %vm1245, %v1842, %v1844
        %v1854 = vsel %vm1245, %v1844, %v1846
        %v1863 = vmax.f32 %v1766, %v1847
        %v1864 = vmax.f32 %v1767, %v1848
        %v1865 = vmax.f32 %v1768, %v1849
        %v1866 = vmax.f32 %v1769, %v1850
        %v1867 = vmax.f32 %v1770, %v1851
        %v1868 = vmax.f32 %v1771, %v1852
        %v1869 = vmax.f32 %v1772, %v1853
        %v1870 = vmax.f32 %v1773, %v1854
        %1871 = vmatpush.msra.mxu0 %v1453
        %1872 = vmatpush.msra.mxu0 %v1451
        %1873 = vmatpush.msra.mxu0 %v1449
        %1874 = vmatpush.msra.mxu0 %v1447
        %1875 = vmatpush.msra.mxu0 %v1445
        %1876 = vmatpush.msra.mxu0 %v1443
        %1877 = vmatpush.msra.mxu0 %v1441
        %1878 = vmatpush.msra.mxu0 %v1439
        %1879 = vmatpush.msra.mxu0 %v1437
        %1880 = vmatpush.msra.mxu0 %v1435
        %1881 = vmatpush.msra.mxu0 %v1433
        %1882 = vmatpush.msra.mxu0 %v1431
        %1883 = vmatpush.msra.mxu0 %v1429
        %1884 = vmatpush.msra.mxu0 %v1427
        %1885 = vmatpush.msra.mxu0 %v1425
        %1886 = vmatpush.msra.mxu0 %v1423
        %1887 = vmatmul.f32.gmra.mxu0 %v1863
        %v1888 = vpop.f32.mrf.mxu0
        %v1889 = vadd.f32 0.0, %v1888
        %1890 = vdwg.mxu0
        %1891 = vmatpush.msra.mxu0 %v1485
        %1892 = vmatpush.msra.mxu0 %v1483
        %1893 = vmatpush.msra.mxu0 %v1481
        %1894 = vmatpush.msra.mxu0 %v1479
        %1895 = vmatpush.msra.mxu0 %v1477
        %1896 = vmatpush.msra.mxu0 %v1475
        %1897 = vmatpush.msra.mxu0 %v1473
        %1898 = vmatpush.msra.mxu0 %v1471
        %1899 = vmatpush.msra.mxu0 %v1469
        %1900 = vmatpush.msra.mxu0 %v1467
        %1901 = vmatpush.msra.mxu0 %v1465
        %1902 = vmatpush.msra.mxu0 %v1463
        %1903 = vmatpush.msra.mxu0 %v1461
        %1904 = vmatpush.msra.mxu0 %v1459
        %1905 = vmatpush.msra.mxu0 %v1457
        %1906 = vmatpush.msra.mxu0 %v1455
        %1907 = vmatmul.f32.gmra.mxu0 %v1864
        %v1908 = vpop.f32.mrf.mxu0
        %v1909 = vadd.f32 %v1889, %v1908
        %1910 = vdwg.mxu0
        %1911 = vmatpush.msra.mxu0 %v1517
        %1912 = vmatpush.msra.mxu0 %v1515
        %1913 = vmatpush.msra.mxu0 %v1513
        %1914 = vmatpush.msra.mxu0 %v1511
        %1915 = vmatpush.msra.mxu0 %v1509
        %1916 = vmatpush.msra.mxu0 %v1507
        %1917 = vmatpush.msra.mxu0 %v1505
        %1918 = vmatpush.msra.mxu0 %v1503
        %1919 = vmatpush.msra.mxu0 %v1501
        %1920 = vmatpush.msra.mxu0 %v1499
        %1921 = vmatpush.msra.mxu0 %v1497
        %1922 = vmatpush.msra.mxu0 %v1495
        %1923 = vmatpush.msra.mxu0 %v1493
        %1924 = vmatpush.msra.mxu0 %v1491
        %1925 = vmatpush.msra.mxu0 %v1489
        %1926 = vmatpush.msra.mxu0 %v1487
        %1927 = vmatmul.f32.gmra.mxu0 %v1865
        %v1928 = vpop.f32.mrf.mxu0
        %v1929 = vadd.f32 %v1909, %v1928
        %1930 = vdwg.mxu0
        %1931 = vmatpush.msra.mxu0 %v1549
        %1932 = vmatpush.msra.mxu0 %v1547
        %1933 = vmatpush.msra.mxu0 %v1545
        %1934 = vmatpush.msra.mxu0 %v1543
        %1935 = vmatpush.msra.mxu0 %v1541
        %1936 = vmatpush.msra.mxu0 %v1539
        %1937 = vmatpush.msra.mxu0 %v1537
        %1938 = vmatpush.msra.mxu0 %v1535
        %1939 = vmatpush.msra.mxu0 %v1533
        %1940 = vmatpush.msra.mxu0 %v1531
        %1941 = vmatpush.msra.mxu0 %v1529
        %1942 = vmatpush.msra.mxu0 %v1527
        %1943 = vmatpush.msra.mxu0 %v1525
        %1944 = vmatpush.msra.mxu0 %v1523
        %1945 = vmatpush.msra.mxu0 %v1521
        %1946 = vmatpush.msra.mxu0 %v1519
        %1947 = vmatmul.f32.gmra.mxu0 %v1866
        %v1948 = vpop.f32.mrf.mxu0
        %v1949 = vadd.f32 %v1929, %v1948
        %1950 = vdwg.mxu0
        %1951 = vmatpush.msra.mxu0 %v1581
        %1952 = vmatpush.msra.mxu0 %v1579
        %1953 = vmatpush.msra.mxu0 %v1577
        %1954 = vmatpush.msra.mxu0 %v1575
        %1955 = vmatpush.msra.mxu0 %v1573
        %1956 = vmatpush.msra.mxu0 %v1571
        %1957 = vmatpush.msra.mxu0 %v1569
        %1958 = vmatpush.msra.mxu0 %v1567
        %1959 = vmatpush.msra.mxu0 %v1565
        %1960 = vmatpush.msra.mxu0 %v1563
        %1961 = vmatpush.msra.mxu0 %v1561
        %1962 = vmatpush.msra.mxu0 %v1559
        %1963 = vmatpush.msra.mxu0 %v1557
        %1964 = vmatpush.msra.mxu0 %v1555
        %1965 = vmatpush.msra.mxu0 %v1553
        %1966 = vmatpush.msra.mxu0 %v1551
        %1967 = vmatmul.f32.gmra.mxu0 %v1867
        %v1968 = vpop.f32.mrf.mxu0
        %v1969 = vadd.f32 %v1949, %v1968
        %1970 = vdwg.mxu0
        %1971 = vmatpush.msra.mxu0 %v1613
        %1972 = vmatpush.msra.mxu0 %v1611
        %1973 = vmatpush.msra.mxu0 %v1609
        %1974 = vmatpush.msra.mxu0 %v1607
        %1975 = vmatpush.msra.mxu0 %v1605
        %1976 = vmatpush.msra.mxu0 %v1603
        %1977 = vmatpush.msra.mxu0 %v1601
        %1978 = vmatpush.msra.mxu0 %v1599
        %1979 = vmatpush.msra.mxu0 %v1597
        %1980 = vmatpush.msra.mxu0 %v1595
        %1981 = vmatpush.msra.mxu0 %v1593
        %1982 = vmatpush.msra.mxu0 %v1591
        %1983 = vmatpush.msra.mxu0 %v1589
        %1984 = vmatpush.msra.mxu0 %v1587
        %1985 = vmatpush.msra.mxu0 %v1585
        %1986 = vmatpush.msra.mxu0 %v1583
        %1987 = vmatmul.f32.gmra.mxu0 %v1868
        %v1988 = vpop.f32.mrf.mxu0
        %v1989 = vadd.f32 %v1969, %v1988
        %1990 = vdwg.mxu0
        %1991 = vmatpush.msra.mxu0 %v1645
        %1992 = vmatpush.msra.mxu0 %v1643
        %1993 = vmatpush.msra.mxu0 %v1641
        %1994 = vmatpush.msra.mxu0 %v1639
        %1995 = vmatpush.msra.mxu0 %v1637
        %1996 = vmatpush.msra.mxu0 %v1635
        %1997 = vmatpush.msra.mxu0 %v1633
        %1998 = vmatpush.msra.mxu0 %v1631
        %1999 = vmatpush.msra.mxu0 %v1629
        %2000 = vmatpush.msra.mxu0 %v1627
        %2001 = vmatpush.msra.mxu0 %v1625
        %2002 = vmatpush.msra.mxu0 %v1623
        %2003 = vmatpush.msra.mxu0 %v1621
        %2004 = vmatpush.msra.mxu0 %v1619
        %2005 = vmatpush.msra.mxu0 %v1617
        %2006 = vmatpush.msra.mxu0 %v1615
        %2007 = vmatmul.f32.gmra.mxu0 %v1869
        %v2008 = vpop.f32.mrf.mxu0
        %v2009 = vadd.f32 %v1989, %v2008
        %2010 = vdwg.mxu0
        %2011 = vmatpush.msra.mxu0 %v1677
        %2012 = vmatpush.msra.mxu0 %v1675
        %2013 = vmatpush.msra.mxu0 %v1673
        %2014 = vmatpush.msra.mxu0 %v1671
        %2015 = vmatpush.msra.mxu0 %v1669
        %2016 = vmatpush.msra.mxu0 %v1667
        %2017 = vmatpush.msra.mxu0 %v1665
        %2018 = vmatpush.msra.mxu0 %v1663
        %2019 = vmatpush.msra.mxu0 %v1661
        %2020 = vmatpush.msra.mxu0 %v1659
        %2021 = vmatpush.msra.mxu0 %v1657
        %2022 = vmatpush.msra.mxu0 %v1655
        %2023 = vmatpush.msra.mxu0 %v1653
        %2024 = vmatpush.msra.mxu0 %v1651
        %2025 = vmatpush.msra.mxu0 %v1649
        %2026 = vmatpush.msra.mxu0 %v1647
        %2027 = vmatmul.f32.gmra.mxu0 %v1870
        %v2028 = vpop.f32.mrf.mxu0
        %v2029 = vadd.f32 %v2009, %v2028
        %2030 = vdwg.mxu0
        %2031 = vmatpush.msra.mxu0 %v1454
        %2032 = vmatpush.msra.mxu0 %v1452
        %2033 = vmatpush.msra.mxu0 %v1450
        %2034 = vmatpush.msra.mxu0 %v1448
        %2035 = vmatpush.msra.mxu0 %v1446
        %2036 = vmatpush.msra.mxu0 %v1444
        %2037 = vmatpush.msra.mxu0 %v1442
        %2038 = vmatpush.msra.mxu0 %v1440
        %2039 = vmatpush.msra.mxu0 %v1438
        %2040 = vmatpush.msra.mxu0 %v1436
        %2041 = vmatpush.msra.mxu0 %v1434
        %2042 = vmatpush.msra.mxu0 %v1432
        %2043 = vmatpush.msra.mxu0 %v1430
        %2044 = vmatpush.msra.mxu0 %v1428
        %2045 = vmatpush.msra.mxu0 %v1426
        %2046 = vmatpush.msra.mxu0 %v1424
        %2047 = vmatmul.f32.gmra.mxu0 %v1863
        %v2048 = vpop.f32.mrf.mxu0
        %v2049 = vadd.f32 0.0, %v2048
        %2050 = vdwg.mxu0
        %2051 = vmatpush.msra.mxu0 %v1486
        %2052 = vmatpush.msra.mxu0 %v1484
        %2053 = vmatpush.msra.mxu0 %v1482
        %2054 = vmatpush.msra.mxu0 %v1480
        %2055 = vmatpush.msra.mxu0 %v1478
        %2056 = vmatpush.msra.mxu0 %v1476
        %2057 = vmatpush.msra.mxu0 %v1474
        %2058 = vmatpush.msra.mxu0 %v1472
        %2059 = vmatpush.msra.mxu0 %v1470
        %2060 = vmatpush.msra.mxu0 %v1468
        %2061 = vmatpush.msra.mxu0 %v1466
        %2062 = vmatpush.msra.mxu0 %v1464
        %2063 = vmatpush.msra.mxu0 %v1462
        %2064 = vmatpush.msra.mxu0 %v1460
        %2065 = vmatpush.msra.mxu0 %v1458
        %2066 = vmatpush.msra.mxu0 %v1456
        %2067 = vmatmul.f32.gmra.mxu0 %v1864
        %v2068 = vpop.f32.mrf.mxu0
        %v2069 = vadd.f32 %v2049, %v2068
        %2070 = vdwg.mxu0
        %2071 = vmatpush.msra.mxu0 %v1518
        %2072 = vmatpush.msra.mxu0 %v1516
        %2073 = vmatpush.msra.mxu0 %v1514
        %2074 = vmatpush.msra.mxu0 %v1512
        %2075 = vmatpush.msra.mxu0 %v1510
        %2076 = vmatpush.msra.mxu0 %v1508
        %2077 = vmatpush.msra.mxu0 %v1506
        %2078 = vmatpush.msra.mxu0 %v1504
        %2079 = vmatpush.msra.mxu0 %v1502
        %2080 = vmatpush.msra.mxu0 %v1500
        %2081 = vmatpush.msra.mxu0 %v1498
        %2082 = vmatpush.msra.mxu0 %v1496
        %2083 = vmatpush.msra.mxu0 %v1494
        %2084 = vmatpush.msra.mxu0 %v1492
        %2085 = vmatpush.msra.mxu0 %v1490
        %2086 = vmatpush.msra.mxu0 %v1488
        %2087 = vmatmul.f32.gmra.mxu0 %v1865
        %v2088 = vpop.f32.mrf.mxu0
        %v2089 = vadd.f32 %v2069, %v2088
        %2090 = vdwg.mxu0
        %2091 = vmatpush.msra.mxu0 %v1550
        %2092 = vmatpush.msra.mxu0 %v1548
        %2093 = vmatpush.msra.mxu0 %v1546
        %2094 = vmatpush.msra.mxu0 %v1544
        %2095 = vmatpush.msra.mxu0 %v1542
        %2096 = vmatpush.msra.mxu0 %v1540
        %2097 = vmatpush.msra.mxu0 %v1538
        %2098 = vmatpush.msra.mxu0 %v1536
        %2099 = vmatpush.msra.mxu0 %v1534
        %2100 = vmatpush.msra.mxu0 %v1532
        %2101 = vmatpush.msra.mxu0 %v1530
        %2102 = vmatpush.msra.mxu0 %v1528
        %2103 = vmatpush.msra.mxu0 %v1526
        %2104 = vmatpush.msra.mxu0 %v1524
        %2105 = vmatpush.msra.mxu0 %v1522
        %2106 = vmatpush.msra.mxu0 %v1520
        %2107 = vmatmul.f32.gmra.mxu0 %v1866
        %v2108 = vpop.f32.mrf.mxu0
        %v2109 = vadd.f32 %v2089, %v2108
        %2110 = vdwg.mxu0
        %2111 = vmatpush.msra.mxu0 %v1582
        %2112 = vmatpush.msra.mxu0 %v1580
        %2113 = vmatpush.msra.mxu0 %v1578
        %2114 = vmatpush.msra.mxu0 %v1576
        %2115 = vmatpush.msra.mxu0 %v1574
        %2116 = vmatpush.msra.mxu0 %v1572
        %2117 = vmatpush.msra.mxu0 %v1570
        %2118 = vmatpush.msra.mxu0 %v1568
        %2119 = vmatpush.msra.mxu0 %v1566
        %2120 = vmatpush.msra.mxu0 %v1564
        %2121 = vmatpush.msra.mxu0 %v1562
        %2122 = vmatpush.msra.mxu0 %v1560
        %2123 = vmatpush.msra.mxu0 %v1558
        %2124 = vmatpush.msra.mxu0 %v1556
        %2125 = vmatpush.msra.mxu0 %v1554
        %2126 = vmatpush.msra.mxu0 %v1552
        %2127 = vmatmul.f32.gmra.mxu0 %v1867
        %v2128 = vpop.f32.mrf.mxu0
        %v2129 = vadd.f32 %v2109, %v2128
        %2130 = vdwg.mxu0
        %2131 = vmatpush.msra.mxu0 %v1614
        %2132 = vmatpush.msra.mxu0 %v1612
        %2133 = vmatpush.msra.mxu0 %v1610
        %2134 = vmatpush.msra.mxu0 %v1608
        %2135 = vmatpush.msra.mxu0 %v1606
        %2136 = vmatpush.msra.mxu0 %v1604
        %2137 = vmatpush.msra.mxu0 %v1602
        %2138 = vmatpush.msra.mxu0 %v1600
        %2139 = vmatpush.msra.mxu0 %v1598
        %2140 = vmatpush.msra.mxu0 %v1596
        %2141 = vmatpush.msra.mxu0 %v1594
        %2142 = vmatpush.msra.mxu0 %v1592
        %2143 = vmatpush.msra.mxu0 %v1590
        %2144 = vmatpush.msra.mxu0 %v1588
        %2145 = vmatpush.msra.mxu0 %v1586
        %2146 = vmatpush.msra.mxu0 %v1584
        %2147 = vmatmul.f32.gmra.mxu0 %v1868
        %v2148 = vpop.f32.mrf.mxu0
        %v2149 = vadd.f32 %v2129, %v2148
        %2150 = vdwg.mxu0
        %2151 = vmatpush.msra.mxu0 %v1646
        %2152 = vmatpush.msra.mxu0 %v1644
        %2153 = vmatpush.msra.mxu0 %v1642
        %2154 = vmatpush.msra.mxu0 %v1640
        %2155 = vmatpush.msra.mxu0 %v1638
        %2156 = vmatpush.msra.mxu0 %v1636
        %2157 = vmatpush.msra.mxu0 %v1634
        %2158 = vmatpush.msra.mxu0 %v1632
        %2159 = vmatpush.msra.mxu0 %v1630
        %2160 = vmatpush.msra.mxu0 %v1628
        %2161 = vmatpush.msra.mxu0 %v1626
        %2162 = vmatpush.msra.mxu0 %v1624
        %2163 = vmatpush.msra.mxu0 %v1622
        %2164 = vmatpush.msra.mxu0 %v1620
        %2165 = vmatpush.msra.mxu0 %v1618
        %2166 = vmatpush.msra.mxu0 %v1616
        %2167 = vmatmul.f32.gmra.mxu0 %v1869
        %v2168 = vpop.f32.mrf.mxu0
        %v2169 = vadd.f32 %v2149, %v2168
        %2170 = vdwg.mxu0
        %2171 = vmatpush.msra.mxu0 %v1678
        %2172 = vmatpush.msra.mxu0 %v1676
        %2173 = vmatpush.msra.mxu0 %v1674
        %2174 = vmatpush.msra.mxu0 %v1672
        %2175 = vmatpush.msra.mxu0 %v1670
        %2176 = vmatpush.msra.mxu0 %v1668
        %2177 = vmatpush.msra.mxu0 %v1666
        %2178 = vmatpush.msra.mxu0 %v1664
        %2179 = vmatpush.msra.mxu0 %v1662
        %2180 = vmatpush.msra.mxu0 %v1660
        %2181 = vmatpush.msra.mxu0 %v1658
        %2182 = vmatpush.msra.mxu0 %v1656
        %2183 = vmatpush.msra.mxu0 %v1654
        %2184 = vmatpush.msra.mxu0 %v1652
        %2185 = vmatpush.msra.mxu0 %v1650
        %2186 = vmatpush.msra.mxu0 %v1648
        %2187 = vmatmul.f32.gmra.mxu0 %v1870
        %v2188 = vpop.f32.mrf.mxu0
        %v2189 = vadd.f32 %v2169, %v2188
        %2190 = vdwg.mxu0
        %v2191 = vld [vmem:[%s5] sm:$0xff]
        %v2192 = vld [vmem:[%s5 + $0x8] sm:$0xff]
        %v2193 = vld [vmem:[%s5 + $0x10] sm:$0xff]
        %v2194 = vld [vmem:[%s5 + $0x18] sm:$0xff]
        %v2195 = vld [vmem:[%s5 + $0x20] sm:$0xff]
        %v2196 = vld [vmem:[%s5 + $0x28] sm:$0xff]
        %v2197 = vld [vmem:[%s5 + $0x30] sm:$0xff]
        %v2198 = vld [vmem:[%s5 + $0x38] sm:$0xff]
        %v2199 = vld [vmem:[%s5 + $0x40] sm:$0xff]
        %v2202 = vrot.slane %v2189, 4
        %v2203 = vsel %vm1692, %v2029, %v2202
        %2205 = vst [vmem:[#allocation4 + $0x4] sm:$0xff] %v2203
        %v2206 = vshra.s32 %v410, 4
        %v2207 = vshra.s32 %v411, 4
        %v2208 = vand.u32 %v410, 15
        %v2209 = vand.u32 %v411, 15
        %v2210 = vld [vmem:[#allocation4] sm:$0xff]
        %v2211 = vld [vmem:[#allocation4 + $0x8] sm:$0xf]
        %v2212 = vadd.s32 %v2206, 4294967295
        %v2213 = vadd.s32 %v2207, 4294967295
        %vm2214 = vcmp.ge.s32.totalorder %v2212, 0
        %vm2215 = vcmp.ge.s32.totalorder %v2213, 0
        %vm2216 = vcmp.lt.s32.totalorder %v2212, 16
        %vm2217 = vcmp.lt.s32.totalorder %v2213, 16
        %vm2218 = vmand %vm2214, %vm2216
        %vm2219 = vmand %vm2215, %vm2217
        %v2220 = vadd.s32 %v2208, 4294967295
        %v2221 = vadd.s32 %v2209, 4294967295
        %vm2222 = vcmp.ge.s32.totalorder %v2220, 0
        %vm2223 = vcmp.ge.s32.totalorder %v2221, 0
        %vm2224 = vmand %vm2218, %vm2222
        %vm2225 = vmand %vm2219, %vm2223
        %vm2226 = vcmp.lt.s32.totalorder %v2220, 16
        %vm2227 = vcmp.lt.s32.totalorder %v2221, 16
        %vm2228 = vmand %vm2224, %vm2226
        %vm2229 = vmand %vm2225, %vm2227
        %v2230 = vsel %vm2228, 1, 0
        %v2231 = vsel %vm2229, 1, 0
        %vm2232 = vcmp.eq.s32.totalorder %v2230, 1
        %vm2233 = vcmp.eq.s32.totalorder %v2231, 1
        %2236 = vst [vmem:[#allocation1] ss:$2 sm:$0xff] %v2210
        %s2237 = scalar_lea.vmem [#allocation1], 16
        %2238 = vst [vmem:[%s2237] ss:$2 sm:$0xff] %v2211
        %v2239 = vld.sshfl [vmem:[#allocation1] sm:$0xff pattern:$0x75316420]
        %v2240 = vld.sshfl [vmem:[#allocation1 + $0x8] sm:$0xff pattern:$0x75316420]
        %v2241 = vld.sshfl [vmem:[#allocation1 + $0x10] sm:$0xff pattern:$0x75316420]
        %2242 = vrot.lane.b32.xlu0 %v2239, 17
        %v2243 = vpop.permute.xlu0 %2242
        %2244 = vrot.lane.b32.xlu0 %v2240, 17
        %v2245 = vpop.permute.xlu0 %2244
        %2246 = vrot.lane.b32.xlu0 %v2241, 17
        %v2247 = vpop.permute.xlu0 %2246
        %vm2248 = vcmask 138240
        %v2249 = vsel %vm2248, %v2243, %v2245
        %v2250 = vsel %vm2248, %v2245, %v2247
        %v2253 = vsel %vm2232, %v2249, 0.0
        %v2254 = vsel %vm2233, %v2250, 0.0
        %v2255 = vld [vmem:[#allocation4] sm:$0xff]
        %v2256 = vld [vmem:[#allocation4 + $0x8] sm:$0xf]
        %vm2257 = vcmp.ge.s32.totalorder %v2208, 0
        %vm2258 = vcmp.ge.s32.totalorder %v2209, 0
        %vm2259 = vmand %vm2218, %vm2257
        %vm2260 = vmand %vm2219, %vm2258
        %vm2261 = vcmp.lt.s32.totalorder %v2208, 16
        %vm2262 = vcmp.lt.s32.totalorder %v2209, 16
        %vm2263 = vmand %vm2259, %vm2261
        %vm2264 = vmand %vm2260, %vm2262
        %v2265 = vsel %vm2263, 1, 0
        %v2266 = vsel %vm2264, 1, 0
        %vm2267 = vcmp.eq.s32.totalorder %v2265, 1
        %vm2268 = vcmp.eq.s32.totalorder %v2266, 1
        %2271 = vst [vmem:[#allocation1] ss:$2 sm:$0xff] %v2255
        %s2272 = scalar_lea.vmem [#allocation1], 16
        %2273 = vst [vmem:[%s2272] ss:$2 sm:$0xff] %v2256
        %v2274 = vld.sshfl [vmem:[#allocation1] sm:$0xff pattern:$0x75316420]
        %v2275 = vld.sshfl [vmem:[#allocation1 + $0x8] sm:$0xff pattern:$0x75316420]
        %v2276 = vld.sshfl [vmem:[#allocation1 + $0x10] sm:$0xff pattern:$0x75316420]
        %2277 = vrot.lane.b32.xlu0 %v2274, 16
        %v2278 = vpop.permute.xlu0 %2277
        %2279 = vrot.lane.b32.xlu0 %v2275, 16
        %v2280 = vpop.permute.xlu0 %2279
        %2281 = vrot.lane.b32.xlu0 %v2276, 16
        %v2282 = vpop.permute.xlu0 %2281
        %vm2283 = vcmask 130048
        %v2284 = vsel %vm2283, %v2278, %v2280
        %v2285 = vsel %vm2283, %v2280, %v2282
        %v2288 = vsel %vm2267, %v2284, 0.0
        %v2289 = vsel %vm2268, %v2285, 0.0
        %vm2290 = vcmask 31744
        %v2292 = vsel %vm2290, %v2192, 0
        %v2295 = vsel %vm1692, %v2288, 0
        %v2298 = vsel %vm1692, %v2289, 0
        %2300 = vmatpush.msra.mxu0 0.0
        %2301 = vmatpush.msra.mxu0 0.0
        %2302 = vmatpush.msra.mxu0 0.0
        %2303 = vmatpush.msra.mxu0 0.0
        %2304 = vmatpush.msra.mxu0 0.0
        %2305 = vmatpush.msra.mxu0 0.0
        %2306 = vmatpush.msra.mxu0 0.0
        %2307 = vmatpush.msra.mxu0 0.0
        %2308 = vmatpush.msra.mxu0 0.0
        %2309 = vmatpush.msra.mxu0 0.0
        %2310 = vmatpush.msra.mxu0 0.0
        %2311 = vmatpush.msra.mxu0 0.0
        %2312 = vmatpush.msra.mxu0 0.0
        %2313 = vmatpush.msra.mxu0 0.0
        %2314 = vmatpush.msra.mxu0 0.0
        %2315 = vmatpush.msra.mxu0 %v2295
        %2316 = vmatmul.f32.gmra.mxu0 %v2292
        %v2317 = vpop.f32.mrf.mxu0
        %v2318 = vadd.f32 0.0, %v2317
        %2319 = vdwg.mxu0
        %2320 = vmatpush.msra.mxu0 0.0
        %2321 = vmatpush.msra.mxu0 0.0
        %2322 = vmatpush.msra.mxu0 0.0
        %2323 = vmatpush.msra.mxu0 0.0
        %2324 = vmatpush.msra.mxu0 0.0
        %2325 = vmatpush.msra.mxu0 0.0
        %2326 = vmatpush.msra.mxu0 0.0
        %2327 = vmatpush.msra.mxu0 0.0
        %2328 = vmatpush.msra.mxu0 0.0
        %2329 = vmatpush.msra.mxu0 0.0
        %2330 = vmatpush.msra.mxu0 0.0
        %2331 = vmatpush.msra.mxu0 0.0
        %2332 = vmatpush.msra.mxu0 0.0
        %2333 = vmatpush.msra.mxu0 0.0
        %2334 = vmatpush.msra.mxu0 0.0
        %2335 = vmatpush.msra.mxu0 %v2298
        %2336 = vmatmul.f32.gmra.mxu0 %v2292
        %v2337 = vpop.f32.mrf.mxu0
        %v2338 = vadd.f32 0.0, %v2337
        %2339 = vdwg.mxu0
        %v2341 = vsel %vm2290, %v2191, 0
        %v2344 = vsel %vm1692, %v2253, 0
        %v2347 = vsel %vm1692, %v2254, 0
        %2349 = vmatpush.msra.mxu0 0.0
        %2350 = vmatpush.msra.mxu0 0.0
        %2351 = vmatpush.msra.mxu0 0.0
        %2352 = vmatpush.msra.mxu0 0.0
        %2353 = vmatpush.msra.mxu0 0.0
        %2354 = vmatpush.msra.mxu0 0.0
        %2355 = vmatpush.msra.mxu0 0.0
        %2356 = vmatpush.msra.mxu0 0.0
        %2357 = vmatpush.msra.mxu0 0.0
        %2358 = vmatpush.msra.mxu0 0.0
        %2359 = vmatpush.msra.mxu0 0.0
        %2360 = vmatpush.msra.mxu0 0.0
        %2361 = vmatpush.msra.mxu0 0.0
        %2362 = vmatpush.msra.mxu0 0.0
        %2363 = vmatpush.msra.mxu0 0.0
        %2364 = vmatpush.msra.mxu0 %v2344
        %2365 = vmatmul.f32.gmra.mxu0 %v2341
        %v2366 = vpop.f32.mrf.mxu0
        %v2367 = vadd.f32 %v2318, %v2366
        %2368 = vdwg.mxu0
        %2369 = vmatpush.msra.mxu0 0.0
        %2370 = vmatpush.msra.mxu0 0.0
        %2371 = vmatpush.msra.mxu0 0.0
        %2372 = vmatpush.msra.mxu0 0.0
        %2373 = vmatpush.msra.mxu0 0.0
        %2374 = vmatpush.msra.mxu0 0.0
        %2375 = vmatpush.msra.mxu0 0.0
        %2376 = vmatpush.msra.mxu0 0.0
        %2377 = vmatpush.msra.mxu0 0.0
        %2378 = vmatpush.msra.mxu0 0.0
        %2379 = vmatpush.msra.mxu0 0.0
        %2380 = vmatpush.msra.mxu0 0.0
        %2381 = vmatpush.msra.mxu0 0.0
        %2382 = vmatpush.msra.mxu0 0.0
        %2383 = vmatpush.msra.mxu0 0.0
        %2384 = vmatpush.msra.mxu0 %v2347
        %2385 = vmatmul.f32.gmra.mxu0 %v2341
        %v2386 = vpop.f32.mrf.mxu0
        %v2387 = vadd.f32 %v2338, %v2386
        %2388 = vdwg.mxu0
        %v2389 = vld [vmem:[#allocation4] sm:$0xff]
        %v2390 = vld [vmem:[#allocation4 + $0x8] sm:$0xf]
        %v2391 = vadd.s32 %v2208, 1
        %v2392 = vadd.s32 %v2209, 1
        %vm2393 = vcmp.ge.s32.totalorder %v2391, 0
        %vm2394 = vcmp.ge.s32.totalorder %v2392, 0
        %vm2395 = vmand %vm2218, %vm2393
        %vm2396 = vmand %vm2219, %vm2394
        %vm2397 = vcmp.lt.s32.totalorder %v2391, 16
        %vm2398 = vcmp.lt.s32.totalorder %v2392, 16
        %vm2399 = vmand %vm2395, %vm2397
        %vm2400 = vmand %vm2396, %vm2398
        %v2401 = vsel %vm2399, 1, 0
        %v2402 = vsel %vm2400, 1, 0
        %vm2403 = vcmp.eq.s32.totalorder %v2401, 1
        %vm2404 = vcmp.eq.s32.totalorder %v2402, 1
        %2407 = vst [vmem:[#allocation1] ss:$2 sm:$0xff] %v2389
        %s2408 = scalar_lea.vmem [#allocation1], 16
        %2409 = vst [vmem:[%s2408] ss:$2 sm:$0xff] %v2390
        %v2410 = vld.sshfl [vmem:[#allocation1] sm:$0xff pattern:$0x75316420]
        %v2411 = vld.sshfl [vmem:[#allocation1 + $0x8] sm:$0xff pattern:$0x75316420]
        %v2412 = vld.sshfl [vmem:[#allocation1 + $0x10] sm:$0xff pattern:$0x75316420]
        %2413 = vrot.lane.b32.xlu0 %v2410, 15
        %v2414 = vpop.permute.xlu0 %2413
        %2415 = vrot.lane.b32.xlu0 %v2411, 15
        %v2416 = vpop.permute.xlu0 %2415
        %2417 = vrot.lane.b32.xlu0 %v2412, 15
        %v2418 = vpop.permute.xlu0 %2417
        %vm2419 = vcmask 121856
        %v2420 = vsel %vm2419, %v2414, %v2416
        %v2421 = vsel %vm2419, %v2416, %v2418
        %v2424 = vsel %vm2403, %v2420, 0.0
        %v2425 = vsel %vm2404, %v2421, 0.0
        %v2427 = vsel %vm2290, %v2193, 0
        %v2430 = vsel %vm1692, %v2424, 0
        %v2433 = vsel %vm1692, %v2425, 0
        %2435 = vmatpush.msra.mxu0 0.0
        %2436 = vmatpush.msra.mxu0 0.0
        %2437 = vmatpush.msra.mxu0 0.0
        %2438 = vmatpush.msra.mxu0 0.0
        %2439 = vmatpush.msra.mxu0 0.0
        %2440 = vmatpush.msra.mxu0 0.0
        %2441 = vmatpush.msra.mxu0 0.0
        %2442 = vmatpush.msra.mxu0 0.0
        %2443 = vmatpush.msra.mxu0 0.0
        %2444 = vmatpush.msra.mxu0 0.0
        %2445 = vmatpush.msra.mxu0 0.0
        %2446 = vmatpush.msra.mxu0 0.0
        %2447 = vmatpush.msra.mxu0 0.0
        %2448 = vmatpush.msra.mxu0 0.0
        %2449 = vmatpush.msra.mxu0 0.0
        %2450 = vmatpush.msra.mxu0 %v2430
        %2451 = vmatmul.f32.gmra.mxu0 %v2427
        %v2452 = vpop.f32.mrf.mxu0
        %v2453 = vadd.f32 0.0, %v2452
        %2454 = vdwg.mxu0
        %2455 = vmatpush.msra.mxu0 0.0
        %2456 = vmatpush.msra.mxu0 0.0
        %2457 = vmatpush.msra.mxu0 0.0
        %2458 = vmatpush.msra.mxu0 0.0
        %2459 = vmatpush.msra.mxu0 0.0
        %2460 = vmatpush.msra.mxu0 0.0
        %2461 = vmatpush.msra.mxu0 0.0
        %2462 = vmatpush.msra.mxu0 0.0
        %2463 = vmatpush.msra.mxu0 0.0
        %2464 = vmatpush.msra.mxu0 0.0
        %2465 = vmatpush.msra.mxu0 0.0
        %2466 = vmatpush.msra.mxu0 0.0
        %2467 = vmatpush.msra.mxu0 0.0
        %2468 = vmatpush.msra.mxu0 0.0
        %2469 = vmatpush.msra.mxu0 0.0
        %2470 = vmatpush.msra.mxu0 %v2433
        %2471 = vmatmul.f32.gmra.mxu0 %v2427
        %v2472 = vpop.f32.mrf.mxu0
        %v2473 = vadd.f32 0.0, %v2472
        %2474 = vdwg.mxu0
        %v2475 = vadd.f32 %v2367, %v2453
        %v2476 = vadd.f32 %v2387, %v2473
        %v2477 = vld [vmem:[#allocation4] sm:$0xff]
        %v2478 = vld [vmem:[#allocation4 + $0x8] sm:$0xf]
        %vm2479 = vcmp.ge.s32.totalorder %v2206, 0
        %vm2480 = vcmp.ge.s32.totalorder %v2207, 0
        %vm2481 = vcmp.lt.s32.totalorder %v2206, 16
        %vm2482 = vcmp.lt.s32.totalorder %v2207, 16
        %vm2483 = vmand %vm2479, %vm2481
        %vm2484 = vmand %vm2480, %vm2482
        %vm2485 = vmand %vm2483, %vm2222
        %vm2486 = vmand %vm2484, %vm2223
        %vm2487 = vmand %vm2485, %vm2226
        %vm2488 = vmand %vm2486, %vm2227
        %v2489 = vsel %vm2487, 1, 0
        %v2490 = vsel %vm2488, 1, 0
        %vm2491 = vcmp.eq.s32.totalorder %v2489, 1
        %vm2492 = vcmp.eq.s32.totalorder %v2490, 1
        %2495 = vst [vmem:[#allocation1] ss:$2 sm:$0xff] %v2477
        %s2496 = scalar_lea.vmem [#allocation1], 16
        %2497 = vst [vmem:[%s2496] ss:$2 sm:$0xff] %v2478
        %v2498 = vld.sshfl [vmem:[#allocation1] sm:$0xff pattern:$0x75316420]
        %v2499 = vld.sshfl [vmem:[#allocation1 + $0x8] sm:$0xff pattern:$0x75316420]
        %v2500 = vld.sshfl [vmem:[#allocation1 + $0x10] sm:$0xff pattern:$0x75316420]
        %2501 = vrot.lane.b32.xlu0 %v2498, 1
        %v2502 = vpop.permute.xlu0 %2501
        %2503 = vrot.lane.b32.xlu0 %v2499, 1
        %v2504 = vpop.permute.xlu0 %2503
        %2505 = vrot.lane.b32.xlu0 %v2500, 1
        %v2506 = vpop.permute.xlu0 %2505
        %v2507 = vsel %vm865, %v2502, %v2504
        %v2508 = vsel %vm865, %v2504, %v2506
        %v2511 = vsel %vm2491, %v2507, 0.0
        %v2512 = vsel %vm2492, %v2508, 0.0
        %v2514 = vsel %vm2290, %v2194, 0
        %v2517 = vsel %vm1692, %v2511, 0
        %v2520 = vsel %vm1692, %v2512, 0
        %2522 = vmatpush.msra.mxu0 0.0
        %2523 = vmatpush.msra.mxu0 0.0
        %2524 = vmatpush.msra.mxu0 0.0
        %2525 = vmatpush.msra.mxu0 0.0
        %2526 = vmatpush.msra.mxu0 0.0
        %2527 = vmatpush.msra.mxu0 0.0
        %2528 = vmatpush.msra.mxu0 0.0
        %2529 = vmatpush.msra.mxu0 0.0
        %2530 = vmatpush.msra.mxu0 0.0
        %2531 = vmatpush.msra.mxu0 0.0
        %2532 = vmatpush.msra.mxu0 0.0
        %2533 = vmatpush.msra.mxu0 0.0
        %2534 = vmatpush.msra.mxu0 0.0
        %2535 = vmatpush.msra.mxu0 0.0
        %2536 = vmatpush.msra.mxu0 0.0
        %2537 = vmatpush.msra.mxu0 %v2517
        %2538 = vmatmul.f32.gmra.mxu0 %v2514
        %v2539 = vpop.f32.mrf.mxu0
        %v2540 = vadd.f32 0.0, %v2539
        %2541 = vdwg.mxu0
        %2542 = vmatpush.msra.mxu0 0.0
        %2543 = vmatpush.msra.mxu0 0.0
        %2544 = vmatpush.msra.mxu0 0.0
        %2545 = vmatpush.msra.mxu0 0.0
        %2546 = vmatpush.msra.mxu0 0.0
        %2547 = vmatpush.msra.mxu0 0.0
        %2548 = vmatpush.msra.mxu0 0.0
        %2549 = vmatpush.msra.mxu0 0.0
        %2550 = vmatpush.msra.mxu0 0.0
        %2551 = vmatpush.msra.mxu0 0.0
        %2552 = vmatpush.msra.mxu0 0.0
        %2553 = vmatpush.msra.mxu0 0.0
        %2554 = vmatpush.msra.mxu0 0.0
        %2555 = vmatpush.msra.mxu0 0.0
        %2556 = vmatpush.msra.mxu0 0.0
        %2557 = vmatpush.msra.mxu0 %v2520
        %2558 = vmatmul.f32.gmra.mxu0 %v2514
        %v2559 = vpop.f32.mrf.mxu0
        %v2560 = vadd.f32 0.0, %v2559
        %2561 = vdwg.mxu0
        %v2562 = vadd.f32 %v2475, %v2540
        %v2563 = vadd.f32 %v2476, %v2560
        %v2564 = vld [vmem:[#allocation4 + $0x4] sm:$0xff]
        %vm2565 = vmand %vm2483, %vm2257
        %vm2566 = vmand %vm2484, %vm2258
        %vm2567 = vmand %vm2565, %vm2261
        %vm2568 = vmand %vm2566, %vm2262
        %v2569 = vsel %vm2567, 1, 0
        %v2570 = vsel %vm2568, 1, 0
        %vm2571 = vcmp.eq.s32.totalorder %v2569, 1
        %vm2572 = vcmp.eq.s32.totalorder %v2570, 1
        %2574 = vst [vmem:[#allocation1] ss:$2 sm:$0xff] %v2564
        %v2575 = vld.sshfl [vmem:[#allocation1] sm:$0xff pattern:$0x75316420]
        %v2576 = vld.sshfl [vmem:[#allocation1 + $0x8] sm:$0xff pattern:$0x75316420]
        %v2579 = vsel %vm2571, %v2575, 0.0
        %v2580 = vsel %vm2572, %v2576, 0.0
        %v2582 = vsel %vm2290, %v2195, 0
        %v2585 = vsel %vm1692, %v2579, 0
        %v2588 = vsel %vm1692, %v2580, 0
        %2590 = vmatpush.msra.mxu0 0.0
        %2591 = vmatpush.msra.mxu0 0.0
        %2592 = vmatpush.msra.mxu0 0.0
        %2593 = vmatpush.msra.mxu0 0.0
        %2594 = vmatpush.msra.mxu0 0.0
        %2595 = vmatpush.msra.mxu0 0.0
        %2596 = vmatpush.msra.mxu0 0.0
        %2597 = vmatpush.msra.mxu0 0.0
        %2598 = vmatpush.msra.mxu0 0.0
        %2599 = vmatpush.msra.mxu0 0.0
        %2600 = vmatpush.msra.mxu0 0.0
        %2601 = vmatpush.msra.mxu0 0.0
        %2602 = vmatpush.msra.mxu0 0.0
        %2603 = vmatpush.msra.mxu0 0.0
        %2604 = vmatpush.msra.mxu0 0.0
        %2605 = vmatpush.msra.mxu0 %v2585
        %2606 = vmatmul.f32.gmra.mxu0 %v2582
        %v2607 = vpop.f32.mrf.mxu0
        %v2608 = vadd.f32 0.0, %v2607
        %2609 = vdwg.mxu0
        %2610 = vmatpush.msra.mxu0 0.0
        %2611 = vmatpush.msra.mxu0 0.0
        %2612 = vmatpush.msra.mxu0 0.0
        %2613 = vmatpush.msra.mxu0 0.0
        %2614 = vmatpush.msra.mxu0 0.0
        %2615 = vmatpush.msra.mxu0 0.0
        %2616 = vmatpush.msra.mxu0 0.0
        %2617 = vmatpush.msra.mxu0 0.0
        %2618 = vmatpush.msra.mxu0 0.0
        %2619 = vmatpush.msra.mxu0 0.0
        %2620 = vmatpush.msra.mxu0 0.0
        %2621 = vmatpush.msra.mxu0 0.0
        %2622 = vmatpush.msra.mxu0 0.0
        %2623 = vmatpush.msra.mxu0 0.0
        %2624 = vmatpush.msra.mxu0 0.0
        %2625 = vmatpush.msra.mxu0 %v2588
        %2626 = vmatmul.f32.gmra.mxu0 %v2582
        %v2627 = vpop.f32.mrf.mxu0
        %v2628 = vadd.f32 0.0, %v2627
        %2629 = vdwg.mxu0
        %v2630 = vadd.f32 %v2562, %v2608
        %v2631 = vadd.f32 %v2563, %v2628
        %v2632 = vld [vmem:[#allocation4 + $0x4] sm:$0xff]
        %v2633 = vld [vmem:[#allocation4 + $0xc] sm:$0xf]
        %vm2634 = vmand %vm2483, %vm2393
        %vm2635 = vmand %vm2484, %vm2394
        %vm2636 = vmand %vm2634, %vm2397
        %vm2637 = vmand %vm2635, %vm2398
        %v2638 = vsel %vm2636, 1, 0
        %v2639 = vsel %vm2637, 1, 0
        %vm2640 = vcmp.eq.s32.totalorder %v2638, 1
        %vm2641 = vcmp.eq.s32.totalorder %v2639, 1
        %2644 = vst [vmem:[#allocation1] ss:$2 sm:$0xff] %v2632
        %s2645 = scalar_lea.vmem [#allocation1], 16
        %2646 = vst [vmem:[%s2645] ss:$2 sm:$0xff] %v2633
        %v2647 = vld.sshfl [vmem:[#allocation1] sm:$0xff pattern:$0x75316420]
        %v2648 = vld.sshfl [vmem:[#allocation1 + $0x8] sm:$0xff pattern:$0x75316420]
        %v2649 = vld.sshfl [vmem:[#allocation1 + $0x10] sm:$0xff pattern:$0x75316420]
        %2650 = vrot.lane.b32.xlu0 %v2647, 127
        %v2651 = vpop.permute.xlu0 %2650
        %2652 = vrot.lane.b32.xlu0 %v2648, 127
        %v2653 = vpop.permute.xlu0 %2652
        %2654 = vrot.lane.b32.xlu0 %v2649, 127
        %v2655 = vpop.permute.xlu0 %2654
        %v2656 = vsel %vm1037, %v2651, %v2653
        %v2657 = vsel %vm1037, %v2653, %v2655
        %v2660 = vsel %vm2640, %v2656, 0.0
        %v2661 = vsel %vm2641, %v2657, 0.0
        %v2663 = vsel %vm2290, %v2196, 0
        %v2666 = vsel %vm1692, %v2660, 0
        %v2669 = vsel %vm1692, %v2661, 0
        %2671 = vmatpush.msra.mxu0 0.0
        %2672 = vmatpush.msra.mxu0 0.0
        %2673 = vmatpush.msra.mxu0 0.0
        %2674 = vmatpush.msra.mxu0 0.0
        %2675 = vmatpush.msra.mxu0 0.0
        %2676 = vmatpush.msra.mxu0 0.0
        %2677 = vmatpush.msra.mxu0 0.0
        %2678 = vmatpush.msra.mxu0 0.0
        %2679 = vmatpush.msra.mxu0 0.0
        %2680 = vmatpush.msra.mxu0 0.0
        %2681 = vmatpush.msra.mxu0 0.0
        %2682 = vmatpush.msra.mxu0 0.0
        %2683 = vmatpush.msra.mxu0 0.0
        %2684 = vmatpush.msra.mxu0 0.0
        %2685 = vmatpush.msra.mxu0 0.0
        %2686 = vmatpush.msra.mxu0 %v2666
        %2687 = vmatmul.f32.gmra.mxu0 %v2663
        %v2688 = vpop.f32.mrf.mxu0
        %v2689 = vadd.f32 0.0, %v2688
        %2690 = vdwg.mxu0
        %2691 = vmatpush.msra.mxu0 0.0
        %2692 = vmatpush.msra.mxu0 0.0
        %2693 = vmatpush.msra.mxu0 0.0
        %2694 = vmatpush.msra.mxu0 0.0
        %2695 = vmatpush.msra.mxu0 0.0
        %2696 = vmatpush.msra.mxu0 0.0
        %2697 = vmatpush.msra.mxu0 0.0
        %2698 = vmatpush.msra.mxu0 0.0
        %2699 = vmatpush.msra.mxu0 0.0
        %2700 = vmatpush.msra.mxu0 0.0
        %2701 = vmatpush.msra.mxu0 0.0
        %2702 = vmatpush.msra.mxu0 0.0
        %2703 = vmatpush.msra.mxu0 0.0
        %2704 = vmatpush.msra.mxu0 0.0
        %2705 = vmatpush.msra.mxu0 0.0
        %2706 = vmatpush.msra.mxu0 %v2669
        %2707 = vmatmul.f32.gmra.mxu0 %v2663
        %v2708 = vpop.f32.mrf.mxu0
        %v2709 = vadd.f32 0.0, %v2708
        %2710 = vdwg.mxu0
        %v2711 = vadd.f32 %v2630, %v2689
        %v2712 = vadd.f32 %v2631, %v2709
        %v2713 = vld [vmem:[#allocation4 + $0x4] sm:$0xff]
        %v2714 = vld [vmem:[#allocation4 + $0xc] sm:$0xf]
        %v2715 = vadd.s32 %v2206, 1
        %v2716 = vadd.s32 %v2207, 1
        %vm2717 = vcmp.ge.s32.totalorder %v2715, 0
        %vm2718 = vcmp.ge.s32.totalorder %v2716, 0
        %vm2719 = vcmp.lt.s32.totalorder %v2715, 16
        %vm2720 = vcmp.lt.s32.totalorder %v2716, 16
        %vm2721 = vmand %vm2717, %vm2719
        %vm2722 = vmand %vm2718, %vm2720
        %vm2723 = vmand %vm2721, %vm2222
        %vm2724 = vmand %vm2722, %vm2223
        %vm2725 = vmand %vm2723, %vm2226
        %vm2726 = vmand %vm2724, %vm2227
        %v2727 = vsel %vm2725, 1, 0
        %v2728 = vsel %vm2726, 1, 0
        %vm2729 = vcmp.eq.s32.totalorder %v2727, 1
        %vm2730 = vcmp.eq.s32.totalorder %v2728, 1
        %2733 = vst [vmem:[#allocation1] ss:$2 sm:$0xff] %v2713
        %s2734 = scalar_lea.vmem [#allocation1], 16
        %2735 = vst [vmem:[%s2734] ss:$2 sm:$0xff] %v2714
        %v2736 = vld.sshfl [vmem:[#allocation1] sm:$0xff pattern:$0x75316420]
        %v2737 = vld.sshfl [vmem:[#allocation1 + $0x8] sm:$0xff pattern:$0x75316420]
        %v2738 = vld.sshfl [vmem:[#allocation1 + $0x10] sm:$0xff pattern:$0x75316420]
        %2739 = vrot.lane.b32.xlu0 %v2736, 113
        %v2740 = vpop.permute.xlu0 %2739
        %2741 = vrot.lane.b32.xlu0 %v2737, 113
        %v2742 = vpop.permute.xlu0 %2741
        %2743 = vrot.lane.b32.xlu0 %v2738, 113
        %v2744 = vpop.permute.xlu0 %2743
        %vm2745 = vcmask 924672
        %v2746 = vsel %vm2745, %v2740, %v2742
        %v2747 = vsel %vm2745, %v2742, %v2744
        %v2750 = vsel %vm2729, %v2746, 0.0
        %v2751 = vsel %vm2730, %v2747, 0.0
        %v2753 = vsel %vm2290, %v2197, 0
        %v2756 = vsel %vm1692, %v2750, 0
        %v2759 = vsel %vm1692, %v2751, 0
        %2761 = vmatpush.msra.mxu0 0.0
        %2762 = vmatpush.msra.mxu0 0.0
        %2763 = vmatpush.msra.mxu0 0.0
        %2764 = vmatpush.msra.mxu0 0.0
        %2765 = vmatpush.msra.mxu0 0.0
        %2766 = vmatpush.msra.mxu0 0.0
        %2767 = vmatpush.msra.mxu0 0.0
        %2768 = vmatpush.msra.mxu0 0.0
        %2769 = vmatpush.msra.mxu0 0.0
        %2770 = vmatpush.msra.mxu0 0.0
        %2771 = vmatpush.msra.mxu0 0.0
        %2772 = vmatpush.msra.mxu0 0.0
        %2773 = vmatpush.msra.mxu0 0.0
        %2774 = vmatpush.msra.mxu0 0.0
        %2775 = vmatpush.msra.mxu0 0.0
        %2776 = vmatpush.msra.mxu0 %v2756
        %2777 = vmatmul.f32.gmra.mxu0 %v2753
        %v2778 = vpop.f32.mrf.mxu0
        %v2779 = vadd.f32 0.0, %v2778
        %2780 = vdwg.mxu0
        %2781 = vmatpush.msra.mxu0 0.0
        %2782 = vmatpush.msra.mxu0 0.0
        %2783 = vmatpush.msra.mxu0 0.0
        %2784 = vmatpush.msra.mxu0 0.0
        %2785 = vmatpush.msra.mxu0 0.0
        %2786 = vmatpush.msra.mxu0 0.0
        %2787 = vmatpush.msra.mxu0 0.0
        %2788 = vmatpush.msra.mxu0 0.0
        %2789 = vmatpush.msra.mxu0 0.0
        %2790 = vmatpush.msra.mxu0 0.0
        %2791 = vmatpush.msra.mxu0 0.0
        %2792 = vmatpush.msra.mxu0 0.0
        %2793 = vmatpush.msra.mxu0 0.0
        %2794 = vmatpush.msra.mxu0 0.0
        %2795 = vmatpush.msra.mxu0 0.0
        %2796 = vmatpush.msra.mxu0 %v2759
        %2797 = vmatmul.f32.gmra.mxu0 %v2753
        %v2798 = vpop.f32.mrf.mxu0
        %v2799 = vadd.f32 0.0, %v2798
        %2800 = vdwg.mxu0
        %v2801 = vadd.f32 %v2711, %v2779
        %v2802 = vadd.f32 %v2712, %v2799
        %v2803 = vld [vmem:[#allocation4 + $0x4] sm:$0xff]
        %v2804 = vld [vmem:[#allocation4 + $0xc] sm:$0xf]
        %vm2805 = vmand %vm2721, %vm2257
        %vm2806 = vmand %vm2722, %vm2258
        %vm2807 = vmand %vm2805, %vm2261
        %vm2808 = vmand %vm2806, %vm2262
        %v2809 = vsel %vm2807, 1, 0
        %v2810 = vsel %vm2808, 1, 0
        %vm2811 = vcmp.eq.s32.totalorder %v2809, 1
        %vm2812 = vcmp.eq.s32.totalorder %v2810, 1
        %2815 = vst [vmem:[#allocation1] ss:$2 sm:$0xff] %v2803
        %s2816 = scalar_lea.vmem [#allocation1], 16
        %2817 = vst [vmem:[%s2816] ss:$2 sm:$0xff] %v2804
        %v2818 = vld.sshfl [vmem:[#allocation1] sm:$0xff pattern:$0x75316420]
        %v2819 = vld.sshfl [vmem:[#allocation1 + $0x8] sm:$0xff pattern:$0x75316420]
        %v2820 = vld.sshfl [vmem:[#allocation1 + $0x10] sm:$0xff pattern:$0x75316420]
        %2821 = vrot.lane.b32.xlu0 %v2818, 112
        %v2822 = vpop.permute.xlu0 %2821
        %2823 = vrot.lane.b32.xlu0 %v2819, 112
        %v2824 = vpop.permute.xlu0 %2823
        %2825 = vrot.lane.b32.xlu0 %v2820, 112
        %v2826 = vpop.permute.xlu0 %2825
        %vm2827 = vcmask 916480
        %v2828 = vsel %vm2827, %v2822, %v2824
        %v2829 = vsel %vm2827, %v2824, %v2826
        %v2832 = vsel %vm2811, %v2828, 0.0
        %v2833 = vsel %vm2812, %v2829, 0.0
        %v2835 = vsel %vm2290, %v2198, 0
        %v2838 = vsel %vm1692, %v2832, 0
        %v2841 = vsel %vm1692, %v2833, 0
        %2843 = vmatpush.msra.mxu0 0.0
        %2844 = vmatpush.msra.mxu0 0.0
        %2845 = vmatpush.msra.mxu0 0.0
        %2846 = vmatpush.msra.mxu0 0.0
        %2847 = vmatpush.msra.mxu0 0.0
        %2848 = vmatpush.msra.mxu0 0.0
        %2849 = vmatpush.msra.mxu0 0.0
        %2850 = vmatpush.msra.mxu0 0.0
        %2851 = vmatpush.msra.mxu0 0.0
        %2852 = vmatpush.msra.mxu0 0.0
        %2853 = vmatpush.msra.mxu0 0.0
        %2854 = vmatpush.msra.mxu0 0.0
        %2855 = vmatpush.msra.mxu0 0.0
        %2856 = vmatpush.msra.mxu0 0.0
        %2857 = vmatpush.msra.mxu0 0.0
        %2858 = vmatpush.msra.mxu0 %v2838
        %2859 = vmatmul.f32.gmra.mxu0 %v2835
        %v2860 = vpop.f32.mrf.mxu0
        %v2861 = vadd.f32 0.0, %v2860
        %2862 = vdwg.mxu0
        %2863 = vmatpush.msra.mxu0 0.0
        %2864 = vmatpush.msra.mxu0 0.0
        %2865 = vmatpush.msra.mxu0 0.0
        %2866 = vmatpush.msra.mxu0 0.0
        %2867 = vmatpush.msra.mxu0 0.0
        %2868 = vmatpush.msra.mxu0 0.0
        %2869 = vmatpush.msra.mxu0 0.0
        %2870 = vmatpush.msra.mxu0 0.0
        %2871 = vmatpush.msra.mxu0 0.0
        %2872 = vmatpush.msra.mxu0 0.0
        %2873 = vmatpush.msra.mxu0 0.0
        %2874 = vmatpush.msra.mxu0 0.0
        %2875 = vmatpush.msra.mxu0 0.0
        %2876 = vmatpush.msra.mxu0 0.0
        %2877 = vmatpush.msra.mxu0 0.0
        %2878 = vmatpush.msra.mxu0 %v2841
        %2879 = vmatmul.f32.gmra.mxu0 %v2835
        %v2880 = vpop.f32.mrf.mxu0
        %v2881 = vadd.f32 0.0, %v2880
        %2882 = vdwg.mxu0
        %v2883 = vadd.f32 %v2801, %v2861
        %v2884 = vadd.f32 %v2802, %v2881
        %v2885 = vld [vmem:[#allocation4 + $0x4] sm:$0xff]
        %v2886 = vld [vmem:[#allocation4 + $0xc] sm:$0xf]
        %vm2887 = vmand %vm2721, %vm2393
        %vm2888 = vmand %vm2722, %vm2394
        %vm2889 = vmand %vm2887, %vm2397
        %vm2890 = vmand %vm2888, %vm2398
        %v2891 = vsel %vm2889, 1, 0
        %v2892 = vsel %vm2890, 1, 0
        %vm2893 = vcmp.eq.s32.totalorder %v2891, 1
        %vm2894 = vcmp.eq.s32.totalorder %v2892, 1
        %2897 = vst [vmem:[#allocation1] ss:$2 sm:$0xff] %v2885
        %s2898 = scalar_lea.vmem [#allocation1], 16
        %2899 = vst [vmem:[%s2898] ss:$2 sm:$0xff] %v2886
        %v2900 = vld.sshfl [vmem:[#allocation1] sm:$0xff pattern:$0x75316420]
        %v2901 = vld.sshfl [vmem:[#allocation1 + $0x8] sm:$0xff pattern:$0x75316420]
        %v2902 = vld.sshfl [vmem:[#allocation1 + $0x10] sm:$0xff pattern:$0x75316420]
        %2903 = vrot.lane.b32.xlu0 %v2900, 111
        %v2904 = vpop.permute.xlu0 %2903
        %2905 = vrot.lane.b32.xlu0 %v2901, 111
        %v2906 = vpop.permute.xlu0 %2905
        %2907 = vrot.lane.b32.xlu0 %v2902, 111
        %v2908 = vpop.permute.xlu0 %2907
        %vm2909 = vcmask 908288
        %v2910 = vsel %vm2909, %v2904, %v2906
        %v2911 = vsel %vm2909, %v2906, %v2908
        %v2914 = vsel %vm2893, %v2910, 0.0
        %v2915 = vsel %vm2894, %v2911, 0.0
        %v2917 = vsel %vm2290, %v2199, 0
        %v2920 = vsel %vm1692, %v2914, 0
        %v2923 = vsel %vm1692, %v2915, 0
        %2925 = vmatpush.msra.mxu0 0.0
        %2926 = vmatpush.msra.mxu0 0.0
        %2927 = vmatpush.msra.mxu0 0.0
        %2928 = vmatpush.msra.mxu0 0.0
        %2929 = vmatpush.msra.mxu0 0.0
        %2930 = vmatpush.msra.mxu0 0.0
        %2931 = vmatpush.msra.mxu0 0.0
        %2932 = vmatpush.msra.mxu0 0.0
        %2933 = vmatpush.msra.mxu0 0.0
        %2934 = vmatpush.msra.mxu0 0.0
        %2935 = vmatpush.msra.mxu0 0.0
        %2936 = vmatpush.msra.mxu0 0.0
        %2937 = vmatpush.msra.mxu0 0.0
        %2938 = vmatpush.msra.mxu0 0.0
        %2939 = vmatpush.msra.mxu0 0.0
        %2940 = vmatpush.msra.mxu0 %v2920
        %2941 = vmatmul.f32.gmra.mxu0 %v2917
        %v2942 = vpop.f32.mrf.mxu0
        %v2943 = vadd.f32 0.0, %v2942
        %2944 = vdwg.mxu0
        %2945 = vmatpush.msra.mxu0 0.0
        %2946 = vmatpush.msra.mxu0 0.0
        %2947 = vmatpush.msra.mxu0 0.0
        %2948 = vmatpush.msra.mxu0 0.0
        %2949 = vmatpush.msra.mxu0 0.0
        %2950 = vmatpush.msra.mxu0 0.0
        %2951 = vmatpush.msra.mxu0 0.0
        %2952 = vmatpush.msra.mxu0 0.0
        %2953 = vmatpush.msra.mxu0 0.0
        %2954 = vmatpush.msra.mxu0 0.0
        %2955 = vmatpush.msra.mxu0 0.0
        %2956 = vmatpush.msra.mxu0 0.0
        %2957 = vmatpush.msra.mxu0 0.0
        %2958 = vmatpush.msra.mxu0 0.0
        %2959 = vmatpush.msra.mxu0 0.0
        %2960 = vmatpush.msra.mxu0 %v2923
        %2961 = vmatmul.f32.gmra.mxu0 %v2917
        %v2962 = vpop.f32.mrf.mxu0
        %v2963 = vadd.f32 0.0, %v2962
        %2964 = vdwg.mxu0
        %v2965 = vadd.f32 %v2883, %v2943
        %v2966 = vadd.f32 %v2884, %v2963
        %v2967 = vld [vmem:[%s6] sm:$0xff]
        %2969 = vset.pattern.permute.xlu0 0
        %2970 = vperm.xlu0 %2969, %v2967
        %v2971 = vpop.permute.xlu0 %2970
        %v2973 = vmul.f32 %v2965, %v2971
        %v2974 = vmul.f32 %v2966, %v2971
        %v2975 = vld [vmem:[%s7] sm:$0xff]
        %2977 = vset.pattern.permute.xlu0 0
        %2978 = vperm.xlu0 %2977, %v2975
        %v2979 = vpop.permute.xlu0 %2978
        %v2981 = vadd.f32 %v2973, %v2979
        %v2982 = vadd.f32 %v2974, %v2979
        %v2983 = vmax.f32 %v2981, 0.0
        %v2984 = vmax.f32 %v2982, 0.0
        %v2985 = vld [vmem:[%s8] sm:$0xff]
        %v2986 = vld [vmem:[%s8 + $0x8] sm:$0xff]
        %v2987 = vld [vmem:[%s8 + $0x10] sm:$0xff]
        %v2988 = vld [vmem:[%s8 + $0x18] sm:$0xff]
        %v2989 = vld [vmem:[%s8 + $0x20] sm:$0xff]
        %v2990 = vld [vmem:[%s8 + $0x28] sm:$0xff]
        %v2991 = vld [vmem:[%s8 + $0x30] sm:$0xff]
        %v2992 = vld [vmem:[%s8 + $0x38] sm:$0xff]
        %v2993 = vld [vmem:[%s8 + $0x40] sm:$0xff]
        %v2994 = vld [vmem:[%s8 + $0x48] sm:$0xff]
        %v2995 = vld [vmem:[%s8 + $0x50] sm:$0xff]
        %v2996 = vld [vmem:[%s8 + $0x58] sm:$0xff]
        %v2997 = vld [vmem:[%s8 + $0x60] sm:$0xff]
        %v2998 = vld [vmem:[%s8 + $0x68] sm:$0xff]
        %v2999 = vld [vmem:[%s8 + $0x70] sm:$0xff]
        %v3000 = vld [vmem:[%s8 + $0x78] sm:$0xff]
        %v3001 = vld [vmem:[%s8 + $0x80] sm:$0xff]
        %v3002 = vld [vmem:[%s8 + $0x88] sm:$0xff]
        %v3003 = vld [vmem:[%s8 + $0x90] sm:$0xff]
        %v3004 = vld [vmem:[%s8 + $0x98] sm:$0xff]
        %v3005 = vld [vmem:[%s8 + $0xa0] sm:$0xff]
        %v3006 = vld [vmem:[%s8 + $0xa8] sm:$0xff]
        %v3007 = vld [vmem:[%s8 + $0xb0] sm:$0xff]
        %v3008 = vld [vmem:[%s8 + $0xb8] sm:$0xff]
        %v3009 = vld [vmem:[%s8 + $0xc0] sm:$0xff]
        %v3010 = vld [vmem:[%s8 + $0xc8] sm:$0xff]
        %v3011 = vld [vmem:[%s8 + $0xd0] sm:$0xff]
        %v3012 = vld [vmem:[%s8 + $0xd8] sm:$0xff]
        %v3013 = vld [vmem:[%s8 + $0xe0] sm:$0xff]
        %v3014 = vld [vmem:[%s8 + $0xe8] sm:$0xff]
        %v3015 = vld [vmem:[%s8 + $0xf0] sm:$0xff]
        %v3016 = vld [vmem:[%s8 + $0xf8] sm:$0xff]
        %3017 = vst [vmem:[#allocation5 + $0x18] sm:$0xff] 0.0
        %3018 = vst [vmem:[#allocation5 + $0x8] sm:$0xff] %v2983
        %3019 = vst [vmem:[#allocation5 + $0x10] sm:$0xff] %v2984
        %v3020 = vld [vmem:[#allocation5 + $0x8] sm:$0xff]
        %v3021 = vld [vmem:[#allocation5 + $0x10] sm:$0xff]
        %v3022 = vld [vmem:[#allocation5 + $0x18] sm:$0xff]
        %3026 = vrot.lane.b32.xlu0 %v3020, 127
        %v3027 = vpop.permute.xlu0 %3026
        %3028 = vrot.lane.b32.xlu0 %v3021, 127
        %v3029 = vpop.permute.xlu0 %3028
        %3030 = vrot.lane.b32.xlu0 %v3022, 127
        %v3031 = vpop.permute.xlu0 %3030
        %v3032 = vsel %vm1037, %v3027, %v3029
        %v3033 = vsel %vm1037, %v3029, %v3031
        %v3036 = vmax.f32 %v2983, %v3032
        %v3037 = vmax.f32 %v2984, %v3033
        %v3039 = vmax.f32 %v3020, %v3032
        %v3040 = vmax.f32 %v3021, %v3033
        %v3041 = vmax.f32 %v3022, %v3031
        %3045 = vrot.lane.b32.xlu0 %v3039, 112
        %v3046 = vpop.permute.xlu0 %3045
        %3047 = vrot.lane.b32.xlu0 %v3040, 112
        %v3048 = vpop.permute.xlu0 %3047
        %3049 = vrot.lane.b32.xlu0 %v3041, 112
        %v3050 = vpop.permute.xlu0 %3049
        %v3051 = vsel %vm2827, %v3046, %v3048
        %v3052 = vsel %vm2827, %v3048, %v3050
        %v3055 = vmax.f32 %v3036, %v3051
        %v3056 = vmax.f32 %v3037, %v3052
        %3057 = vmatpush.msra.mxu0 %v3000
        %3058 = vmatpush.msra.mxu0 %v2999
        %3059 = vmatpush.msra.mxu0 %v2998
        %3060 = vmatpush.msra.mxu0 %v2997
        %3061 = vmatpush.msra.mxu0 %v2996
        %3062 = vmatpush.msra.mxu0 %v2995
        %3063 = vmatpush.msra.mxu0 %v2994
        %3064 = vmatpush.msra.mxu0 %v2993
        %3065 = vmatpush.msra.mxu0 %v2992
        %3066 = vmatpush.msra.mxu0 %v2991
        %3067 = vmatpush.msra.mxu0 %v2990
        %3068 = vmatpush.msra.mxu0 %v2989
        %3069 = vmatpush.msra.mxu0 %v2988
        %3070 = vmatpush.msra.mxu0 %v2987
        %3071 = vmatpush.msra.mxu0 %v2986
        %3072 = vmatpush.msra.mxu0 %v2985
        %3073 = vmatmul.f32.gmra.mxu0 %v3055
        %v3074 = vpop.f32.mrf.mxu0
        %v3075 = vadd.f32 0.0, %v3074
        %3076 = vdwg.mxu0
        %3077 = vmatpush.msra.mxu0 %v3016
        %3078 = vmatpush.msra.mxu0 %v3015
        %3079 = vmatpush.msra.mxu0 %v3014
        %3080 = vmatpush.msra.mxu0 %v3013
        %3081 = vmatpush.msra.mxu0 %v3012
        %3082 = vmatpush.msra.mxu0 %v3011
        %3083 = vmatpush.msra.mxu0 %v3010
        %3084 = vmatpush.msra.mxu0 %v3009
        %3085 = vmatpush.msra.mxu0 %v3008
        %3086 = vmatpush.msra.mxu0 %v3007
        %3087 = vmatpush.msra.mxu0 %v3006
        %3088 = vmatpush.msra.mxu0 %v3005
        %3089 = vmatpush.msra.mxu0 %v3004
        %3090 = vmatpush.msra.mxu0 %v3003
        %3091 = vmatpush.msra.mxu0 %v3002
        %3092 = vmatpush.msra.mxu0 %v3001
        %3093 = vmatmul.f32.gmra.mxu0 %v3056
        %v3094 = vpop.f32.mrf.mxu0
        %v3095 = vadd.f32 %v3075, %v3094
        %3096 = vdwg.mxu0
        %v3097 = vld [vmem:[%s10] sm:$0x1]
        %v3098 = vld [vmem:[%s9] sm:$0xff]
        %v3099 = vld [vmem:[%s9 + $0x8] sm:$0xff]
        %v3100 = vld [vmem:[%s9 + $0x10] sm:$0xff]
        %v3101 = vld [vmem:[%s9 + $0x18] sm:$0xff]
        %v3102 = vld [vmem:[%s9 + $0x20] sm:$0xff]
        %v3103 = vld [vmem:[%s9 + $0x28] sm:$0xff]
        %v3104 = vld [vmem:[%s9 + $0x30] sm:$0xff]
        %v3105 = vld [vmem:[%s9 + $0x38] sm:$0xff]
        %v3106 = vld [vmem:[%s9 + $0x40] sm:$0xff]
        %v3107 = vld [vmem:[%s9 + $0x48] sm:$0xff]
        %v3108 = vld [vmem:[%s9 + $0x50] sm:$0xff]
        %v3109 = vld [vmem:[%s9 + $0x58] sm:$0xff]
        %v3110 = vld [vmem:[%s9 + $0x60] sm:$0xff]
        %v3111 = vld [vmem:[%s9 + $0x68] sm:$0xff]
        %v3112 = vld [vmem:[%s9 + $0x70] sm:$0xff]
        %v3113 = vld [vmem:[%s9 + $0x78] sm:$0xff]
        %v3114 = vld [vmem:[%s9 + $0x80] sm:$0xff]
        %v3115 = vld [vmem:[%s9 + $0x88] sm:$0xff]
        %v3116 = vld [vmem:[%s9 + $0x90] sm:$0xff]
        %v3117 = vld [vmem:[%s9 + $0x98] sm:$0xff]
        %v3118 = vld [vmem:[%s9 + $0xa0] sm:$0xff]
        %v3119 = vld [vmem:[%s9 + $0xa8] sm:$0xff]
        %v3120 = vld [vmem:[%s9 + $0xb0] sm:$0xff]
        %v3121 = vld [vmem:[%s9 + $0xb8] sm:$0xff]
        %v3122 = vld [vmem:[%s9 + $0xc0] sm:$0xff]
        %v3123 = vld [vmem:[%s9 + $0xc8] sm:$0xff]
        %v3124 = vld [vmem:[%s9 + $0xd0] sm:$0xff]
        %v3125 = vld [vmem:[%s9 + $0xd8] sm:$0xff]
        %v3126 = vld [vmem:[%s9 + $0xe0] sm:$0xff]
        %v3127 = vld [vmem:[%s9 + $0xe8] sm:$0xff]
        %v3128 = vld [vmem:[%s9 + $0xf0] sm:$0xff]
        %v3129 = vld [vmem:[%s9 + $0xf8] sm:$0xff]
        %v3130 = vld [vmem:[%s9 + $0x100] sm:$0xff]
        %v3131 = vld [vmem:[%s9 + $0x108] sm:$0xff]
        %v3132 = vld [vmem:[%s9 + $0x110] sm:$0xff]
        %v3133 = vld [vmem:[%s9 + $0x118] sm:$0xff]
        %v3134 = vld [vmem:[%s9 + $0x120] sm:$0xff]
        %v3135 = vld [vmem:[%s9 + $0x128] sm:$0xff]
        %v3136 = vld [vmem:[%s9 + $0x130] sm:$0xff]
        %v3137 = vld [vmem:[%s9 + $0x138] sm:$0xff]
        %v3138 = vld [vmem:[%s9 + $0x140] sm:$0xff]
        %v3139 = vld [vmem:[%s9 + $0x148] sm:$0xff]
        %v3140 = vld [vmem:[%s9 + $0x150] sm:$0xff]
        %v3141 = vld [vmem:[%s9 + $0x158] sm:$0xff]
        %v3142 = vld [vmem:[%s9 + $0x160] sm:$0xff]
        %v3143 = vld [vmem:[%s9 + $0x168] sm:$0xff]
        %v3144 = vld [vmem:[%s9 + $0x170] sm:$0xff]
        %v3145 = vld [vmem:[%s9 + $0x178] sm:$0xff]
        %v3146 = vld [vmem:[%s9 + $0x180] sm:$0xff]
        %v3147 = vld [vmem:[%s9 + $0x188] sm:$0xff]
        %v3148 = vld [vmem:[%s9 + $0x190] sm:$0xff]
        %v3149 = vld [vmem:[%s9 + $0x198] sm:$0xff]
        %v3150 = vld [vmem:[%s9 + $0x1a0] sm:$0xff]
        %v3151 = vld [vmem:[%s9 + $0x1a8] sm:$0xff]
        %v3152 = vld [vmem:[%s9 + $0x1b0] sm:$0xff]
        %v3153 = vld [vmem:[%s9 + $0x1b8] sm:$0xff]
        %v3154 = vld [vmem:[%s9 + $0x1c0] sm:$0xff]
        %v3155 = vld [vmem:[%s9 + $0x1c8] sm:$0xff]
        %v3156 = vld [vmem:[%s9 + $0x1d0] sm:$0xff]
        %v3157 = vld [vmem:[%s9 + $0x1d8] sm:$0xff]
        %v3158 = vld [vmem:[%s9 + $0x1e0] sm:$0xff]
        %v3159 = vld [vmem:[%s9 + $0x1e8] sm:$0xff]
        %v3160 = vld [vmem:[%s9 + $0x1f0] sm:$0xff]
        %v3161 = vld [vmem:[%s9 + $0x1f8] sm:$0xff]
        %vm3162 = vcmask 523264
        %v3164 = vsel %vm3162, %v3095, 0
        %3166 = vmatpush.msra.mxu0 0.0
        %3167 = vmatpush.msra.mxu0 0.0
        %3168 = vmatpush.msra.mxu0 0.0
        %3169 = vmatpush.msra.mxu0 0.0
        %3170 = vmatpush.msra.mxu0 0.0
        %3171 = vmatpush.msra.mxu0 0.0
        %3172 = vmatpush.msra.mxu0 0.0
        %3173 = vmatpush.msra.mxu0 0.0
        %3174 = vmatpush.msra.mxu0 %v3105
        %3175 = vmatpush.msra.mxu0 %v3104
        %3176 = vmatpush.msra.mxu0 %v3103
        %3177 = vmatpush.msra.mxu0 %v3102
        %3178 = vmatpush.msra.mxu0 %v3101
        %3179 = vmatpush.msra.mxu0 %v3100
        %3180 = vmatpush.msra.mxu0 %v3099
        %3181 = vmatpush.msra.mxu0 %v3098
        %3182 = vmatmul.f32.gmra.mxu0 %v3164
        %v3183 = vpop.f32.mrf.mxu0
        %v3184 = vadd.f32 0.0, %v3183
        %3185 = vdwg.mxu0
        %v3186 = vadd.f32 %v3097, %v3184
        %v3187 = vrot.slane %v3095, 1
        %v3188 = vsel %vm3162, %v3187, 0
        %3190 = vmatpush.msra.mxu0 0.0
        %3191 = vmatpush.msra.mxu0 0.0
        %3192 = vmatpush.msra.mxu0 0.0
        %3193 = vmatpush.msra.mxu0 0.0
        %3194 = vmatpush.msra.mxu0 0.0
        %3195 = vmatpush.msra.mxu0 0.0
        %3196 = vmatpush.msra.mxu0 0.0
        %3197 = vmatpush.msra.mxu0 0.0
        %3198 = vmatpush.msra.mxu0 %v3113
        %3199 = vmatpush.msra.mxu0 %v3112
        %3200 = vmatpush.msra.mxu0 %v3111
        %3201 = vmatpush.msra.mxu0 %v3110
        %3202 = vmatpush.msra.mxu0 %v3109
        %3203 = vmatpush.msra.mxu0 %v3108
        %3204 = vmatpush.msra.mxu0 %v3107
        %3205 = vmatpush.msra.mxu0 %v3106
        %3206 = vmatmul.f32.gmra.mxu0 %v3188
        %v3207 = vpop.f32.mrf.mxu0
        %v3208 = vadd.f32 0.0, %v3207
        %3209 = vdwg.mxu0
        %v3210 = vadd.f32 %v3186, %v3208
        %v3211 = vrot.slane %v3095, 2
        %v3212 = vsel %vm3162, %v3211, 0
        %3214 = vmatpush.msra.mxu0 0.0
        %3215 = vmatpush.msra.mxu0 0.0
        %3216 = vmatpush.msra.mxu0 0.0
        %3217 = vmatpush.msra.mxu0 0.0
        %3218 = vmatpush.msra.mxu0 0.0
        %3219 = vmatpush.msra.mxu0 0.0
        %3220 = vmatpush.msra.mxu0 0.0
        %3221 = vmatpush.msra.mxu0 0.0
        %3222 = vmatpush.msra.mxu0 %v3121
        %3223 = vmatpush.msra.mxu0 %v3120
        %3224 = vmatpush.msra.mxu0 %v3119
        %3225 = vmatpush.msra.mxu0 %v3118
        %3226 = vmatpush.msra.mxu0 %v3117
        %3227 = vmatpush.msra.mxu0 %v3116
        %3228 = vmatpush.msra.mxu0 %v3115
        %3229 = vmatpush.msra.mxu0 %v3114
        %3230 = vmatmul.f32.gmra.mxu0 %v3212
        %v3231 = vpop.f32.mrf.mxu0
        %v3232 = vadd.f32 0.0, %v3231
        %3233 = vdwg.mxu0
        %v3234 = vadd.f32 %v3210, %v3232
        %v3235 = vrot.slane %v3095, 3
        %v3236 = vsel %vm3162, %v3235, 0
        %3238 = vmatpush.msra.mxu0 0.0
        %3239 = vmatpush.msra.mxu0 0.0
        %3240 = vmatpush.msra.mxu0 0.0
        %3241 = vmatpush.msra.mxu0 0.0
        %3242 = vmatpush.msra.mxu0 0.0
        %3243 = vmatpush.msra.mxu0 0.0
        %3244 = vmatpush.msra.mxu0 0.0
        %3245 = vmatpush.msra.mxu0 0.0
        %3246 = vmatpush.msra.mxu0 %v3129
        %3247 = vmatpush.msra.mxu0 %v3128
        %3248 = vmatpush.msra.mxu0 %v3127
        %3249 = vmatpush.msra.mxu0 %v3126
        %3250 = vmatpush.msra.mxu0 %v3125
        %3251 = vmatpush.msra.mxu0 %v3124
        %3252 = vmatpush.msra.mxu0 %v3123
        %3253 = vmatpush.msra.mxu0 %v3122
        %3254 = vmatmul.f32.gmra.mxu0 %v3236
        %v3255 = vpop.f32.mrf.mxu0
        %v3256 = vadd.f32 0.0, %v3255
        %3257 = vdwg.mxu0
        %v3258 = vadd.f32 %v3234, %v3256
        %v3259 = vrot.slane %v3095, 4
        %v3260 = vsel %vm3162, %v3259, 0
        %3262 = vmatpush.msra.mxu0 0.0
        %3263 = vmatpush.msra.mxu0 0.0
        %3264 = vmatpush.msra.mxu0 0.0
        %3265 = vmatpush.msra.mxu0 0.0
        %3266 = vmatpush.msra.mxu0 0.0
        %3267 = vmatpush.msra.mxu0 0.0
        %3268 = vmatpush.msra.mxu0 0.0
        %3269 = vmatpush.msra.mxu0 0.0
        %3270 = vmatpush.msra.mxu0 %v3137
        %3271 = vmatpush.msra.mxu0 %v3136
        %3272 = vmatpush.msra.mxu0 %v3135
        %3273 = vmatpush.msra.mxu0 %v3134
        %3274 = vmatpush.msra.mxu0 %v3133
        %3275 = vmatpush.msra.mxu0 %v3132
        %3276 = vmatpush.msra.mxu0 %v3131
        %3277 = vmatpush.msra.mxu0 %v3130
        %3278 = vmatmul.f32.gmra.mxu0 %v3260
        %v3279 = vpop.f32.mrf.mxu0
        %v3280 = vadd.f32 0.0, %v3279
        %3281 = vdwg.mxu0
        %v3282 = vadd.f32 %v3258, %v3280
        %v3283 = vrot.slane %v3095, 5
        %v3284 = vsel %vm3162, %v3283, 0
        %3286 = vmatpush.msra.mxu0 0.0
        %3287 = vmatpush.msra.mxu0 0.0
        %3288 = vmatpush.msra.mxu0 0.0
        %3289 = vmatpush.msra.mxu0 0.0
        %3290 = vmatpush.msra.mxu0 0.0
        %3291 = vmatpush.msra.mxu0 0.0
        %3292 = vmatpush.msra.mxu0 0.0
        %3293 = vmatpush.msra.mxu0 0.0
        %3294 = vmatpush.msra.mxu0 %v3145
        %3295 = vmatpush.msra.mxu0 %v3144
        %3296 = vmatpush.msra.mxu0 %v3143
        %3297 = vmatpush.msra.mxu0 %v3142
        %3298 = vmatpush.msra.mxu0 %v3141
        %3299 = vmatpush.msra.mxu0 %v3140
        %3300 = vmatpush.msra.mxu0 %v3139
        %3301 = vmatpush.msra.mxu0 %v3138
        %3302 = vmatmul.f32.gmra.mxu0 %v3284
        %v3303 = vpop.f32.mrf.mxu0
        %v3304 = vadd.f32 0.0, %v3303
        %3305 = vdwg.mxu0
        %v3306 = vadd.f32 %v3282, %v3304
        %v3307 = vrot.slane %v3095, 6
        %v3308 = vsel %vm3162, %v3307, 0
        %3310 = vmatpush.msra.mxu0 0.0
        %3311 = vmatpush.msra.mxu0 0.0
        %3312 = vmatpush.msra.mxu0 0.0
        %3313 = vmatpush.msra.mxu0 0.0
        %3314 = vmatpush.msra.mxu0 0.0
        %3315 = vmatpush.msra.mxu0 0.0
        %3316 = vmatpush.msra.mxu0 0.0
        %3317 = vmatpush.msra.mxu0 0.0
        %3318 = vmatpush.msra.mxu0 %v3153
        %3319 = vmatpush.msra.mxu0 %v3152
        %3320 = vmatpush.msra.mxu0 %v3151
        %3321 = vmatpush.msra.mxu0 %v3150
        %3322 = vmatpush.msra.mxu0 %v3149
        %3323 = vmatpush.msra.mxu0 %v3148
        %3324 = vmatpush.msra.mxu0 %v3147
        %3325 = vmatpush.msra.mxu0 %v3146
        %3326 = vmatmul.f32.gmra.mxu0 %v3308
        %v3327 = vpop.f32.mrf.mxu0
        %v3328 = vadd.f32 0.0, %v3327
        %3329 = vdwg.mxu0
        %v3330 = vadd.f32 %v3306, %v3328
        %v3331 = vrot.slane %v3095, 7
        %v3332 = vsel %vm3162, %v3331, 0
        %3334 = vmatpush.msra.mxu0 0.0
        %3335 = vmatpush.msra.mxu0 0.0
        %3336 = vmatpush.msra.mxu0 0.0
        %3337 = vmatpush.msra.mxu0 0.0
        %3338 = vmatpush.msra.mxu0 0.0
        %3339 = vmatpush.msra.mxu0 0.0
        %3340 = vmatpush.msra.mxu0 0.0
        %3341 = vmatpush.msra.mxu0 0.0
        %3342 = vmatpush.msra.mxu0 %v3161
        %3343 = vmatpush.msra.mxu0 %v3160
        %3344 = vmatpush.msra.mxu0 %v3159
        %3345 = vmatpush.msra.mxu0 %v3158
        %3346 = vmatpush.msra.mxu0 %v3157
        %3347 = vmatpush.msra.mxu0 %v3156
        %3348 = vmatpush.msra.mxu0 %v3155
        %3349 = vmatpush.msra.mxu0 %v3154
        %3350 = vmatmul.f32.gmra.mxu0 %v3332
        %v3351 = vpop.f32.mrf.mxu0
        %v3352 = vadd.f32 0.0, %v3351
        %3353 = vdwg.mxu0
        %v3354 = vadd.f32 %v3330, %v3352
        %vm3355 = vcmask 73728
        %3356 = vst.msk [vmem:[%s393] sm:$0x1] %vm3355, %v3354
        %s3357 = sand.u32 %s270, 1
        %s3358 = scalar_lea.sflag [#allocation8], %s3357
        %s3359 = sand.u32 %s270, 1
        %s3360 = scalar_lea.vmem [#allocation9], %s3359
        // Predicated region
        $region69: #{cnn_classifier_forward.1} parent=63 // pred_check
          %p3361 = pneg %p280
        $region70: #{cnn_classifier_forward.1} parent=63 // pred_check_branch
          %3363 = sbr.rel (%p3361) target = $region72
        $region71: #{cnn_classifier_forward.1} parent=63 // pred_region
          %3365 = vsyncadd %s3358, 0
          %s3366 = scalar_lea.hbm %s11, %s26
          %s3368 = sshll.u32 %s3360, 4
          %s3369 = int_to_ptr.vmem [resolvable:$true] %s3368
          %s3370 = sshll.u32 %s3366, 4
          %s3371 = int_to_ptr.hbm [resolvable:$true] %s3370
          %3373 = dma.vmem_to_hbm [thread:$0]  %s3369, 16, %s3371, %s3358
        $region72: #{cnn_classifier_forward.1} parent=63 // pred_fallthru
          _
      $region64: #{cnn_classifier_forward.1} parent=5 // pred_fallthru
        _
      %p3374 = scmp.le.s32.totalorder 2, %s21
      // Predicated region
      $region73: #{cnn_classifier_forward.1} parent=5 // pred_check
        %p3375 = pneg %p3374
      $region74: #{cnn_classifier_forward.1} parent=5 // pred_check_branch
        %3377 = sbr.rel (%p3375) target = $region76
      $region75: #{cnn_classifier_forward.1} parent=5 // pred_region
        %s3378 = ssub.s32 %s21, 2
        // Predicated region
        $region77: #{cnn_classifier_forward.1} parent=75 // pred_check
          %p3379 = pneg %p286
        $region78: #{cnn_classifier_forward.1} parent=75 // pred_check_branch
          %3381 = sbr.rel (%p3379) target = $region80
        $region79: #{cnn_classifier_forward.1} parent=75 // pred_region
          %s3382 = sand.u32 %s271, 1
          %s3383 = scalar_lea.sflag [#allocation8], %s3382
          %s3384 = sand.u32 %s271, 1
          %s3385 = scalar_lea.vmem [#allocation9], %s3384
          %3387 = dma.done %s3383, 16
        $region80: #{cnn_classifier_forward.1} parent=75 // pred_fallthru
          _
      $region76: #{cnn_classifier_forward.1} parent=5 // pred_fallthru
        _
    $region6: #{cnn_classifier_forward.1} parent=1 // loop_footer
      %s25 = sadd.s32 1, %s21
    $region7: #{cnn_classifier_forward.1} parent=1 // loop_footer_branch
      %20 = sbr.rel target = $region3
    $region8: #{cnn_classifier_forward.1} parent=1 // loop_exit
      _
    %3388 = vsyncpa [#allocation7], 1
    %s3389 = scalar_lea.sflag [#allocation7], 1
    %3390 = vsyncpa %s3389, 1
    %3391 = vsyncpa [#allocation8], 1
    %s3392 = scalar_lea.sflag [#allocation8], 1
    %3393 = vsyncpa %s3392, 1

</llo_original>
